<compile_context>
chip_gen: v7x
topology: tpu7x:2x2x1
jax: 0.10.0
libtpu: 0.0.40
codegen_flags: <defaults>
</compile_context>

<pallas_src>
import functools

import numpy as np
import jax
import jax.numpy as jnp
from jax.experimental import pallas as pl
from jax.experimental.pallas import tpu as pltpu

NEG_SLOPE = 0.01   # F.leaky_relu default negative_slope
LANE = 128         # TPU lane width; HBM outputs padded to a multiple of this


def _round_up(x, m):
    return ((x + m - 1) // m) * m


def _choose_tile(n, max_tile):
    """dst tile: a multiple of 32 (int8 sublane packing), <= max_tile, <= padded n."""
    t = max(32, (max_tile // 32) * 32)
    return min(t, _round_up(n, 32))


# --------------------------------------------------------------------------- #
# Fused kernel: projection + logits (step 0, into scratch) then per-dst-tile
# masked softmax + aggregation.  Heads are a short static in-kernel loop.
# --------------------------------------------------------------------------- #
def _gat_fused_kernel(adj_ref, h_ref, ht_ref, w_ref, bsrc_ref, bdst_ref,
                      out_ref, z_scr, es_scr, ed_scr, *,
                      num_heads, head_dim, hd_pad, tile, apply_elu, approx_recip):
    i = pl.program_id(0)

    # ---- step 0: projection + attention logits for ALL nodes, into scratch ----
    @pl.when(i == 0)
    def _():
        h = h_ref[...]                                                  # [N, F]
        z = jnp.dot(h, w_ref[...], preferred_element_type=jnp.float32)  # [N, HD_pad]
        z_scr[...] = z.astype(z_scr.dtype)
        # dest-role logits ed[n, h] = z_h(n) . a_dst_h  ==  h @ (W_h a_dst_h)
        ed_scr[...] = jnp.dot(h, bdst_ref[...], preferred_element_type=jnp.float32)
        # source-role logits es[h, n], produced lane-major in n (no transpose)
        es_scr[...] = jnp.dot(bsrc_ref[...], ht_ref[...],
                              preferred_element_type=jnp.float32)

    # ---- every step: masked softmax + aggregation for one dst-node tile ----
    mask = adj_ref[...].astype(jnp.float32)            # [T, N] 0/1, reused per head
    row0 = pl.multiple_of(i * tile, tile)
    ed_all = ed_scr[pl.ds(row0, tile), :]              # [T, H_sub]  dest-role logits
    es_all = es_scr[...]                               # [H_sub, N]  source-role logits

    outs = []
    for hd in range(num_heads):                        # static, short loop (heads)
        e = ed_all[:, hd:hd + 1] + es_all[hd:hd + 1, :]          # [T, N]
        e = jnp.maximum(e, NEG_SLOPE * e)                        # leaky_relu
        m = jnp.max(e, axis=1, keepdims=True)                    # any stabilizer works
        p = jnp.exp(e - m) * mask                                # non-edges -> exactly 0
        s = jnp.sum(p, axis=1, keepdims=True)
        hi = (hd + 1) * head_dim if hd + 1 < num_heads else hd_pad
        z_h = z_scr[:, hd * head_dim:hi]               # last head carries 0-padding cols
        acc = jnp.dot(p.astype(z_h.dtype), z_h, preferred_element_type=jnp.float32)
        # Fused normalization: alpha never materialized; reciprocal on the EUP.
        outs.append(acc * pl.reciprocal(s, approx=approx_recip))

    out = outs[0] if num_heads == 1 else jnp.concatenate(outs, axis=1)   # [T, HD_pad]
    if apply_elu:                                      # fused layer-1 epilogue
        out = jnp.where(out > 0, out, jnp.exp(jnp.minimum(out, 0.0)) - 1.0)
    out_ref[...] = out.astype(out_ref.dtype)           # lane-dense [T, HD_pad] store


# --------------------------------------------------------------------------- #
# Wrapper: one MultiHeadGATLayer forward (merge='cat').
# --------------------------------------------------------------------------- #
def multi_head_gat(h, adj, w_t, a, *, apply_elu=False,
                   matmul_dtype=jnp.float32, approx_recip=True,
                   dst_tile=256, vmem_limit_bytes=48 * 1024 * 1024):
    """h: [N, F]; adj: [N, N] (adj[dst, src] != 0); w_t: [H, F, D]; a: [H, 2D, 1]."""
    N, F = h.shape
    H, Fw, D = w_t.shape
    assert Fw == F and a.shape == (H, 2 * D, 1)
    HD = H * D
    HD_pad = _round_up(HD, LANE)       # lane-dense output slab
    H_sub = _round_up(H, 8)            # sublane-aligned logit matrices

    tile = _choose_tile(N, dst_tile)
    N_pad = _round_up(N, tile)
    n_tiles = N_pad // tile
    f32 = jnp.float32

    # ---- wrapper-side parameter packing (layout plumbing, done once) ----
    w_all = jnp.transpose(w_t, (1, 0, 2)).reshape(F, HD)                       # [F, H*D]
    w_all = jnp.pad(w_all, ((0, 0), (0, HD_pad - HD))).astype(matmul_dtype)    # [F, HD_pad]
    a_src = a[:, :D, 0]                                                        # [H, D]
    a_dst = a[:, D:, 0]                                                        # [H, D]
    # Combined logit matrices:  es = B_src @ h^T ,  ed = h @ B_dst
    b_src = jnp.einsum('hfd,hd->hf', w_t, a_src)                               # [H, F]
    b_dst = jnp.einsum('hfd,hd->fh', w_t, a_dst)                               # [F, H]
    b_src = jnp.pad(b_src, ((0, H_sub - H), (0, 0))).astype(matmul_dtype)
    b_dst = jnp.pad(b_dst, ((0, 0), (0, H_sub - H))).astype(matmul_dtype)

    # ---- input padding (zero rows/cols; padded dst rows are sliced off) ----
    h_in = jnp.pad(h.astype(f32), ((0, N_pad - N), (0, 0))).astype(matmul_dtype)
    ht_in = h_in.T                                                             # [F, N_pad]
    adj_i8 = jnp.pad((adj != 0).astype(jnp.int8),
                     ((0, N_pad - N), (0, N_pad - N)))                         # [N_pad, N_pad]

    kern = functools.partial(_gat_fused_kernel, num_heads=H, head_dim=D,
                             hd_pad=HD_pad, tile=tile, apply_elu=apply_elu,
                             approx_recip=approx_recip)

    out_pad = pl.pallas_call(
        kern,
        out_shape=jax.ShapeDtypeStruct((N_pad, HD_pad), f32),
        grid_spec=pltpu.PrefetchScalarGridSpec(
            num_scalar_prefetch=0,
            grid=(n_tiles,),
            in_specs=[
                pl.BlockSpec((tile, N_pad), lambda i: (i, 0)),    # adj rows (int8), streamed
                pl.BlockSpec((N_pad, F), lambda i: (0, 0)),       # h      (grid-invariant)
                pl.BlockSpec((F, N_pad), lambda i: (0, 0)),       # h^T    (grid-invariant)
                pl.BlockSpec((F, HD_pad), lambda i: (0, 0)),      # W_all  (grid-invariant)
                pl.BlockSpec((H_sub, F), lambda i: (0, 0)),       # B_src  (grid-invariant)
                pl.BlockSpec((F, H_sub), lambda i: (0, 0)),       # B_dst  (grid-invariant)
            ],
            out_specs=pl.BlockSpec((tile, HD_pad), lambda i: (i, 0)),  # lane-dense slab
            scratch_shapes=[
                pltpu.VMEM((N_pad, HD_pad), matmul_dtype),        # z for all src nodes
                pltpu.VMEM((H_sub, N_pad), f32),                  # es (source-role logits)
                pltpu.VMEM((N_pad, H_sub), f32),                  # ed (dest-role logits)
            ]),
        compiler_params=pltpu.CompilerParams(
            # Scratch written at step 0 is consumed by later steps -> sequential grid.
            dimension_semantics=("arbitrary",),
            vmem_limit_bytes=vmem_limit_bytes),
    )(adj_i8, h_in, ht_in, w_all, b_src, b_dst)

    return out_pad[:N, :HD]


def gat_forward(h, adj, params, *, matmul_dtype=jnp.float32,
                approx_recip=True, dst_tile=256):
    """Full GAT: MultiHeadGATLayer -> ELU -> MultiHeadGATLayer(1 head)."""
    h1 = multi_head_gat(h, adj, params["w1_t"], params["a1"], apply_elu=True,
                        matmul_dtype=matmul_dtype, approx_recip=approx_recip,
                        dst_tile=dst_tile)
    return multi_head_gat(h1, adj, params["w2_t"], params["a2"], apply_elu=False,
                          matmul_dtype=matmul_dtype, approx_recip=approx_recip,
                          dst_tile=dst_tile)


# --------------------------------------------------------------------------- #
# Pure-JAX reference (same math as the DGL GAT, dense form).
# --------------------------------------------------------------------------- #
def ref_gat_layer(h, adj, w_t, a):
    H, _, D = w_t.shape
    outs = []
    for i in range(H):
        z = h @ w_t[i]
        av = a[i, :, 0]
        es = z @ av[:D]
        ed = z @ av[D:]
        e = ed[:, None] + es[None, :]
        e = jnp.where(e >= 0, e, NEG_SLOPE * e)
        e = jnp.where(adj != 0, e, -jnp.inf)
        alpha = jax.nn.softmax(e, axis=1)
        outs.append(alpha @ z)
    return jnp.concatenate(outs, axis=1)


def ref_gat(h, adj, params):
    h1 = ref_gat_layer(h, adj, params["w1_t"], params["a1"])
    h1 = jax.nn.elu(h1)
    return ref_gat_layer(h1, adj, params["w2_t"], params["a2"])


def xavier_normal(key, shape, gain):
    # PyTorch xavier_normal_ for a Linear weight [fan_out, fan_in]
    fan_out, fan_in = shape
    std = gain * np.sqrt(2.0 / (fan_in + fan_out))
    return jax.random.normal(key, shape, dtype=jnp.float32) * std


if __name__ == "__main__":
    # Small shapes consistent with GAT(g, in_dim, hidden_dim, out_dim, num_heads)
    N = 128          # number of graph nodes
    IN_DIM = 32
    HIDDEN = 16      # per-head hidden dim (layer 1)
    NUM_HEADS = 8    # layer-1 output width = 128 (already lane-dense)
    OUT_DIM = 10     # layer-2 output dim (1 head), padded to 128 inside the kernel

    key = jax.random.PRNGKey(0)
    k_h, k1, k2, k3, k4 = jax.random.split(key, 5)
    h = jax.random.normal(k_h, (N, IN_DIM), dtype=jnp.float32)

    def make_adj(n):
        # Deterministic graph: ring + a skip edge, plus self loops. adj[dst, src].
        adj_np = np.zeros((n, n), dtype=np.float32)
        for i in range(n):
            adj_np[i, i] = 1.0
            adj_np[i, (i - 1) % n] = 1.0
            adj_np[i, (i + 1) % n] = 1.0
            adj_np[i, (i + 5) % n] = 1.0
        return jnp.asarray(adj_np)

    adj = make_adj(N)

    gain = float(np.sqrt(2.0))
    # Layer 1: NUM_HEADS heads, IN_DIM -> HIDDEN each.
    w1 = jnp.stack([xavier_normal(k, (HIDDEN, IN_DIM), gain)
                    for k in jax.random.split(k1, NUM_HEADS)])          # [H, D, F]
    a1 = jnp.stack([xavier_normal(k, (1, 2 * HIDDEN), gain)
                    for k in jax.random.split(k2, NUM_HEADS)])          # [H, 1, 2D]
    # Layer 2: 1 head, HIDDEN*NUM_HEADS -> OUT_DIM.
    w2 = jnp.stack([xavier_normal(k, (OUT_DIM, HIDDEN * NUM_HEADS), gain)
                    for k in jax.random.split(k3, 1)])
    a2 = jnp.stack([xavier_normal(k, (1, 2 * OUT_DIM), gain)
                    for k in jax.random.split(k4, 1)])
    params = {
        "w1_t": jnp.transpose(w1, (0, 2, 1)),   # [H, F, D]
        "a1": jnp.transpose(a1, (0, 2, 1)),     # [H, 2D, 1]
        "w2_t": jnp.transpose(w2, (0, 2, 1)),
        "a2": jnp.transpose(a2, (0, 2, 1)),
    }

    # 1) Strict f32 check (exact reciprocal), dst axis tiled into 2 grid steps.
    out = gat_forward(h, adj, params, approx_recip=False, dst_tile=64)
    out = jax.block_until_ready(out)
    ref = ref_gat(h, adj, params)
    np.testing.assert_allclose(np.asarray(out), np.asarray(ref), rtol=1e-3, atol=1e-3)

    # 2) N not a multiple of the tile -> exercises the zero-padding path.
    N2 = 100
    h2 = jax.random.normal(jax.random.PRNGKey(1), (N2, IN_DIM), dtype=jnp.float32)
    adj2 = make_adj(N2)
    out2 = jax.block_until_ready(
        gat_forward(h2, adj2, params, approx_recip=False, dst_tile=64))
    ref2 = ref_gat(h2, adj2, params)
    np.testing.assert_allclose(np.asarray(out2), np.asarray(ref2), rtol=1e-3, atol=1e-3)

    # 3) bf16 MXU-operand fast path + approx EUP reciprocal (layer 1 only),
    #    softmax stats stay f32; looser tolerance.
    out1_fast = multi_head_gat(h, adj, params["w1_t"], params["a1"],
                               apply_elu=False, matmul_dtype=jnp.bfloat16,
                               approx_recip=True, dst_tile=64)
    out1_fast = jax.block_until_ready(out1_fast)
    ref1 = ref_gat_layer(h, adj, params["w1_t"], params["a1"])
    np.testing.assert_allclose(np.asarray(out1_fast, dtype=np.float32),
                               np.asarray(ref1), rtol=0.1, atol=0.1)

    print("KERNEL_OK")
</pallas_src>

<mosaic_0001>
module attributes {stable_mosaic.version = 11 : i64} {
  func.func @_gat_fused_kernel(%arg0: i32, %arg1: memref<64x128xi8, #tpu.memory_space<vmem>>, %arg2: memref<128x32xf32, #tpu.memory_space<vmem>>, %arg3: memref<32x128xf32, #tpu.memory_space<vmem>>, %arg4: memref<32x128xf32, #tpu.memory_space<vmem>>, %arg5: memref<8x32xf32, #tpu.memory_space<vmem>>, %arg6: memref<32x8xf32, #tpu.memory_space<vmem>>, %arg7: memref<64x128xf32, #tpu.memory_space<vmem>>, %arg8: memref<128x128xf32, #tpu.memory_space<vmem>>, %arg9: memref<8x128xf32, #tpu.memory_space<vmem>>, %arg10: memref<128x8xf32, #tpu.memory_space<vmem>>) attributes {dimension_semantics = [#tpu.dimension_semantics<arbitrary>], iteration_bounds = array<i64: 2>, scalar_prefetch = 0 : i64, scratch_operands = 3 : i64, tpu.core_type = #tpu.core_type<tc>, window_params = [{transform_indices = @transform_0, window_bounds = array<i64: 64, 128>}, {pipeline_mode = #tpu.pipeline_mode<synchronous>, transform_indices = @transform_1, window_bounds = array<i64: 128, 32>}, {pipeline_mode = #tpu.pipeline_mode<synchronous>, transform_indices = @transform_2, window_bounds = array<i64: 32, 128>}, {pipeline_mode = #tpu.pipeline_mode<synchronous>, transform_indices = @transform_3, window_bounds = array<i64: 32, 128>}, {pipeline_mode = #tpu.pipeline_mode<synchronous>, transform_indices = @transform_4, window_bounds = array<i64: 8, 32>}, {pipeline_mode = #tpu.pipeline_mode<synchronous>, transform_indices = @transform_5, window_bounds = array<i64: 32, 8>}, {transform_indices = @transform_6, window_bounds = array<i64: 64, 128>}]} {
    %c0_i32 = arith.constant 0 : i32
    %0 = arith.cmpi eq, %arg0, %c0_i32 : i32
    %1 = arith.extui %0 : i1 to i32
    %c0_i32_0 = arith.constant 0 : i32
    %2 = arith.cmpi ne, %1, %c0_i32_0 : i32
    scf.if %2 {
      %c0_50 = arith.constant 0 : index
      %c0_51 = arith.constant 0 : index
      %188 = vector.load %arg2[%c0_50, %c0_51] : memref<128x32xf32, #tpu.memory_space<vmem>>, vector<128x32xf32>
      %c0_52 = arith.constant 0 : index
      %c0_53 = arith.constant 0 : index
      %189 = vector.load %arg4[%c0_52, %c0_53] : memref<32x128xf32, #tpu.memory_space<vmem>>, vector<32x128xf32>
      %cst_54 = arith.constant dense<0.000000e+00> : vector<128x128xf32>
      %190 = tpu.matmul %188, %189, %cst_54 {dimension_numbers = #tpu.dot_dimension_numbers<[1], [0], [0], [1], [0, 0, 1, 1], [], []>} : vector<128x32xf32>, vector<32x128xf32>, vector<128x128xf32> -> vector<128x128xf32>
      %c0_55 = arith.constant 0 : index
      %c0_56 = arith.constant 0 : index
      %191 = vector.load %arg8[%c0_55, %c0_56] : memref<128x128xf32, #tpu.memory_space<vmem>>, vector<128x128xf32>
      tpu.vector_store %arg8[%c0_55, %c0_56], %190 {strides = array<i32>} : memref<128x128xf32, #tpu.memory_space<vmem>>, vector<128x128xf32>,
      %c0_57 = arith.constant 0 : index
      %c0_58 = arith.constant 0 : index
      %192 = vector.load %arg6[%c0_57, %c0_58] : memref<32x8xf32, #tpu.memory_space<vmem>>, vector<32x8xf32>
      %cst_59 = arith.constant dense<0.000000e+00> : vector<128x8xf32>
      %193 = tpu.matmul %188, %192, %cst_59 {dimension_numbers = #tpu.dot_dimension_numbers<[1], [0], [0], [1], [0, 0, 1, 1], [], []>} : vector<128x32xf32>, vector<32x8xf32>, vector<128x8xf32> -> vector<128x8xf32>
      %c0_60 = arith.constant 0 : index
      %c0_61 = arith.constant 0 : index
      %194 = vector.load %arg10[%c0_60, %c0_61] : memref<128x8xf32, #tpu.memory_space<vmem>>, vector<128x8xf32>
      tpu.vector_store %arg10[%c0_60, %c0_61], %193 {strides = array<i32>} : memref<128x8xf32, #tpu.memory_space<vmem>>, vector<128x8xf32>,
      %c0_62 = arith.constant 0 : index
      %c0_63 = arith.constant 0 : index
      %195 = vector.load %arg5[%c0_62, %c0_63] : memref<8x32xf32, #tpu.memory_space<vmem>>, vector<8x32xf32>
      %c0_64 = arith.constant 0 : index
      %c0_65 = arith.constant 0 : index
      %196 = vector.load %arg3[%c0_64, %c0_65] : memref<32x128xf32, #tpu.memory_space<vmem>>, vector<32x128xf32>
      %cst_66 = arith.constant dense<0.000000e+00> : vector<8x128xf32>
      %197 = tpu.matmul %195, %196, %cst_66 {dimension_numbers = #tpu.dot_dimension_numbers<[1], [0], [0], [1], [0, 0, 1, 1], [], []>} : vector<8x32xf32>, vector<32x128xf32>, vector<8x128xf32> -> vector<8x128xf32>
      %c0_67 = arith.constant 0 : index
      %c0_68 = arith.constant 0 : index
      %198 = vector.load %arg9[%c0_67, %c0_68] : memref<8x128xf32, #tpu.memory_space<vmem>>, vector<8x128xf32>
      tpu.vector_store %arg9[%c0_67, %c0_68], %197 {strides = array<i32>} : memref<8x128xf32, #tpu.memory_space<vmem>>, vector<8x128xf32>,
    } else {
    }
    %c0 = arith.constant 0 : index
    %c0_1 = arith.constant 0 : index
    %3 = vector.load %arg1[%c0, %c0_1] : memref<64x128xi8, #tpu.memory_space<vmem>>, vector<64x128xi8>
    %4 = arith.sitofp %3 : vector<64x128xi8> to vector<64x128xf32>
    %c64_i32 = arith.constant 64 : i32
    %5 = arith.muli %arg0, %c64_i32 : i32
    %6 = tpu.assume_multiple %5, 64 : i32
    %7 = arith.index_cast %6 : i32 to index
    %c0_2 = arith.constant 0 : index
    %8 = vector.load %arg10[%7, %c0_2] : memref<128x8xf32, #tpu.memory_space<vmem>>, vector<64x8xf32>
    %c0_3 = arith.constant 0 : index
    %c0_4 = arith.constant 0 : index
    %9 = vector.load %arg9[%c0_3, %c0_4] : memref<8x128xf32, #tpu.memory_space<vmem>>, vector<8x128xf32>
    %10 = vector.extract_strided_slice %8 {offsets = [0, 0], sizes = [64, 1], strides = [1, 1]} : vector<64x8xf32> to vector<64x1xf32>
    %11 = vector.extract_strided_slice %9 {offsets = [0, 0], sizes = [1, 128], strides = [1, 1]} : vector<8x128xf32> to vector<1x128xf32>
    %12 = vector.broadcast %10 : vector<64x1xf32> to vector<64x128xf32>
    %13 = vector.broadcast %11 : vector<1x128xf32> to vector<64x128xf32>
    %14 = arith.addf %12, %13 : vector<64x128xf32>
    %cst = arith.constant 0.00999999977 : f32
    %15 = vector.broadcast %cst : f32 to vector<64x128xf32>
    %16 = arith.mulf %15, %14 : vector<64x128xf32>
    %17 = arith.maximumf %14, %16 : vector<64x128xf32>
    %cst_5 = arith.constant dense<0xFF800000> : vector<64xf32>
    %18 = vector.multi_reduction <maximumf>, %17, %cst_5 [1] : vector<64x128xf32> to vector<64xf32>
    %19 = vector.shape_cast %18 : vector<64xf32> to vector<64x1xf32>
    %20 = vector.broadcast %19 : vector<64x1xf32> to vector<64x128xf32>
    %21 = arith.subf %17, %20 : vector<64x128xf32>
    %22 = math.exp %21 : vector<64x128xf32>
    %23 = arith.mulf %22, %4 : vector<64x128xf32>
    %cst_6 = arith.constant dense<0.000000e+00> : vector<64xf32>
    %24 = vector.multi_reduction <add>, %23, %cst_6 [1] : vector<64x128xf32> to vector<64xf32>
    %25 = vector.shape_cast %24 : vector<64xf32> to vector<64x1xf32>
    %c0_7 = arith.constant 0 : index
    %c0_8 = arith.constant 0 : index
    %26 = vector.load %arg8[%c0_7, %c0_8] : memref<128x128xf32, #tpu.memory_space<vmem>>, vector<128x16xf32>
    %cst_9 = arith.constant dense<0.000000e+00> : vector<64x16xf32>
    %27 = tpu.matmul %23, %26, %cst_9 {dimension_numbers = #tpu.dot_dimension_numbers<[1], [0], [0], [1], [0, 0, 1, 1], [], []>} : vector<64x128xf32>, vector<128x16xf32>, vector<64x16xf32> -> vector<64x16xf32>
    %28 = tpu.reciprocal %25 : vector<64x1xf32> -> vector<64x1xf32>
    %29 = vector.broadcast %28 : vector<64x1xf32> to vector<64x16xf32>
    %30 = arith.mulf %27, %29 : vector<64x16xf32>
    %31 = vector.extract_strided_slice %8 {offsets = [0, 1], sizes = [64, 1], strides = [1, 1]} : vector<64x8xf32> to vector<64x1xf32>
    %32 = vector.extract_strided_slice %9 {offsets = [1, 0], sizes = [1, 128], strides = [1, 1]} : vector<8x128xf32> to vector<1x128xf32>
    %33 = vector.broadcast %31 : vector<64x1xf32> to vector<64x128xf32>
    %34 = vector.broadcast %32 : vector<1x128xf32> to vector<64x128xf32>
    %35 = arith.addf %33, %34 : vector<64x128xf32>
    %cst_10 = arith.constant 0.00999999977 : f32
    %36 = vector.broadcast %cst_10 : f32 to vector<64x128xf32>
    %37 = arith.mulf %36, %35 : vector<64x128xf32>
    %38 = arith.maximumf %35, %37 : vector<64x128xf32>
    %cst_11 = arith.constant dense<0xFF800000> : vector<64xf32>
    %39 = vector.multi_reduction <maximumf>, %38, %cst_11 [1] : vector<64x128xf32> to vector<64xf32>
    %40 = vector.shape_cast %39 : vector<64xf32> to vector<64x1xf32>
    %41 = vector.broadcast %40 : vector<64x1xf32> to vector<64x128xf32>
    %42 = arith.subf %38, %41 : vector<64x128xf32>
    %43 = math.exp %42 : vector<64x128xf32>
    %44 = arith.mulf %43, %4 : vector<64x128xf32>
    %cst_12 = arith.constant dense<0.000000e+00> : vector<64xf32>
    %45 = vector.multi_reduction <add>, %44, %cst_12 [1] : vector<64x128xf32> to vector<64xf32>
    %46 = vector.shape_cast %45 : vector<64xf32> to vector<64x1xf32>
    %c0_13 = arith.constant 0 : index
    %c16 = arith.constant 16 : index
    %47 = vector.load %arg8[%c0_13, %c16] : memref<128x128xf32, #tpu.memory_space<vmem>>, vector<128x16xf32>
    %cst_14 = arith.constant dense<0.000000e+00> : vector<64x16xf32>
    %48 = tpu.matmul %44, %47, %cst_14 {dimension_numbers = #tpu.dot_dimension_numbers<[1], [0], [0], [1], [0, 0, 1, 1], [], []>} : vector<64x128xf32>, vector<128x16xf32>, vector<64x16xf32> -> vector<64x16xf32>
    %49 = tpu.reciprocal %46 : vector<64x1xf32> -> vector<64x1xf32>
    %50 = vector.broadcast %49 : vector<64x1xf32> to vector<64x16xf32>
    %51 = arith.mulf %48, %50 : vector<64x16xf32>
    %52 = vector.extract_strided_slice %8 {offsets = [0, 2], sizes = [64, 1], strides = [1, 1]} : vector<64x8xf32> to vector<64x1xf32>
    %53 = vector.extract_strided_slice %9 {offsets = [2, 0], sizes = [1, 128], strides = [1, 1]} : vector<8x128xf32> to vector<1x128xf32>
    %54 = vector.broadcast %52 : vector<64x1xf32> to vector<64x128xf32>
    %55 = vector.broadcast %53 : vector<1x128xf32> to vector<64x128xf32>
    %56 = arith.addf %54, %55 : vector<64x128xf32>
    %cst_15 = arith.constant 0.00999999977 : f32
    %57 = vector.broadcast %cst_15 : f32 to vector<64x128xf32>
    %58 = arith.mulf %57, %56 : vector<64x128xf32>
    %59 = arith.maximumf %56, %58 : vector<64x128xf32>
    %cst_16 = arith.constant dense<0xFF800000> : vector<64xf32>
    %60 = vector.multi_reduction <maximumf>, %59, %cst_16 [1] : vector<64x128xf32> to vector<64xf32>
    %61 = vector.shape_cast %60 : vector<64xf32> to vector<64x1xf32>
    %62 = vector.broadcast %61 : vector<64x1xf32> to vector<64x128xf32>
    %63 = arith.subf %59, %62 : vector<64x128xf32>
    %64 = math.exp %63 : vector<64x128xf32>
    %65 = arith.mulf %64, %4 : vector<64x128xf32>
    %cst_17 = arith.constant dense<0.000000e+00> : vector<64xf32>
    %66 = vector.multi_reduction <add>, %65, %cst_17 [1] : vector<64x128xf32> to vector<64xf32>
    %67 = vector.shape_cast %66 : vector<64xf32> to vector<64x1xf32>
    %c0_18 = arith.constant 0 : index
    %c32 = arith.constant 32 : index
    %68 = vector.load %arg8[%c0_18, %c32] : memref<128x128xf32, #tpu.memory_space<vmem>>, vector<128x16xf32>
    %cst_19 = arith.constant dense<0.000000e+00> : vector<64x16xf32>
    %69 = tpu.matmul %65, %68, %cst_19 {dimension_numbers = #tpu.dot_dimension_numbers<[1], [0], [0], [1], [0, 0, 1, 1], [], []>} : vector<64x128xf32>, vector<128x16xf32>, vector<64x16xf32> -> vector<64x16xf32>
    %70 = tpu.reciprocal %67 : vector<64x1xf32> -> vector<64x1xf32>
    %71 = vector.broadcast %70 : vector<64x1xf32> to vector<64x16xf32>
    %72 = arith.mulf %69, %71 : vector<64x16xf32>
    %73 = vector.extract_strided_slice %8 {offsets = [0, 3], sizes = [64, 1], strides = [1, 1]} : vector<64x8xf32> to vector<64x1xf32>
    %74 = vector.extract_strided_slice %9 {offsets = [3, 0], sizes = [1, 128], strides = [1, 1]} : vector<8x128xf32> to vector<1x128xf32>
    %75 = vector.broadcast %73 : vector<64x1xf32> to vector<64x128xf32>
    %76 = vector.broadcast %74 : vector<1x128xf32> to vector<64x128xf32>
    %77 = arith.addf %75, %76 : vector<64x128xf32>
    %cst_20 = arith.constant 0.00999999977 : f32
    %78 = vector.broadcast %cst_20 : f32 to vector<64x128xf32>
    %79 = arith.mulf %78, %77 : vector<64x128xf32>
    %80 = arith.maximumf %77, %79 : vector<64x128xf32>
    %cst_21 = arith.constant dense<0xFF800000> : vector<64xf32>
    %81 = vector.multi_reduction <maximumf>, %80, %cst_21 [1] : vector<64x128xf32> to vector<64xf32>
    %82 = vector.shape_cast %81 : vector<64xf32> to vector<64x1xf32>
    %83 = vector.broadcast %82 : vector<64x1xf32> to vector<64x128xf32>
    %84 = arith.subf %80, %83 : vector<64x128xf32>
    %85 = math.exp %84 : vector<64x128xf32>
    %86 = arith.mulf %85, %4 : vector<64x128xf32>
    %cst_22 = arith.constant dense<0.000000e+00> : vector<64xf32>
    %87 = vector.multi_reduction <add>, %86, %cst_22 [1] : vector<64x128xf32> to vector<64xf32>
    %88 = vector.shape_cast %87 : vector<64xf32> to vector<64x1xf32>
    %c0_23 = arith.constant 0 : index
    %c48 = arith.constant 48 : index
    %89 = vector.load %arg8[%c0_23, %c48] : memref<128x128xf32, #tpu.memory_space<vmem>>, vector<128x16xf32>
    %cst_24 = arith.constant dense<0.000000e+00> : vector<64x16xf32>
    %90 = tpu.matmul %86, %89, %cst_24 {dimension_numbers = #tpu.dot_dimension_numbers<[1], [0], [0], [1], [0, 0, 1, 1], [], []>} : vector<64x128xf32>, vector<128x16xf32>, vector<64x16xf32> -> vector<64x16xf32>
    %91 = tpu.reciprocal %88 : vector<64x1xf32> -> vector<64x1xf32>
    %92 = vector.broadcast %91 : vector<64x1xf32> to vector<64x16xf32>
    %93 = arith.mulf %90, %92 : vector<64x16xf32>
    %94 = vector.extract_strided_slice %8 {offsets = [0, 4], sizes = [64, 1], strides = [1, 1]} : vector<64x8xf32> to vector<64x1xf32>
    %95 = vector.extract_strided_slice %9 {offsets = [4, 0], sizes = [1, 128], strides = [1, 1]} : vector<8x128xf32> to vector<1x128xf32>
    %96 = vector.broadcast %94 : vector<64x1xf32> to vector<64x128xf32>
    %97 = vector.broadcast %95 : vector<1x128xf32> to vector<64x128xf32>
    %98 = arith.addf %96, %97 : vector<64x128xf32>
    %cst_25 = arith.constant 0.00999999977 : f32
    %99 = vector.broadcast %cst_25 : f32 to vector<64x128xf32>
    %100 = arith.mulf %99, %98 : vector<64x128xf32>
    %101 = arith.maximumf %98, %100 : vector<64x128xf32>
    %cst_26 = arith.constant dense<0xFF800000> : vector<64xf32>
    %102 = vector.multi_reduction <maximumf>, %101, %cst_26 [1] : vector<64x128xf32> to vector<64xf32>
    %103 = vector.shape_cast %102 : vector<64xf32> to vector<64x1xf32>
    %104 = vector.broadcast %103 : vector<64x1xf32> to vector<64x128xf32>
    %105 = arith.subf %101, %104 : vector<64x128xf32>
    %106 = math.exp %105 : vector<64x128xf32>
    %107 = arith.mulf %106, %4 : vector<64x128xf32>
    %cst_27 = arith.constant dense<0.000000e+00> : vector<64xf32>
    %108 = vector.multi_reduction <add>, %107, %cst_27 [1] : vector<64x128xf32> to vector<64xf32>
    %109 = vector.shape_cast %108 : vector<64xf32> to vector<64x1xf32>
    %c0_28 = arith.constant 0 : index
    %c64 = arith.constant 64 : index
    %110 = vector.load %arg8[%c0_28, %c64] : memref<128x128xf32, #tpu.memory_space<vmem>>, vector<128x16xf32>
    %cst_29 = arith.constant dense<0.000000e+00> : vector<64x16xf32>
    %111 = tpu.matmul %107, %110, %cst_29 {dimension_numbers = #tpu.dot_dimension_numbers<[1], [0], [0], [1], [0, 0, 1, 1], [], []>} : vector<64x128xf32>, vector<128x16xf32>, vector<64x16xf32> -> vector<64x16xf32>
    %112 = tpu.reciprocal %109 : vector<64x1xf32> -> vector<64x1xf32>
    %113 = vector.broadcast %112 : vector<64x1xf32> to vector<64x16xf32>
    %114 = arith.mulf %111, %113 : vector<64x16xf32>
    %115 = vector.extract_strided_slice %8 {offsets = [0, 5], sizes = [64, 1], strides = [1, 1]} : vector<64x8xf32> to vector<64x1xf32>
    %116 = vector.extract_strided_slice %9 {offsets = [5, 0], sizes = [1, 128], strides = [1, 1]} : vector<8x128xf32> to vector<1x128xf32>
    %117 = vector.broadcast %115 : vector<64x1xf32> to vector<64x128xf32>
    %118 = vector.broadcast %116 : vector<1x128xf32> to vector<64x128xf32>
    %119 = arith.addf %117, %118 : vector<64x128xf32>
    %cst_30 = arith.constant 0.00999999977 : f32
    %120 = vector.broadcast %cst_30 : f32 to vector<64x128xf32>
    %121 = arith.mulf %120, %119 : vector<64x128xf32>
    %122 = arith.maximumf %119, %121 : vector<64x128xf32>
    %cst_31 = arith.constant dense<0xFF800000> : vector<64xf32>
    %123 = vector.multi_reduction <maximumf>, %122, %cst_31 [1] : vector<64x128xf32> to vector<64xf32>
    %124 = vector.shape_cast %123 : vector<64xf32> to vector<64x1xf32>
    %125 = vector.broadcast %124 : vector<64x1xf32> to vector<64x128xf32>
    %126 = arith.subf %122, %125 : vector<64x128xf32>
    %127 = math.exp %126 : vector<64x128xf32>
    %128 = arith.mulf %127, %4 : vector<64x128xf32>
    %cst_32 = arith.constant dense<0.000000e+00> : vector<64xf32>
    %129 = vector.multi_reduction <add>, %128, %cst_32 [1] : vector<64x128xf32> to vector<64xf32>
    %130 = vector.shape_cast %129 : vector<64xf32> to vector<64x1xf32>
    %c0_33 = arith.constant 0 : index
    %c80 = arith.constant 80 : index
    %131 = vector.load %arg8[%c0_33, %c80] : memref<128x128xf32, #tpu.memory_space<vmem>>, vector<128x16xf32>
    %cst_34 = arith.constant dense<0.000000e+00> : vector<64x16xf32>
    %132 = tpu.matmul %128, %131, %cst_34 {dimension_numbers = #tpu.dot_dimension_numbers<[1], [0], [0], [1], [0, 0, 1, 1], [], []>} : vector<64x128xf32>, vector<128x16xf32>, vector<64x16xf32> -> vector<64x16xf32>
    %133 = tpu.reciprocal %130 : vector<64x1xf32> -> vector<64x1xf32>
    %134 = vector.broadcast %133 : vector<64x1xf32> to vector<64x16xf32>
    %135 = arith.mulf %132, %134 : vector<64x16xf32>
    %136 = vector.extract_strided_slice %8 {offsets = [0, 6], sizes = [64, 1], strides = [1, 1]} : vector<64x8xf32> to vector<64x1xf32>
    %137 = vector.extract_strided_slice %9 {offsets = [6, 0], sizes = [1, 128], strides = [1, 1]} : vector<8x128xf32> to vector<1x128xf32>
    %138 = vector.broadcast %136 : vector<64x1xf32> to vector<64x128xf32>
    %139 = vector.broadcast %137 : vector<1x128xf32> to vector<64x128xf32>
    %140 = arith.addf %138, %139 : vector<64x128xf32>
    %cst_35 = arith.constant 0.00999999977 : f32
    %141 = vector.broadcast %cst_35 : f32 to vector<64x128xf32>
    %142 = arith.mulf %141, %140 : vector<64x128xf32>
    %143 = arith.maximumf %140, %142 : vector<64x128xf32>
    %cst_36 = arith.constant dense<0xFF800000> : vector<64xf32>
    %144 = vector.multi_reduction <maximumf>, %143, %cst_36 [1] : vector<64x128xf32> to vector<64xf32>
    %145 = vector.shape_cast %144 : vector<64xf32> to vector<64x1xf32>
    %146 = vector.broadcast %145 : vector<64x1xf32> to vector<64x128xf32>
    %147 = arith.subf %143, %146 : vector<64x128xf32>
    %148 = math.exp %147 : vector<64x128xf32>
    %149 = arith.mulf %148, %4 : vector<64x128xf32>
    %cst_37 = arith.constant dense<0.000000e+00> : vector<64xf32>
    %150 = vector.multi_reduction <add>, %149, %cst_37 [1] : vector<64x128xf32> to vector<64xf32>
    %151 = vector.shape_cast %150 : vector<64xf32> to vector<64x1xf32>
    %c0_38 = arith.constant 0 : index
    %c96 = arith.constant 96 : index
    %152 = vector.load %arg8[%c0_38, %c96] : memref<128x128xf32, #tpu.memory_space<vmem>>, vector<128x16xf32>
    %cst_39 = arith.constant dense<0.000000e+00> : vector<64x16xf32>
    %153 = tpu.matmul %149, %152, %cst_39 {dimension_numbers = #tpu.dot_dimension_numbers<[1], [0], [0], [1], [0, 0, 1, 1], [], []>} : vector<64x128xf32>, vector<128x16xf32>, vector<64x16xf32> -> vector<64x16xf32>
    %154 = tpu.reciprocal %151 : vector<64x1xf32> -> vector<64x1xf32>
    %155 = vector.broadcast %154 : vector<64x1xf32> to vector<64x16xf32>
    %156 = arith.mulf %153, %155 : vector<64x16xf32>
    %157 = vector.extract_strided_slice %8 {offsets = [0, 7], sizes = [64, 1], strides = [1, 1]} : vector<64x8xf32> to vector<64x1xf32>
    %158 = vector.extract_strided_slice %9 {offsets = [7, 0], sizes = [1, 128], strides = [1, 1]} : vector<8x128xf32> to vector<1x128xf32>
    %159 = vector.broadcast %157 : vector<64x1xf32> to vector<64x128xf32>
    %160 = vector.broadcast %158 : vector<1x128xf32> to vector<64x128xf32>
    %161 = arith.addf %159, %160 : vector<64x128xf32>
    %cst_40 = arith.constant 0.00999999977 : f32
    %162 = vector.broadcast %cst_40 : f32 to vector<64x128xf32>
    %163 = arith.mulf %162, %161 : vector<64x128xf32>
    %164 = arith.maximumf %161, %163 : vector<64x128xf32>
    %cst_41 = arith.constant dense<0xFF800000> : vector<64xf32>
    %165 = vector.multi_reduction <maximumf>, %164, %cst_41 [1] : vector<64x128xf32> to vector<64xf32>
    %166 = vector.shape_cast %165 : vector<64xf32> to vector<64x1xf32>
    %167 = vector.broadcast %166 : vector<64x1xf32> to vector<64x128xf32>
    %168 = arith.subf %164, %167 : vector<64x128xf32>
    %169 = math.exp %168 : vector<64x128xf32>
    %170 = arith.mulf %169, %4 : vector<64x128xf32>
    %cst_42 = arith.constant dense<0.000000e+00> : vector<64xf32>
    %171 = vector.multi_reduction <add>, %170, %cst_42 [1] : vector<64x128xf32> to vector<64xf32>
    %172 = vector.shape_cast %171 : vector<64xf32> to vector<64x1xf32>
    %c0_43 = arith.constant 0 : index
    %c112 = arith.constant 112 : index
    %173 = vector.load %arg8[%c0_43, %c112] : memref<128x128xf32, #tpu.memory_space<vmem>>, vector<128x16xf32>
    %cst_44 = arith.constant dense<0.000000e+00> : vector<64x16xf32>
    %174 = tpu.matmul %170, %173, %cst_44 {dimension_numbers = #tpu.dot_dimension_numbers<[1], [0], [0], [1], [0, 0, 1, 1], [], []>} : vector<64x128xf32>, vector<128x16xf32>, vector<64x16xf32> -> vector<64x16xf32>
    %175 = tpu.reciprocal %172 : vector<64x1xf32> -> vector<64x1xf32>
    %176 = vector.broadcast %175 : vector<64x1xf32> to vector<64x16xf32>
    %177 = arith.mulf %174, %176 : vector<64x16xf32>
    %178 = tpu.concatenate %30, %51, %72, %93, %114, %135, %156, %177 in 1 : vector<64x16xf32>, vector<64x16xf32>, vector<64x16xf32>, vector<64x16xf32>, vector<64x16xf32>, vector<64x16xf32>, vector<64x16xf32>, vector<64x16xf32> -> vector<64x128xf32>
    %cst_45 = arith.constant 0.000000e+00 : f32
    %179 = vector.broadcast %cst_45 : f32 to vector<64x128xf32>
    %180 = arith.cmpf ogt, %178, %179 : vector<64x128xf32>
    %cst_46 = arith.constant 0.000000e+00 : f32
    %181 = vector.broadcast %cst_46 : f32 to vector<64x128xf32>
    %182 = arith.minimumf %178, %181 : vector<64x128xf32>
    %183 = math.exp %182 : vector<64x128xf32>
    %cst_47 = arith.constant 1.000000e+00 : f32
    %184 = vector.broadcast %cst_47 : f32 to vector<64x128xf32>
    %185 = arith.subf %183, %184 : vector<64x128xf32>
    %186 = arith.select %180, %178, %185 : vector<64x128xi1>, vector<64x128xf32>
    %c0_48 = arith.constant 0 : index
    %c0_49 = arith.constant 0 : index
    %187 = vector.load %arg7[%c0_48, %c0_49] : memref<64x128xf32, #tpu.memory_space<vmem>>, vector<64x128xf32>
    tpu.vector_store %arg7[%c0_48, %c0_49], %186 {strides = array<i32>} : memref<64x128xf32, #tpu.memory_space<vmem>>, vector<64x128xf32>,
    return
  }
  func.func @transform_0(%arg0: i32) -> (i32, i32) {
    %c0_i32 = arith.constant 0 : i32
    %c0_i32_0 = arith.constant 0 : i32
    return %arg0, %c0_i32 : i32, i32
  }
  func.func @transform_1(%arg0: i32) -> (i32, i32) {
    %c0_i32 = arith.constant 0 : i32
    %c0_i32_0 = arith.constant 0 : i32
    %c0_i32_1 = arith.constant 0 : i32
    return %c0_i32, %c0_i32_0 : i32, i32
  }
  func.func @transform_2(%arg0: i32) -> (i32, i32) {
    %c0_i32 = arith.constant 0 : i32
    %c0_i32_0 = arith.constant 0 : i32
    %c0_i32_1 = arith.constant 0 : i32
    return %c0_i32, %c0_i32_0 : i32, i32
  }
  func.func @transform_3(%arg0: i32) -> (i32, i32) {
    %c0_i32 = arith.constant 0 : i32
    %c0_i32_0 = arith.constant 0 : i32
    %c0_i32_1 = arith.constant 0 : i32
    return %c0_i32, %c0_i32_0 : i32, i32
  }
  func.func @transform_4(%arg0: i32) -> (i32, i32) {
    %c0_i32 = arith.constant 0 : i32
    %c0_i32_0 = arith.constant 0 : i32
    %c0_i32_1 = arith.constant 0 : i32
    return %c0_i32, %c0_i32_0 : i32, i32
  }
  func.func @transform_5(%arg0: i32) -> (i32, i32) {
    %c0_i32 = arith.constant 0 : i32
    %c0_i32_0 = arith.constant 0 : i32
    %c0_i32_1 = arith.constant 0 : i32
    return %c0_i32, %c0_i32_0 : i32, i32
  }
  func.func @transform_6(%arg0: i32) -> (i32, i32) {
    %c0_i32 = arith.constant 0 : i32
    %c0_i32_0 = arith.constant 0 : i32
    return %arg0, %c0_i32 : i32, i32
  }
}

</mosaic_0001>

<llo_original>
// kernel: tpu_custom_call.1
$region0: #{tpu_custom_call.1}
  #allocation0 [shape = 'u32[]', space=smem, size = 0x4, offset = 0x4, fixed_abs, tag = 'smem constant byte address 0x4 - core index']
  #allocation1 [shape = 'u32[144,128]{1,0:T(1,128)}', space=vmem, size = 0x12000, scoped, tag = 'internal scratch']
  #allocation2 [shape = 'f32[128,128]{1,0:T(8,128)}', space=vmem, size = 0x10000, scoped, tag = 'scratch operand']
  #allocation3 [shape = 'f32[8,128]{1,0:T(8,128)}', space=vmem, size = 0x1000, scoped, tag = 'scratch operand']
  #allocation4 [shape = 'f32[128,8]{1,0:T(8,128)}', space=vmem, size = 0x10000, scoped, tag = 'scratch operand']
  %s0 = inlined_call_operand.vmem [shape: s8[128,128], index: 0, kind: input, shape index: {}]
  %s1 = inlined_call_operand.vmem [shape: f32[128,32], index: 1, kind: input, shape index: {}]
  %s2 = inlined_call_operand.vmem [shape: f32[32,128], index: 2, kind: input, shape index: {}]
  %s3 = inlined_call_operand.vmem [shape: f32[32,128], index: 3, kind: input, shape index: {}]
  %s4 = inlined_call_operand.vmem [shape: f32[8,32], index: 4, kind: input, shape index: {}]
  %s5 = inlined_call_operand.vmem [shape: f32[32,8], index: 5, kind: input, shape index: {}]
  %s6 = inlined_call_operand.hbm [shape: f32[128,128], index: 6, kind: output, shape index: {}]
  %s7 = sld [smem:[#allocation0]]
  $region61: #{tpu_custom_call.1} parent=0
    _
  %s9 = ssub.s32 1, %s7
  %s10 = scalar_select 0, %s9, %s7
  $region1: #{tpu_custom_call.1} parent=0
    #allocation5 [shape = 'u8[65536]{0}', space=vmem, size = 0x10000, scoped, tag = 'output window, operand 0']
    #allocation6 [shape = 's32[2]{0}', space=sflag, size = 0x8, scoped, tag = 'scoped memory for tpu_custom_call.1']
    %11 = vsyncpa [#allocation6], 0
    %s12 = scalar_lea.sflag [#allocation6], 1
    %13 = vsyncpa %s12, 0
    loop: start=0, step=1, limit=4
    $region2: #{tpu_custom_call.1} parent=1 // loop_pre_header
      _
    $region3: #{tpu_custom_call.1} parent=1 // loop_header
      %s15 = sphi 0, %s19
      %p16 = scmp.ge.s32.totalorder %s15, 4
      %s25 = sphi 0, %s27
      %s28 = sphi 0, %s25
      %s29 = sphi 0, %s28
      %s45 = sphi 0, %s29
      %s49 = sphi 0, %s49
      %s51 = sphi 0, %s49
      %s52 = sphi 0, %s51
      %s66 = sphi 0, %s52
      %s70 = sphi 0, %s70
      %s72 = sphi 0, %s70
      %s73 = sphi 0, %s72
      %s87 = sphi 0, %s73
      %s91 = sphi 0, %s91
      %s93 = sphi 0, %s91
      %s94 = sphi 0, %s93
      %s108 = sphi 0, %s94
      %s112 = sphi 0, %s112
      %s114 = sphi 0, %s112
      %s115 = sphi 0, %s114
      %s129 = sphi 0, %s115
      %s133 = sphi 0, %s133
      %s135 = sphi 0, %s133
      %s136 = sphi 0, %s135
      %s150 = sphi 0, %s136
      %s156 = sphi 0, %s158
      %s159 = sphi 0, %s156
      %s160 = sphi 0, %s159
      %s176 = sphi 0, %s160
    $region4: #{tpu_custom_call.1} parent=1 // loop_header_branch
      %18 = sbr.rel (%p16) target = $region8
    $region5: #{tpu_custom_call.1} parent=1 // loop_body
      %s20 = ssub.s32 %s15, 1
      %s21 = ssub.s32 %s15, 2
      %s22 = sadd.s32 %s15, 1
      %s23 = ssub.s32 %s15, %s22
      %p24 = scmp.eq.s32.totalorder %s23, 0
      %s26 = sadd.s32 %s25, 1
      %s27 = scalar_select %p24, %s25, %s26
      %p30 = pneg %p24
      %p31 = scmp.eq.s32.totalorder %s15, 1
      %p32 = por %p30, %p31
      %p33 = scmp.ne.s32.totalorder %s25, %s28
      %p34 = scmp.eq.s32.totalorder %s15, 0
      %p35 = por %p33, %p34
      %p36 = scmp.ne.s32.totalorder %s25, %s28
      %p37 = scmp.eq.s32.totalorder %s20, 1
      %p38 = por %p36, %p37
      %p39 = scmp.ne.s32.totalorder %s28, %s29
      %p40 = scmp.eq.s32.totalorder %s20, 0
      %p41 = por %p39, %p40
      %p42 = scmp.ne.s32.totalorder %s28, %s29
      %p43 = scmp.eq.s32.totalorder %s21, 1
      %p44 = por %p42, %p43
      %p46 = scmp.ne.s32.totalorder %s29, %s45
      %p47 = scmp.eq.s32.totalorder %s21, 0
      %p48 = por %p46, %p47
      %s50 = sadd.s32 %s49, 1
      %p53 = scmp.eq.s32.totalorder %s15, 1
      %p54 = scmp.ne.s32.totalorder %s49, %s51
      %p55 = scmp.eq.s32.totalorder %s15, 0
      %p56 = por %p54, %p55
      %p57 = scmp.ne.s32.totalorder %s49, %s51
      %p58 = scmp.eq.s32.totalorder %s20, 1
      %p59 = por %p57, %p58
      %p60 = scmp.ne.s32.totalorder %s51, %s52
      %p61 = scmp.eq.s32.totalorder %s20, 0
      %p62 = por %p60, %p61
      %p63 = scmp.ne.s32.totalorder %s51, %s52
      %p64 = scmp.eq.s32.totalorder %s21, 1
      %p65 = por %p63, %p64
      %p67 = scmp.ne.s32.totalorder %s52, %s66
      %p68 = scmp.eq.s32.totalorder %s21, 0
      %p69 = por %p67, %p68
      %s71 = sadd.s32 %s70, 1
      %p74 = scmp.eq.s32.totalorder %s15, 1
      %p75 = scmp.ne.s32.totalorder %s70, %s72
      %p76 = scmp.eq.s32.totalorder %s15, 0
      %p77 = por %p75, %p76
      %p78 = scmp.ne.s32.totalorder %s70, %s72
      %p79 = scmp.eq.s32.totalorder %s20, 1
      %p80 = por %p78, %p79
      %p81 = scmp.ne.s32.totalorder %s72, %s73
      %p82 = scmp.eq.s32.totalorder %s20, 0
      %p83 = por %p81, %p82
      %p84 = scmp.ne.s32.totalorder %s72, %s73
      %p85 = scmp.eq.s32.totalorder %s21, 1
      %p86 = por %p84, %p85
      %p88 = scmp.ne.s32.totalorder %s73, %s87
      %p89 = scmp.eq.s32.totalorder %s21, 0
      %p90 = por %p88, %p89
      %s92 = sadd.s32 %s91, 1
      %p95 = scmp.eq.s32.totalorder %s15, 1
      %p96 = scmp.ne.s32.totalorder %s91, %s93
      %p97 = scmp.eq.s32.totalorder %s15, 0
      %p98 = por %p96, %p97
      %p99 = scmp.ne.s32.totalorder %s91, %s93
      %p100 = scmp.eq.s32.totalorder %s20, 1
      %p101 = por %p99, %p100
      %p102 = scmp.ne.s32.totalorder %s93, %s94
      %p103 = scmp.eq.s32.totalorder %s20, 0
      %p104 = por %p102, %p103
      %p105 = scmp.ne.s32.totalorder %s93, %s94
      %p106 = scmp.eq.s32.totalorder %s21, 1
      %p107 = por %p105, %p106
      %p109 = scmp.ne.s32.totalorder %s94, %s108
      %p110 = scmp.eq.s32.totalorder %s21, 0
      %p111 = por %p109, %p110
      %s113 = sadd.s32 %s112, 1
      %p116 = scmp.eq.s32.totalorder %s15, 1
      %p117 = scmp.ne.s32.totalorder %s112, %s114
      %p118 = scmp.eq.s32.totalorder %s15, 0
      %p119 = por %p117, %p118
      %p120 = scmp.ne.s32.totalorder %s112, %s114
      %p121 = scmp.eq.s32.totalorder %s20, 1
      %p122 = por %p120, %p121
      %p123 = scmp.ne.s32.totalorder %s114, %s115
      %p124 = scmp.eq.s32.totalorder %s20, 0
      %p125 = por %p123, %p124
      %p126 = scmp.ne.s32.totalorder %s114, %s115
      %p127 = scmp.eq.s32.totalorder %s21, 1
      %p128 = por %p126, %p127
      %p130 = scmp.ne.s32.totalorder %s115, %s129
      %p131 = scmp.eq.s32.totalorder %s21, 0
      %p132 = por %p130, %p131
      %s134 = sadd.s32 %s133, 1
      %p137 = scmp.eq.s32.totalorder %s15, 1
      %p138 = scmp.ne.s32.totalorder %s133, %s135
      %p139 = scmp.eq.s32.totalorder %s15, 0
      %p140 = por %p138, %p139
      %p141 = scmp.ne.s32.totalorder %s133, %s135
      %p142 = scmp.eq.s32.totalorder %s20, 1
      %p143 = por %p141, %p142
      %p144 = scmp.ne.s32.totalorder %s135, %s136
      %p145 = scmp.eq.s32.totalorder %s20, 0
      %p146 = por %p144, %p145
      %p147 = scmp.ne.s32.totalorder %s135, %s136
      %p148 = scmp.eq.s32.totalorder %s21, 1
      %p149 = por %p147, %p148
      %p151 = scmp.ne.s32.totalorder %s136, %s150
      %p152 = scmp.eq.s32.totalorder %s21, 0
      %p153 = por %p151, %p152
      %s154 = ssub.s32 %s15, %s22
      %p155 = scmp.eq.s32.totalorder %s154, 0
      %s157 = sadd.s32 %s156, 1
      %s158 = scalar_select %p155, %s156, %s157
      %p161 = pneg %p155
      %p162 = scmp.eq.s32.totalorder %s15, 1
      %p163 = por %p161, %p162
      %p164 = scmp.ne.s32.totalorder %s156, %s159
      %p165 = scmp.eq.s32.totalorder %s15, 0
      %p166 = por %p164, %p165
      %p167 = scmp.ne.s32.totalorder %s156, %s159
      %p168 = scmp.eq.s32.totalorder %s20, 1
      %p169 = por %p167, %p168
      %p170 = scmp.ne.s32.totalorder %s159, %s160
      %p171 = scmp.eq.s32.totalorder %s20, 0
      %p172 = por %p170, %p171
      %p173 = scmp.ne.s32.totalorder %s159, %s160
      %p174 = scmp.eq.s32.totalorder %s21, 1
      %p175 = por %p173, %p174
      %p177 = scmp.ne.s32.totalorder %s160, %s176
      %p178 = scmp.eq.s32.totalorder %s21, 0
      %p179 = por %p177, %p178
      %p180 = scmp.le.s32.totalorder 1, %s15
      %p181 = scmp.lt.s32.totalorder %s15, 3
      %p182 = pnand %p180, %p181
      %p183 = pneg %p182
      // Predicated region
      $region9: #{tpu_custom_call.1} parent=5 // pred_check
        _
      $region10: #{tpu_custom_call.1} parent=5 // pred_check_branch
        %185 = sbr.rel (%p182) target = $region12
      $region11: #{tpu_custom_call.1} parent=5 // pred_region
        %s186 = ssub.s32 %s15, 1
        // Predicated region
        $region13: #{tpu_custom_call.1} parent=11 // pred_check
          %p187 = pneg %p62
        $region14: #{tpu_custom_call.1} parent=11 // pred_check_branch
          %189 = sbr.rel (%p187) target = $region16
        $region15: #{tpu_custom_call.1} parent=11 // pred_region
          _
        $region16: #{tpu_custom_call.1} parent=11 // pred_fallthru
          _
        // Predicated region
        $region17: #{tpu_custom_call.1} parent=11 // pred_check
          %p190 = pneg %p83
        $region18: #{tpu_custom_call.1} parent=11 // pred_check_branch
          %192 = sbr.rel (%p190) target = $region20
        $region19: #{tpu_custom_call.1} parent=11 // pred_region
          _
        $region20: #{tpu_custom_call.1} parent=11 // pred_fallthru
          _
        // Predicated region
        $region21: #{tpu_custom_call.1} parent=11 // pred_check
          %p193 = pneg %p104
        $region22: #{tpu_custom_call.1} parent=11 // pred_check_branch
          %195 = sbr.rel (%p193) target = $region24
        $region23: #{tpu_custom_call.1} parent=11 // pred_region
          _
        $region24: #{tpu_custom_call.1} parent=11 // pred_fallthru
          _
        // Predicated region
        $region25: #{tpu_custom_call.1} parent=11 // pred_check
          %p196 = pneg %p125
        $region26: #{tpu_custom_call.1} parent=11 // pred_check_branch
          %198 = sbr.rel (%p196) target = $region28
        $region27: #{tpu_custom_call.1} parent=11 // pred_region
          _
        $region28: #{tpu_custom_call.1} parent=11 // pred_fallthru
          _
        // Predicated region
        $region29: #{tpu_custom_call.1} parent=11 // pred_check
          %p199 = pneg %p146
        $region30: #{tpu_custom_call.1} parent=11 // pred_check_branch
          %201 = sbr.rel (%p199) target = $region32
        $region31: #{tpu_custom_call.1} parent=11 // pred_region
          _
        $region32: #{tpu_custom_call.1} parent=11 // pred_fallthru
          _
      $region12: #{tpu_custom_call.1} parent=5 // pred_fallthru
        _
      %p202 = scmp.lt.s32.totalorder %s15, 2
      // Predicated region
      $region33: #{tpu_custom_call.1} parent=5 // pred_check
        %p203 = pneg %p202
      $region34: #{tpu_custom_call.1} parent=5 // pred_check_branch
        %205 = sbr.rel (%p203) target = $region36
      $region35: #{tpu_custom_call.1} parent=5 // pred_region
        // Predicated region
        $region37: #{tpu_custom_call.1} parent=35 // pred_check
          %p206 = pneg %p35
        $region38: #{tpu_custom_call.1} parent=35 // pred_check_branch
          %208 = sbr.rel (%p206) target = $region40
        $region39: #{tpu_custom_call.1} parent=35 // pred_region
          %s209 = smul.u32 2, %s15
          %p210 = scmp.lt.s32.totalorder %s209, 3
          %s211 = scalar_select %p210, %s209, 3
          %s212 = smul.addr %s211, 8
          %s213 = scalar_lea.vmem %s0, %s212
          %s214 = smul.u32 2, %s15
        $region40: #{tpu_custom_call.1} parent=35 // pred_fallthru
          _
      $region36: #{tpu_custom_call.1} parent=5 // pred_fallthru
        _
      %p215 = scmp.le.s32.totalorder 1, %s15
      %p216 = scmp.lt.s32.totalorder %s15, 3
      %p217 = pnand %p215, %p216
      %p218 = pneg %p217
      // Predicated region
      $region41: #{tpu_custom_call.1} parent=5 // pred_check
        _
      $region42: #{tpu_custom_call.1} parent=5 // pred_check_branch
        %220 = sbr.rel (%p217) target = $region44
      $region43: #{tpu_custom_call.1} parent=5 // pred_region
        %s221 = ssub.s32 %s15, 1
        %s222 = smul.u32 2, %s20
        %p223 = scmp.lt.s32.totalorder %s222, 3
        %s224 = scalar_select %p223, %s222, 3
        %s225 = smul.addr %s224, 8
        %s226 = scalar_lea.vmem %s0, %s225
        %p227 = pneg %p41
        %p228 = pneg %p38
        %p229 = pneg %p62
        %p230 = pneg %p59
        %p231 = pneg %p83
        %p232 = pneg %p80
        %p233 = pneg %p104
        %p234 = pneg %p101
        %p235 = pneg %p125
        %p236 = pneg %p122
        %p237 = pneg %p146
        %p238 = pneg %p143
        %p239 = pneg %p172
        %p240 = pneg %p169
        %s241 = sand.u32 %s159, 1
        %s242 = scalar_lea.sflag [#allocation6], %s241
        %s243 = sand.u32 %s159, 1
        %s244 = smul.addr %s243, 64
        %s245 = scalar_lea.vmem [#allocation5], %s244
        %s246 = smul.u32 2, %s20
        %p247 = scmp.lt.s32.totalorder %s246, 3
        %s248 = scalar_select %p247, %s246, 3
        %s249 = smul.addr %s248, 8
        %s250 = scalar_lea.vmem %s0, %s249
        %s251 = smul.u32 2, %s20
        %s252 = smul.u32 8, %s20
        %p253 = scmp.eq.s32.totalorder %s20, 0
        // Predicated region
        $region45: #{tpu_custom_call.1} parent=43 // pred_check
          %p254 = pneg %p253
        $region46: #{tpu_custom_call.1} parent=43 // pred_check_branch
          %256 = sbr.rel (%p254) target = $region48
        $region47: #{tpu_custom_call.1} parent=43 // pred_region
          %v257 = vld [vmem:[%s1] sm:$0xff]
          %v258 = vld [vmem:[%s1 + $0x8] sm:$0xff]
          %v259 = vld [vmem:[%s1 + $0x10] sm:$0xff]
          %v260 = vld [vmem:[%s1 + $0x18] sm:$0xff]
          %v261 = vld [vmem:[%s1 + $0x20] sm:$0xff]
          %v262 = vld [vmem:[%s1 + $0x28] sm:$0xff]
          %v263 = vld [vmem:[%s1 + $0x30] sm:$0xff]
          %v264 = vld [vmem:[%s1 + $0x38] sm:$0xff]
          %v265 = vld [vmem:[%s1 + $0x40] sm:$0xff]
          %v266 = vld [vmem:[%s1 + $0x48] sm:$0xff]
          %v267 = vld [vmem:[%s1 + $0x50] sm:$0xff]
          %v268 = vld [vmem:[%s1 + $0x58] sm:$0xff]
          %v269 = vld [vmem:[%s1 + $0x60] sm:$0xff]
          %v270 = vld [vmem:[%s1 + $0x68] sm:$0xff]
          %v271 = vld [vmem:[%s1 + $0x70] sm:$0xff]
          %v272 = vld [vmem:[%s1 + $0x78] sm:$0xff]
          %v273 = vld [vmem:[%s3] sm:$0xff]
          %v274 = vld [vmem:[%s3 + $0x8] sm:$0xff]
          %v275 = vld [vmem:[%s3 + $0x10] sm:$0xff]
          %v276 = vld [vmem:[%s3 + $0x18] sm:$0xff]
          %vm277 = vcmask 261120
          %v279 = vsel %vm277, %v257, 0
          %v282 = vsel %vm277, %v258, 0
          %v285 = vsel %vm277, %v259, 0
          %v288 = vsel %vm277, %v260, 0
          %v291 = vsel %vm277, %v261, 0
          %v294 = vsel %vm277, %v262, 0
          %v297 = vsel %vm277, %v263, 0
          %v300 = vsel %vm277, %v264, 0
          %v303 = vsel %vm277, %v265, 0
          %v306 = vsel %vm277, %v266, 0
          %v309 = vsel %vm277, %v267, 0
          %v312 = vsel %vm277, %v268, 0
          %v315 = vsel %vm277, %v269, 0
          %v318 = vsel %vm277, %v270, 0
          %v321 = vsel %vm277, %v271, 0
          %v324 = vsel %vm277, %v272, 0
          %326 = vmatprep.subr.mxu0 0.0
          %327 = vmatpush1.msra.mxu0 %v273
          %328 = vmatprep.subr.mxu0 0.0
          %329 = vmatpush1.msra.mxu0 %v274
          %330 = vmatprep.subr.mxu0 0.0
          %331 = vmatpush1.msra.mxu0 %v275
          %332 = vmatprep.subr.mxu0 0.0
          %333 = vmatpush1.msra.mxu0 %v276
          %334 = vmatprep.subr.mxu0 0.0
          %335 = vmatpush1.msra.mxu0 0.0
          %336 = vmatprep.subr.mxu0 0.0
          %337 = vmatpush1.msra.mxu0 0.0
          %338 = vmatprep.subr.mxu0 0.0
          %339 = vmatpush1.msra.mxu0 0.0
          %340 = vmatprep.subr.mxu0 0.0
          %341 = vmatpush1.msra.mxu0 0.0
          %342 = vmatprep.subr.mxu0 0.0
          %343 = vmatpush1.msra.mxu0 0.0
          %344 = vmatprep.subr.mxu0 0.0
          %345 = vmatpush1.msra.mxu0 0.0
          %346 = vmatprep.subr.mxu0 0.0
          %347 = vmatpush1.msra.mxu0 0.0
          %348 = vmatprep.subr.mxu0 0.0
          %349 = vmatpush1.msra.mxu0 0.0
          %350 = vmatprep.subr.mxu0 0.0
          %351 = vmatpush1.msra.mxu0 0.0
          %352 = vmatprep.subr.mxu0 0.0
          %353 = vmatpush1.msra.mxu0 0.0
          %354 = vmatprep.subr.mxu0 0.0
          %355 = vmatpush1.msra.mxu0 0.0
          %356 = vmatprep.subr.mxu0 0.0
          %357 = vmatpush1.msra.mxu0 0.0
          %358 = vmatprep.subr.mxu0 0.0
          %359 = vmatpush1.msra.mxu0 0.0
          %360 = vmatprep.subr.mxu0 0.0
          %361 = vmatpush1.msra.mxu0 0.0
          %362 = vmatprep.subr.mxu0 0.0
          %363 = vmatpush1.msra.mxu0 0.0
          %364 = vmatprep.subr.mxu0 0.0
          %365 = vmatpush1.msra.mxu0 0.0
          %366 = vmatprep.subr.mxu0 0.0
          %367 = vmatpush1.msra.mxu0 0.0
          %368 = vmatprep.subr.mxu0 0.0
          %369 = vmatpush1.msra.mxu0 0.0
          %370 = vmatprep.subr.mxu0 0.0
          %371 = vmatpush1.msra.mxu0 0.0
          %372 = vmatprep.subr.mxu0 0.0
          %373 = vmatpush1.msra.mxu0 0.0
          %374 = vmatprep.subr.mxu0 0.0
          %375 = vmatpush1.msra.mxu0 0.0
          %376 = vmatprep.subr.mxu0 0.0
          %377 = vmatpush1.msra.mxu0 0.0
          %378 = vmatprep.subr.mxu0 0.0
          %379 = vmatpush1.msra.mxu0 0.0
          %380 = vmatprep.subr.mxu0 0.0
          %381 = vmatpush1.msra.mxu0 0.0
          %382 = vmatprep.subr.mxu0 0.0
          %383 = vmatpush1.msra.mxu0 0.0
          %384 = vmatprep.subr.mxu0 0.0
          %385 = vmatpush1.msra.mxu0 0.0
          %386 = vmatprep.subr.mxu0 0.0
          %387 = vmatpush1.msra.mxu0 0.0
          %388 = vmatprep.subr.mxu0 0.0
          %389 = vmatpush1.msra.mxu0 0.0
          %390 = vmatprep.mubr.f32.mxu0 0.0
          %391 = vmatmul.mubr.f32.gmra.mrb[0].mxu0 %v279
          %v392 = vpop.f32.mrb[0].mxu0
          %v393 = vadd.f32 0.0, %v392
          %v394 = vpop.f32.mrb[0].mxu0
          %395 = vmatprep.mubr.f32.mxu0 0.0
          %396 = vmatmul.mubr.f32.gmra.mrb[0].mxu0 %v282
          %v397 = vpop.f32.mrb[0].mxu0
          %v398 = vadd.f32 0.0, %v397
          %v399 = vpop.f32.mrb[0].mxu0
          %400 = vmatprep.mubr.f32.mxu0 0.0
          %401 = vmatmul.mubr.f32.gmra.mrb[0].mxu0 %v285
          %v402 = vpop.f32.mrb[0].mxu0
          %v403 = vadd.f32 0.0, %v402
          %v404 = vpop.f32.mrb[0].mxu0
          %405 = vmatprep.mubr.f32.mxu0 0.0
          %406 = vmatmul.mubr.f32.gmra.mrb[0].mxu0 %v288
          %v407 = vpop.f32.mrb[0].mxu0
          %v408 = vadd.f32 0.0, %v407
          %v409 = vpop.f32.mrb[0].mxu0
          %410 = vmatprep.mubr.f32.mxu0 0.0
          %411 = vmatmul.mubr.f32.gmra.mrb[0].mxu0 %v291
          %v412 = vpop.f32.mrb[0].mxu0
          %v413 = vadd.f32 0.0, %v412
          %v414 = vpop.f32.mrb[0].mxu0
          %415 = vmatprep.mubr.f32.mxu0 0.0
          %416 = vmatmul.mubr.f32.gmra.mrb[0].mxu0 %v294
          %v417 = vpop.f32.mrb[0].mxu0
          %v418 = vadd.f32 0.0, %v417
          %v419 = vpop.f32.mrb[0].mxu0
          %420 = vmatprep.mubr.f32.mxu0 0.0
          %421 = vmatmul.mubr.f32.gmra.mrb[0].mxu0 %v297
          %v422 = vpop.f32.mrb[0].mxu0
          %v423 = vadd.f32 0.0, %v422
          %v424 = vpop.f32.mrb[0].mxu0
          %425 = vmatprep.mubr.f32.mxu0 0.0
          %426 = vmatmul.mubr.f32.gmra.mrb[0].mxu0 %v300
          %v427 = vpop.f32.mrb[0].mxu0
          %v428 = vadd.f32 0.0, %v427
          %v429 = vpop.f32.mrb[0].mxu0
          %430 = vmatprep.mubr.f32.mxu0 0.0
          %431 = vmatmul.mubr.f32.gmra.mrb[0].mxu0 %v303
          %v432 = vpop.f32.mrb[0].mxu0
          %v433 = vadd.f32 0.0, %v432
          %v434 = vpop.f32.mrb[0].mxu0
          %435 = vmatprep.mubr.f32.mxu0 0.0
          %436 = vmatmul.mubr.f32.gmra.mrb[0].mxu0 %v306
          %v437 = vpop.f32.mrb[0].mxu0
          %v438 = vadd.f32 0.0, %v437
          %v439 = vpop.f32.mrb[0].mxu0
          %440 = vmatprep.mubr.f32.mxu0 0.0
          %441 = vmatmul.mubr.f32.gmra.mrb[0].mxu0 %v309
          %v442 = vpop.f32.mrb[0].mxu0
          %v443 = vadd.f32 0.0, %v442
          %v444 = vpop.f32.mrb[0].mxu0
          %445 = vmatprep.mubr.f32.mxu0 0.0
          %446 = vmatmul.mubr.f32.gmra.mrb[0].mxu0 %v312
          %v447 = vpop.f32.mrb[0].mxu0
          %v448 = vadd.f32 0.0, %v447
          %v449 = vpop.f32.mrb[0].mxu0
          %450 = vmatprep.mubr.f32.mxu0 0.0
          %451 = vmatmul.mubr.f32.gmra.mrb[0].mxu0 %v315
          %v452 = vpop.f32.mrb[0].mxu0
          %v453 = vadd.f32 0.0, %v452
          %v454 = vpop.f32.mrb[0].mxu0
          %455 = vmatprep.mubr.f32.mxu0 0.0
          %456 = vmatmul.mubr.f32.gmra.mrb[0].mxu0 %v318
          %v457 = vpop.f32.mrb[0].mxu0
          %v458 = vadd.f32 0.0, %v457
          %v459 = vpop.f32.mrb[0].mxu0
          %460 = vmatprep.mubr.f32.mxu0 0.0
          %461 = vmatmul.mubr.f32.gmra.mrb[0].mxu0 %v321
          %v462 = vpop.f32.mrb[0].mxu0
          %v463 = vadd.f32 0.0, %v462
          %v464 = vpop.f32.mrb[0].mxu0
          %465 = vmatprep.mubr.f32.mxu0 0.0
          %466 = vmatmul.mubr.f32.gmra.mrb[0].mxu0 %v324
          %v467 = vpop.f32.mrb[0].mxu0
          %v468 = vadd.f32 0.0, %v467
          %v469 = vpop.f32.mrb[0].mxu0
          %470 = vdwg.mxu0
          %471 = vst [vmem:[#allocation2] sm:$0xff] %v393
          %472 = vst [vmem:[#allocation2 + $0x8] sm:$0xff] %v398
          %473 = vst [vmem:[#allocation2 + $0x10] sm:$0xff] %v403
          %474 = vst [vmem:[#allocation2 + $0x18] sm:$0xff] %v408
          %475 = vst [vmem:[#allocation2 + $0x20] sm:$0xff] %v413
          %476 = vst [vmem:[#allocation2 + $0x28] sm:$0xff] %v418
          %477 = vst [vmem:[#allocation2 + $0x30] sm:$0xff] %v423
          %478 = vst [vmem:[#allocation2 + $0x38] sm:$0xff] %v428
          %479 = vst [vmem:[#allocation2 + $0x40] sm:$0xff] %v433
          %480 = vst [vmem:[#allocation2 + $0x48] sm:$0xff] %v438
          %481 = vst [vmem:[#allocation2 + $0x50] sm:$0xff] %v443
          %482 = vst [vmem:[#allocation2 + $0x58] sm:$0xff] %v448
          %483 = vst [vmem:[#allocation2 + $0x60] sm:$0xff] %v453
          %484 = vst [vmem:[#allocation2 + $0x68] sm:$0xff] %v458
          %485 = vst [vmem:[#allocation2 + $0x70] sm:$0xff] %v463
          %486 = vst [vmem:[#allocation2 + $0x78] sm:$0xff] %v468
          %v487 = vld [vmem:[%s5] sm:$0xff]
          %v488 = vld [vmem:[%s5 + $0x8] sm:$0xff]
          %v489 = vld [vmem:[%s5 + $0x10] sm:$0xff]
          %v490 = vld [vmem:[%s5 + $0x18] sm:$0xff]
          %491 = vmatprep.subr.mxu0 0.0
          %492 = vmatpush1.msra.mxu0 %v487
          %493 = vmatprep.subr.mxu0 0.0
          %494 = vmatpush1.msra.mxu0 %v488
          %495 = vmatprep.subr.mxu0 0.0
          %496 = vmatpush1.msra.mxu0 %v489
          %497 = vmatprep.subr.mxu0 0.0
          %498 = vmatpush1.msra.mxu0 %v490
          %499 = vmatprep.subr.mxu0 0.0
          %500 = vmatpush1.msra.mxu0 0.0
          %501 = vmatprep.subr.mxu0 0.0
          %502 = vmatpush1.msra.mxu0 0.0
          %503 = vmatprep.subr.mxu0 0.0
          %504 = vmatpush1.msra.mxu0 0.0
          %505 = vmatprep.subr.mxu0 0.0
          %506 = vmatpush1.msra.mxu0 0.0
          %507 = vmatprep.subr.mxu0 0.0
          %508 = vmatpush1.msra.mxu0 0.0
          %509 = vmatprep.subr.mxu0 0.0
          %510 = vmatpush1.msra.mxu0 0.0
          %511 = vmatprep.subr.mxu0 0.0
          %512 = vmatpush1.msra.mxu0 0.0
          %513 = vmatprep.subr.mxu0 0.0
          %514 = vmatpush1.msra.mxu0 0.0
          %515 = vmatprep.subr.mxu0 0.0
          %516 = vmatpush1.msra.mxu0 0.0
          %517 = vmatprep.subr.mxu0 0.0
          %518 = vmatpush1.msra.mxu0 0.0
          %519 = vmatprep.subr.mxu0 0.0
          %520 = vmatpush1.msra.mxu0 0.0
          %521 = vmatprep.subr.mxu0 0.0
          %522 = vmatpush1.msra.mxu0 0.0
          %523 = vmatprep.subr.mxu0 0.0
          %524 = vmatpush1.msra.mxu0 0.0
          %525 = vmatprep.subr.mxu0 0.0
          %526 = vmatpush1.msra.mxu0 0.0
          %527 = vmatprep.subr.mxu0 0.0
          %528 = vmatpush1.msra.mxu0 0.0
          %529 = vmatprep.subr.mxu0 0.0
          %530 = vmatpush1.msra.mxu0 0.0
          %531 = vmatprep.subr.mxu0 0.0
          %532 = vmatpush1.msra.mxu0 0.0
          %533 = vmatprep.subr.mxu0 0.0
          %534 = vmatpush1.msra.mxu0 0.0
          %535 = vmatprep.subr.mxu0 0.0
          %536 = vmatpush1.msra.mxu0 0.0
          %537 = vmatprep.subr.mxu0 0.0
          %538 = vmatpush1.msra.mxu0 0.0
          %539 = vmatprep.subr.mxu0 0.0
          %540 = vmatpush1.msra.mxu0 0.0
          %541 = vmatprep.subr.mxu0 0.0
          %542 = vmatpush1.msra.mxu0 0.0
          %543 = vmatprep.subr.mxu0 0.0
          %544 = vmatpush1.msra.mxu0 0.0
          %545 = vmatprep.subr.mxu0 0.0
          %546 = vmatpush1.msra.mxu0 0.0
          %547 = vmatprep.subr.mxu0 0.0
          %548 = vmatpush1.msra.mxu0 0.0
          %549 = vmatprep.subr.mxu0 0.0
          %550 = vmatpush1.msra.mxu0 0.0
          %551 = vmatprep.subr.mxu0 0.0
          %552 = vmatpush1.msra.mxu0 0.0
          %553 = vmatprep.subr.mxu0 0.0
          %554 = vmatpush1.msra.mxu0 0.0
          %555 = vmatprep.mubr.f32.mxu0 0.0
          %556 = vmatmul.mubr.f32.gmra.mrb[0].mxu0 %v279
          %v557 = vpop.f32.mrb[0].mxu0
          %v558 = vadd.f32 0.0, %v557
          %v559 = vpop.f32.mrb[0].mxu0
          %560 = vmatprep.mubr.f32.mxu0 0.0
          %561 = vmatmul.mubr.f32.gmra.mrb[0].mxu0 %v282
          %v562 = vpop.f32.mrb[0].mxu0
          %v563 = vadd.f32 0.0, %v562
          %v564 = vpop.f32.mrb[0].mxu0
          %565 = vmatprep.mubr.f32.mxu0 0.0
          %566 = vmatmul.mubr.f32.gmra.mrb[0].mxu0 %v285
          %v567 = vpop.f32.mrb[0].mxu0
          %v568 = vadd.f32 0.0, %v567
          %v569 = vpop.f32.mrb[0].mxu0
          %570 = vmatprep.mubr.f32.mxu0 0.0
          %571 = vmatmul.mubr.f32.gmra.mrb[0].mxu0 %v288
          %v572 = vpop.f32.mrb[0].mxu0
          %v573 = vadd.f32 0.0, %v572
          %v574 = vpop.f32.mrb[0].mxu0
          %575 = vmatprep.mubr.f32.mxu0 0.0
          %576 = vmatmul.mubr.f32.gmra.mrb[0].mxu0 %v291
          %v577 = vpop.f32.mrb[0].mxu0
          %v578 = vadd.f32 0.0, %v577
          %v579 = vpop.f32.mrb[0].mxu0
          %580 = vmatprep.mubr.f32.mxu0 0.0
          %581 = vmatmul.mubr.f32.gmra.mrb[0].mxu0 %v294
          %v582 = vpop.f32.mrb[0].mxu0
          %v583 = vadd.f32 0.0, %v582
          %v584 = vpop.f32.mrb[0].mxu0
          %585 = vmatprep.mubr.f32.mxu0 0.0
          %586 = vmatmul.mubr.f32.gmra.mrb[0].mxu0 %v297
          %v587 = vpop.f32.mrb[0].mxu0
          %v588 = vadd.f32 0.0, %v587
          %v589 = vpop.f32.mrb[0].mxu0
          %590 = vmatprep.mubr.f32.mxu0 0.0
          %591 = vmatmul.mubr.f32.gmra.mrb[0].mxu0 %v300
          %v592 = vpop.f32.mrb[0].mxu0
          %v593 = vadd.f32 0.0, %v592
          %v594 = vpop.f32.mrb[0].mxu0
          %595 = vmatprep.mubr.f32.mxu0 0.0
          %596 = vmatmul.mubr.f32.gmra.mrb[0].mxu0 %v303
          %v597 = vpop.f32.mrb[0].mxu0
          %v598 = vadd.f32 0.0, %v597
          %v599 = vpop.f32.mrb[0].mxu0
          %600 = vmatprep.mubr.f32.mxu0 0.0
          %601 = vmatmul.mubr.f32.gmra.mrb[0].mxu0 %v306
          %v602 = vpop.f32.mrb[0].mxu0
          %v603 = vadd.f32 0.0, %v602
          %v604 = vpop.f32.mrb[0].mxu0
          %605 = vmatprep.mubr.f32.mxu0 0.0
          %606 = vmatmul.mubr.f32.gmra.mrb[0].mxu0 %v309
          %v607 = vpop.f32.mrb[0].mxu0
          %v608 = vadd.f32 0.0, %v607
          %v609 = vpop.f32.mrb[0].mxu0
          %610 = vmatprep.mubr.f32.mxu0 0.0
          %611 = vmatmul.mubr.f32.gmra.mrb[0].mxu0 %v312
          %v612 = vpop.f32.mrb[0].mxu0
          %v613 = vadd.f32 0.0, %v612
          %v614 = vpop.f32.mrb[0].mxu0
          %615 = vmatprep.mubr.f32.mxu0 0.0
          %616 = vmatmul.mubr.f32.gmra.mrb[0].mxu0 %v315
          %v617 = vpop.f32.mrb[0].mxu0
          %v618 = vadd.f32 0.0, %v617
          %v619 = vpop.f32.mrb[0].mxu0
          %620 = vmatprep.mubr.f32.mxu0 0.0
          %621 = vmatmul.mubr.f32.gmra.mrb[0].mxu0 %v318
          %v622 = vpop.f32.mrb[0].mxu0
          %v623 = vadd.f32 0.0, %v622
          %v624 = vpop.f32.mrb[0].mxu0
          %625 = vmatprep.mubr.f32.mxu0 0.0
          %626 = vmatmul.mubr.f32.gmra.mrb[0].mxu0 %v321
          %v627 = vpop.f32.mrb[0].mxu0
          %v628 = vadd.f32 0.0, %v627
          %v629 = vpop.f32.mrb[0].mxu0
          %630 = vmatprep.mubr.f32.mxu0 0.0
          %631 = vmatmul.mubr.f32.gmra.mrb[0].mxu0 %v324
          %v632 = vpop.f32.mrb[0].mxu0
          %v633 = vadd.f32 0.0, %v632
          %v634 = vpop.f32.mrb[0].mxu0
          %635 = vdwg.mxu0
          %vm636 = vcmask 64512
          %637 = vst.msk [vmem:[#allocation4] sm:$0xff] %vm636, %v558
          %638 = vst.msk [vmem:[#allocation4 + $0x8] sm:$0xff] %vm636, %v563
          %639 = vst.msk [vmem:[#allocation4 + $0x10] sm:$0xff] %vm636, %v568
          %640 = vst.msk [vmem:[#allocation4 + $0x18] sm:$0xff] %vm636, %v573
          %641 = vst.msk [vmem:[#allocation4 + $0x20] sm:$0xff] %vm636, %v578
          %642 = vst.msk [vmem:[#allocation4 + $0x28] sm:$0xff] %vm636, %v583
          %643 = vst.msk [vmem:[#allocation4 + $0x30] sm:$0xff] %vm636, %v588
          %644 = vst.msk [vmem:[#allocation4 + $0x38] sm:$0xff] %vm636, %v593
          %645 = vst.msk [vmem:[#allocation4 + $0x40] sm:$0xff] %vm636, %v598
          %646 = vst.msk [vmem:[#allocation4 + $0x48] sm:$0xff] %vm636, %v603
          %647 = vst.msk [vmem:[#allocation4 + $0x50] sm:$0xff] %vm636, %v608
          %648 = vst.msk [vmem:[#allocation4 + $0x58] sm:$0xff] %vm636, %v613
          %649 = vst.msk [vmem:[#allocation4 + $0x60] sm:$0xff] %vm636, %v618
          %650 = vst.msk [vmem:[#allocation4 + $0x68] sm:$0xff] %vm636, %v623
          %651 = vst.msk [vmem:[#allocation4 + $0x70] sm:$0xff] %vm636, %v628
          %652 = vst.msk [vmem:[#allocation4 + $0x78] sm:$0xff] %vm636, %v633
          %v653 = vld [vmem:[%s4] sm:$0xff]
          %v654 = vld [vmem:[%s2] sm:$0xff]
          %v655 = vld [vmem:[%s2 + $0x8] sm:$0xff]
          %v656 = vld [vmem:[%s2 + $0x10] sm:$0xff]
          %v657 = vld [vmem:[%s2 + $0x18] sm:$0xff]
          %v659 = vsel %vm277, %v653, 0
          %661 = vmatprep.subr.mxu0 0.0
          %662 = vmatpush1.msra.mxu0 %v654
          %663 = vmatprep.subr.mxu0 0.0
          %664 = vmatpush1.msra.mxu0 %v655
          %665 = vmatprep.subr.mxu0 0.0
          %666 = vmatpush1.msra.mxu0 %v656
          %667 = vmatprep.subr.mxu0 0.0
          %668 = vmatpush1.msra.mxu0 %v657
          %669 = vmatprep.subr.mxu0 0.0
          %670 = vmatpush1.msra.mxu0 0.0
          %671 = vmatprep.subr.mxu0 0.0
          %672 = vmatpush1.msra.mxu0 0.0
          %673 = vmatprep.subr.mxu0 0.0
          %674 = vmatpush1.msra.mxu0 0.0
          %675 = vmatprep.subr.mxu0 0.0
          %676 = vmatpush1.msra.mxu0 0.0
          %677 = vmatprep.subr.mxu0 0.0
          %678 = vmatpush1.msra.mxu0 0.0
          %679 = vmatprep.subr.mxu0 0.0
          %680 = vmatpush1.msra.mxu0 0.0
          %681 = vmatprep.subr.mxu0 0.0
          %682 = vmatpush1.msra.mxu0 0.0
          %683 = vmatprep.subr.mxu0 0.0
          %684 = vmatpush1.msra.mxu0 0.0
          %685 = vmatprep.subr.mxu0 0.0
          %686 = vmatpush1.msra.mxu0 0.0
          %687 = vmatprep.subr.mxu0 0.0
          %688 = vmatpush1.msra.mxu0 0.0
          %689 = vmatprep.subr.mxu0 0.0
          %690 = vmatpush1.msra.mxu0 0.0
          %691 = vmatprep.subr.mxu0 0.0
          %692 = vmatpush1.msra.mxu0 0.0
          %693 = vmatprep.subr.mxu0 0.0
          %694 = vmatpush1.msra.mxu0 0.0
          %695 = vmatprep.subr.mxu0 0.0
          %696 = vmatpush1.msra.mxu0 0.0
          %697 = vmatprep.subr.mxu0 0.0
          %698 = vmatpush1.msra.mxu0 0.0
          %699 = vmatprep.subr.mxu0 0.0
          %700 = vmatpush1.msra.mxu0 0.0
          %701 = vmatprep.subr.mxu0 0.0
          %702 = vmatpush1.msra.mxu0 0.0
          %703 = vmatprep.subr.mxu0 0.0
          %704 = vmatpush1.msra.mxu0 0.0
          %705 = vmatprep.subr.mxu0 0.0
          %706 = vmatpush1.msra.mxu0 0.0
          %707 = vmatprep.subr.mxu0 0.0
          %708 = vmatpush1.msra.mxu0 0.0
          %709 = vmatprep.subr.mxu0 0.0
          %710 = vmatpush1.msra.mxu0 0.0
          %711 = vmatprep.subr.mxu0 0.0
          %712 = vmatpush1.msra.mxu0 0.0
          %713 = vmatprep.subr.mxu0 0.0
          %714 = vmatpush1.msra.mxu0 0.0
          %715 = vmatprep.subr.mxu0 0.0
          %716 = vmatpush1.msra.mxu0 0.0
          %717 = vmatprep.subr.mxu0 0.0
          %718 = vmatpush1.msra.mxu0 0.0
          %719 = vmatprep.subr.mxu0 0.0
          %720 = vmatpush1.msra.mxu0 0.0
          %721 = vmatprep.subr.mxu0 0.0
          %722 = vmatpush1.msra.mxu0 0.0
          %723 = vmatprep.subr.mxu0 0.0
          %724 = vmatpush1.msra.mxu0 0.0
          %725 = vmatprep.mubr.f32.mxu0 0.0
          %726 = vmatmul.mubr.f32.gmra.mrb[0].mxu0 %v659
          %v727 = vpop.f32.mrb[0].mxu0
          %v728 = vadd.f32 0.0, %v727
          %v729 = vpop.f32.mrb[0].mxu0
          %730 = vdwg.mxu0
          %731 = vst [vmem:[#allocation3] sm:$0xff] %v728
        $region48: #{tpu_custom_call.1} parent=43 // pred_fallthru
          _
        %v732 = vld [vmem:[%s250] sm:$0xff]
        %v733 = vld [vmem:[%s250 + $0x8] sm:$0xff]
        %v734 = vunpack.c.0.s8 %v732
        %v735 = vunpack.c.1.s8 %v732
        %v736 = vunpack.c.2.s8 %v732
        %v737 = vunpack.c.3.s8 %v732
        %v738 = vunpack.c.0.s8 %v733
        %v739 = vunpack.c.1.s8 %v733
        %v740 = vunpack.c.2.s8 %v733
        %v741 = vunpack.c.3.s8 %v733
        %v742 = vcvt.s32.f32 %v734
        %v743 = vcvt.s32.f32 %v735
        %v744 = vcvt.s32.f32 %v736
        %v745 = vcvt.s32.f32 %v737
        %v746 = vcvt.s32.f32 %v738
        %v747 = vcvt.s32.f32 %v739
        %v748 = vcvt.s32.f32 %v740
        %v749 = vcvt.s32.f32 %v741
        %s750 = smul.u32 %s20, 64
        %s751 = scalar_lea.vmem [#allocation4], %s750
        %v752 = vld [vmem:[%s751] sm:$0xff]
        %v753 = vld [vmem:[%s751 + $0x8] sm:$0xff]
        %v754 = vld [vmem:[%s751 + $0x10] sm:$0xff]
        %v755 = vld [vmem:[%s751 + $0x18] sm:$0xff]
        %v756 = vld [vmem:[%s751 + $0x20] sm:$0xff]
        %v757 = vld [vmem:[%s751 + $0x28] sm:$0xff]
        %v758 = vld [vmem:[%s751 + $0x30] sm:$0xff]
        %v759 = vld [vmem:[%s751 + $0x38] sm:$0xff]
        %v760 = vld [vmem:[#allocation3] sm:$0xff]
        %762 = vset.pattern.permute.xlu0 0
        %763 = vperm.xlu0 %762, %v752
        %v764 = vpop.permute.xlu0 %763
        %767 = vset.pattern.permute.xlu0 0
        %768 = vperm.xlu0 %767, %v753
        %v769 = vpop.permute.xlu0 %768
        %772 = vset.pattern.permute.xlu0 0
        %773 = vperm.xlu0 %772, %v754
        %v774 = vpop.permute.xlu0 %773
        %777 = vset.pattern.permute.xlu0 0
        %778 = vperm.xlu0 %777, %v755
        %v779 = vpop.permute.xlu0 %778
        %782 = vset.pattern.permute.xlu0 0
        %783 = vperm.xlu0 %782, %v756
        %v784 = vpop.permute.xlu0 %783
        %787 = vset.pattern.permute.xlu0 0
        %788 = vperm.xlu0 %787, %v757
        %v789 = vpop.permute.xlu0 %788
        %792 = vset.pattern.permute.xlu0 0
        %793 = vperm.xlu0 %792, %v758
        %v794 = vpop.permute.xlu0 %793
        %797 = vset.pattern.permute.xlu0 0
        %798 = vperm.xlu0 %797, %v759
        %v799 = vpop.permute.xlu0 %798
        %v801 = vlaneseq
        %v802 = vshrl.u32 %v801, 7
        %v803 = vsub.s32 0, %v802
        %v804 = vrot.slane %v760, %v803
        %v805 = vadd.f32 %v764, %v804
        %v806 = vadd.f32 %v769, %v804
        %v807 = vadd.f32 %v774, %v804
        %v808 = vadd.f32 %v779, %v804
        %v809 = vadd.f32 %v784, %v804
        %v810 = vadd.f32 %v789, %v804
        %v811 = vadd.f32 %v794, %v804
        %v812 = vadd.f32 %v799, %v804
        %v813 = vmul.f32 %v805, 0.01
        %v814 = vmul.f32 %v806, 0.01
        %v815 = vmul.f32 %v807, 0.01
        %v816 = vmul.f32 %v808, 0.01
        %v817 = vmul.f32 %v809, 0.01
        %v818 = vmul.f32 %v810, 0.01
        %v819 = vmul.f32 %v811, 0.01
        %v820 = vmul.f32 %v812, 0.01
        %v821 = vmax.f32 %v805, %v813
        %v822 = vmax.f32 %v806, %v814
        %v823 = vmax.f32 %v807, %v815
        %v824 = vmax.f32 %v808, %v816
        %v825 = vmax.f32 %v809, %v817
        %v826 = vmax.f32 %v810, %v818
        %v827 = vmax.f32 %v811, %v819
        %v828 = vmax.f32 %v812, %v820
        %829 = vmax.xlane.f32.xlu0 %v821
        %v830 = vpop.xlane.xlu0 %829
        %831 = vmax.xlane.f32.xlu0 %v822
        %v832 = vpop.xlane.xlu0 %831
        %833 = vmax.xlane.f32.xlu0 %v823
        %v834 = vpop.xlane.xlu0 %833
        %835 = vmax.xlane.f32.xlu0 %v824
        %v836 = vpop.xlane.xlu0 %835
        %837 = vmax.xlane.f32.xlu0 %v825
        %v838 = vpop.xlane.xlu0 %837
        %839 = vmax.xlane.f32.xlu0 %v826
        %v840 = vpop.xlane.xlu0 %839
        %841 = vmax.xlane.f32.xlu0 %v827
        %v842 = vpop.xlane.xlu0 %841
        %843 = vmax.xlane.f32.xlu0 %v828
        %v844 = vpop.xlane.xlu0 %843
        %v845 = vsub.f32 %v821, %v830
        %v846 = vsub.f32 %v822, %v832
        %v847 = vsub.f32 %v823, %v834
        %v848 = vsub.f32 %v824, %v836
        %v849 = vsub.f32 %v825, %v838
        %v850 = vsub.f32 %v826, %v840
        %v851 = vsub.f32 %v827, %v842
        %v852 = vsub.f32 %v828, %v844
        %v853 = vmul.f32 %v845, 1.442695
        %v854 = vpow.pop %v853
        %v855 = vmul.f32 %v846, 1.442695
        %v856 = vpow.pop %v855
        %v857 = vmul.f32 %v847, 1.442695
        %v858 = vpow.pop %v857
        %v859 = vmul.f32 %v848, 1.442695
        %v860 = vpow.pop %v859
        %v861 = vmul.f32 %v849, 1.442695
        %v862 = vpow.pop %v861
        %v863 = vmul.f32 %v850, 1.442695
        %v864 = vpow.pop %v863
        %v865 = vmul.f32 %v851, 1.442695
        %v866 = vpow.pop %v865
        %v867 = vmul.f32 %v852, 1.442695
        %v868 = vpow.pop %v867
        %v869 = vmul.f32 %v854, %v742
        %v870 = vmul.f32 %v856, %v743
        %v871 = vmul.f32 %v858, %v744
        %v872 = vmul.f32 %v860, %v745
        %v873 = vmul.f32 %v862, %v746
        %v874 = vmul.f32 %v864, %v747
        %v875 = vmul.f32 %v866, %v748
        %v876 = vmul.f32 %v868, %v749
        %877 = vadd.xlane.f32.xlu0 %v869
        %v878 = vpop.xlane.xlu0 %877
        %879 = vadd.xlane.f32.xlu0 %v870
        %v880 = vpop.xlane.xlu0 %879
        %881 = vadd.xlane.f32.xlu0 %v871
        %v882 = vpop.xlane.xlu0 %881
        %883 = vadd.xlane.f32.xlu0 %v872
        %v884 = vpop.xlane.xlu0 %883
        %885 = vadd.xlane.f32.xlu0 %v873
        %v886 = vpop.xlane.xlu0 %885
        %887 = vadd.xlane.f32.xlu0 %v874
        %v888 = vpop.xlane.xlu0 %887
        %889 = vadd.xlane.f32.xlu0 %v875
        %v890 = vpop.xlane.xlu0 %889
        %891 = vadd.xlane.f32.xlu0 %v876
        %v892 = vpop.xlane.xlu0 %891
        %v893 = vld [vmem:[#allocation2] sm:$0xff]
        %v894 = vld [vmem:[#allocation2 + $0x8] sm:$0xff]
        %v895 = vld [vmem:[#allocation2 + $0x10] sm:$0xff]
        %v896 = vld [vmem:[#allocation2 + $0x18] sm:$0xff]
        %v897 = vld [vmem:[#allocation2 + $0x20] sm:$0xff]
        %v898 = vld [vmem:[#allocation2 + $0x28] sm:$0xff]
        %v899 = vld [vmem:[#allocation2 + $0x30] sm:$0xff]
        %v900 = vld [vmem:[#allocation2 + $0x38] sm:$0xff]
        %v901 = vld [vmem:[#allocation2 + $0x40] sm:$0xff]
        %v902 = vld [vmem:[#allocation2 + $0x48] sm:$0xff]
        %v903 = vld [vmem:[#allocation2 + $0x50] sm:$0xff]
        %v904 = vld [vmem:[#allocation2 + $0x58] sm:$0xff]
        %v905 = vld [vmem:[#allocation2 + $0x60] sm:$0xff]
        %v906 = vld [vmem:[#allocation2 + $0x68] sm:$0xff]
        %v907 = vld [vmem:[#allocation2 + $0x70] sm:$0xff]
        %v908 = vld [vmem:[#allocation2 + $0x78] sm:$0xff]
        %909 = vmatprep.subr.mxu0 0.0
        %910 = vmatpush1.msra.mxu0 %v893
        %911 = vmatprep.subr.mxu0 0.0
        %912 = vmatpush1.msra.mxu0 %v894
        %913 = vmatprep.subr.mxu0 0.0
        %914 = vmatpush1.msra.mxu0 %v895
        %915 = vmatprep.subr.mxu0 0.0
        %916 = vmatpush1.msra.mxu0 %v896
        %917 = vmatprep.subr.mxu0 0.0
        %918 = vmatpush1.msra.mxu0 %v897
        %919 = vmatprep.subr.mxu0 0.0
        %920 = vmatpush1.msra.mxu0 %v898
        %921 = vmatprep.subr.mxu0 0.0
        %922 = vmatpush1.msra.mxu0 %v899
        %923 = vmatprep.subr.mxu0 0.0
        %924 = vmatpush1.msra.mxu0 %v900
        %925 = vmatprep.subr.mxu0 0.0
        %926 = vmatpush1.msra.mxu0 %v901
        %927 = vmatprep.subr.mxu0 0.0
        %928 = vmatpush1.msra.mxu0 %v902
        %929 = vmatprep.subr.mxu0 0.0
        %930 = vmatpush1.msra.mxu0 %v903
        %931 = vmatprep.subr.mxu0 0.0
        %932 = vmatpush1.msra.mxu0 %v904
        %933 = vmatprep.subr.mxu0 0.0
        %934 = vmatpush1.msra.mxu0 %v905
        %935 = vmatprep.subr.mxu0 0.0
        %936 = vmatpush1.msra.mxu0 %v906
        %937 = vmatprep.subr.mxu0 0.0
        %938 = vmatpush1.msra.mxu0 %v907
        %939 = vmatprep.subr.mxu0 0.0
        %940 = vmatpush1.msra.mxu0 %v908
        %941 = vmatprep.subr.mxu0 0.0
        %942 = vmatpush1.msra.mxu0 0.0
        %943 = vmatprep.subr.mxu0 0.0
        %944 = vmatpush1.msra.mxu0 0.0
        %945 = vmatprep.subr.mxu0 0.0
        %946 = vmatpush1.msra.mxu0 0.0
        %947 = vmatprep.subr.mxu0 0.0
        %948 = vmatpush1.msra.mxu0 0.0
        %949 = vmatprep.subr.mxu0 0.0
        %950 = vmatpush1.msra.mxu0 0.0
        %951 = vmatprep.subr.mxu0 0.0
        %952 = vmatpush1.msra.mxu0 0.0
        %953 = vmatprep.subr.mxu0 0.0
        %954 = vmatpush1.msra.mxu0 0.0
        %955 = vmatprep.subr.mxu0 0.0
        %956 = vmatpush1.msra.mxu0 0.0
        %957 = vmatprep.subr.mxu0 0.0
        %958 = vmatpush1.msra.mxu0 0.0
        %959 = vmatprep.subr.mxu0 0.0
        %960 = vmatpush1.msra.mxu0 0.0
        %961 = vmatprep.subr.mxu0 0.0
        %962 = vmatpush1.msra.mxu0 0.0
        %963 = vmatprep.subr.mxu0 0.0
        %964 = vmatpush1.msra.mxu0 0.0
        %965 = vmatprep.subr.mxu0 0.0
        %966 = vmatpush1.msra.mxu0 0.0
        %967 = vmatprep.subr.mxu0 0.0
        %968 = vmatpush1.msra.mxu0 0.0
        %969 = vmatprep.subr.mxu0 0.0
        %970 = vmatpush1.msra.mxu0 0.0
        %971 = vmatprep.subr.mxu0 0.0
        %972 = vmatpush1.msra.mxu0 0.0
        %973 = vmatprep.mubr.f32.mxu0 0.0
        %974 = vmatmul.mubr.f32.gmra.mrb[0].mxu0 %v869
        %v975 = vpop.f32.mrb[0].mxu0
        %v976 = vadd.f32 0.0, %v975
        %v977 = vpop.f32.mrb[0].mxu0
        %978 = vmatprep.mubr.f32.mxu0 0.0
        %979 = vmatmul.mubr.f32.gmra.mrb[0].mxu0 %v870
        %v980 = vpop.f32.mrb[0].mxu0
        %v981 = vadd.f32 0.0, %v980
        %v982 = vpop.f32.mrb[0].mxu0
        %983 = vmatprep.mubr.f32.mxu0 0.0
        %984 = vmatmul.mubr.f32.gmra.mrb[0].mxu0 %v871
        %v985 = vpop.f32.mrb[0].mxu0
        %v986 = vadd.f32 0.0, %v985
        %v987 = vpop.f32.mrb[0].mxu0
        %988 = vmatprep.mubr.f32.mxu0 0.0
        %989 = vmatmul.mubr.f32.gmra.mrb[0].mxu0 %v872
        %v990 = vpop.f32.mrb[0].mxu0
        %v991 = vadd.f32 0.0, %v990
        %v992 = vpop.f32.mrb[0].mxu0
        %993 = vmatprep.mubr.f32.mxu0 0.0
        %994 = vmatmul.mubr.f32.gmra.mrb[0].mxu0 %v873
        %v995 = vpop.f32.mrb[0].mxu0
        %v996 = vadd.f32 0.0, %v995
        %v997 = vpop.f32.mrb[0].mxu0
        %998 = vmatprep.mubr.f32.mxu0 0.0
        %999 = vmatmul.mubr.f32.gmra.mrb[0].mxu0 %v874
        %v1000 = vpop.f32.mrb[0].mxu0
        %v1001 = vadd.f32 0.0, %v1000
        %v1002 = vpop.f32.mrb[0].mxu0
        %1003 = vmatprep.mubr.f32.mxu0 0.0
        %1004 = vmatmul.mubr.f32.gmra.mrb[0].mxu0 %v875
        %v1005 = vpop.f32.mrb[0].mxu0
        %v1006 = vadd.f32 0.0, %v1005
        %v1007 = vpop.f32.mrb[0].mxu0
        %1008 = vmatprep.mubr.f32.mxu0 0.0
        %1009 = vmatmul.mubr.f32.gmra.mrb[0].mxu0 %v876
        %v1010 = vpop.f32.mrb[0].mxu0
        %v1011 = vadd.f32 0.0, %v1010
        %v1012 = vpop.f32.mrb[0].mxu0
        %1013 = vdwg.mxu0
        %v1014 = vrcp.pop %v878
        %v1015 = vrcp.pop %v880
        %v1016 = vrcp.pop %v882
        %v1017 = vrcp.pop %v884
        %v1018 = vrcp.pop %v886
        %v1019 = vrcp.pop %v888
        %v1020 = vrcp.pop %v890
        %v1021 = vrcp.pop %v892
        %v1022 = vmul.f32 %v976, %v1014
        %v1023 = vmul.f32 %v981, %v1015
        %v1024 = vmul.f32 %v986, %v1016
        %v1025 = vmul.f32 %v991, %v1017
        %v1026 = vmul.f32 %v996, %v1018
        %v1027 = vmul.f32 %v1001, %v1019
        %v1028 = vmul.f32 %v1006, %v1020
        %v1029 = vmul.f32 %v1011, %v1021
        %1030 = vset.pattern.permute.xlu0 1
        %1031 = vperm.xlu0 %1030, %v752
        %v1032 = vpop.permute.xlu0 %1031
        %1034 = vset.pattern.permute.xlu0 1
        %1035 = vperm.xlu0 %1034, %v753
        %v1036 = vpop.permute.xlu0 %1035
        %1038 = vset.pattern.permute.xlu0 1
        %1039 = vperm.xlu0 %1038, %v754
        %v1040 = vpop.permute.xlu0 %1039
        %1042 = vset.pattern.permute.xlu0 1
        %1043 = vperm.xlu0 %1042, %v755
        %v1044 = vpop.permute.xlu0 %1043
        %1046 = vset.pattern.permute.xlu0 1
        %1047 = vperm.xlu0 %1046, %v756
        %v1048 = vpop.permute.xlu0 %1047
        %1050 = vset.pattern.permute.xlu0 1
        %1051 = vperm.xlu0 %1050, %v757
        %v1052 = vpop.permute.xlu0 %1051
        %1054 = vset.pattern.permute.xlu0 1
        %1055 = vperm.xlu0 %1054, %v758
        %v1056 = vpop.permute.xlu0 %1055
        %1058 = vset.pattern.permute.xlu0 1
        %1059 = vperm.xlu0 %1058, %v759
        %v1060 = vpop.permute.xlu0 %1059
        %v1062 = vlaneseq
        %v1063 = vshrl.u32 %v1062, 7
        %v1064 = vsub.s32 1, %v1063
        %v1065 = vrot.slane %v760, %v1064
        %v1066 = vadd.f32 %v1032, %v1065
        %v1067 = vadd.f32 %v1036, %v1065
        %v1068 = vadd.f32 %v1040, %v1065
        %v1069 = vadd.f32 %v1044, %v1065
        %v1070 = vadd.f32 %v1048, %v1065
        %v1071 = vadd.f32 %v1052, %v1065
        %v1072 = vadd.f32 %v1056, %v1065
        %v1073 = vadd.f32 %v1060, %v1065
        %v1074 = vmul.f32 %v1066, 0.01
        %v1075 = vmul.f32 %v1067, 0.01
        %v1076 = vmul.f32 %v1068, 0.01
        %v1077 = vmul.f32 %v1069, 0.01
        %v1078 = vmul.f32 %v1070, 0.01
        %v1079 = vmul.f32 %v1071, 0.01
        %v1080 = vmul.f32 %v1072, 0.01
        %v1081 = vmul.f32 %v1073, 0.01
        %v1082 = vmax.f32 %v1066, %v1074
        %v1083 = vmax.f32 %v1067, %v1075
        %v1084 = vmax.f32 %v1068, %v1076
        %v1085 = vmax.f32 %v1069, %v1077
        %v1086 = vmax.f32 %v1070, %v1078
        %v1087 = vmax.f32 %v1071, %v1079
        %v1088 = vmax.f32 %v1072, %v1080
        %v1089 = vmax.f32 %v1073, %v1081
        %1090 = vmax.xlane.f32.xlu0 %v1082
        %v1091 = vpop.xlane.xlu0 %1090
        %1092 = vmax.xlane.f32.xlu0 %v1083
        %v1093 = vpop.xlane.xlu0 %1092
        %1094 = vmax.xlane.f32.xlu0 %v1084
        %v1095 = vpop.xlane.xlu0 %1094
        %1096 = vmax.xlane.f32.xlu0 %v1085
        %v1097 = vpop.xlane.xlu0 %1096
        %1098 = vmax.xlane.f32.xlu0 %v1086
        %v1099 = vpop.xlane.xlu0 %1098
        %1100 = vmax.xlane.f32.xlu0 %v1087
        %v1101 = vpop.xlane.xlu0 %1100
        %1102 = vmax.xlane.f32.xlu0 %v1088
        %v1103 = vpop.xlane.xlu0 %1102
        %1104 = vmax.xlane.f32.xlu0 %v1089
        %v1105 = vpop.xlane.xlu0 %1104
        %v1106 = vsub.f32 %v1082, %v1091
        %v1107 = vsub.f32 %v1083, %v1093
        %v1108 = vsub.f32 %v1084, %v1095
        %v1109 = vsub.f32 %v1085, %v1097
        %v1110 = vsub.f32 %v1086, %v1099
        %v1111 = vsub.f32 %v1087, %v1101
        %v1112 = vsub.f32 %v1088, %v1103
        %v1113 = vsub.f32 %v1089, %v1105
        %v1114 = vmul.f32 %v1106, 1.442695
        %v1115 = vpow.pop %v1114
        %v1116 = vmul.f32 %v1107, 1.442695
        %v1117 = vpow.pop %v1116
        %v1118 = vmul.f32 %v1108, 1.442695
        %v1119 = vpow.pop %v1118
        %v1120 = vmul.f32 %v1109, 1.442695
        %v1121 = vpow.pop %v1120
        %v1122 = vmul.f32 %v1110, 1.442695
        %v1123 = vpow.pop %v1122
        %v1124 = vmul.f32 %v1111, 1.442695
        %v1125 = vpow.pop %v1124
        %v1126 = vmul.f32 %v1112, 1.442695
        %v1127 = vpow.pop %v1126
        %v1128 = vmul.f32 %v1113, 1.442695
        %v1129 = vpow.pop %v1128
        %v1130 = vmul.f32 %v1115, %v742
        %v1131 = vmul.f32 %v1117, %v743
        %v1132 = vmul.f32 %v1119, %v744
        %v1133 = vmul.f32 %v1121, %v745
        %v1134 = vmul.f32 %v1123, %v746
        %v1135 = vmul.f32 %v1125, %v747
        %v1136 = vmul.f32 %v1127, %v748
        %v1137 = vmul.f32 %v1129, %v749
        %1138 = vadd.xlane.f32.xlu0 %v1130
        %v1139 = vpop.xlane.xlu0 %1138
        %1140 = vadd.xlane.f32.xlu0 %v1131
        %v1141 = vpop.xlane.xlu0 %1140
        %1142 = vadd.xlane.f32.xlu0 %v1132
        %v1143 = vpop.xlane.xlu0 %1142
        %1144 = vadd.xlane.f32.xlu0 %v1133
        %v1145 = vpop.xlane.xlu0 %1144
        %1146 = vadd.xlane.f32.xlu0 %v1134
        %v1147 = vpop.xlane.xlu0 %1146
        %1148 = vadd.xlane.f32.xlu0 %v1135
        %v1149 = vpop.xlane.xlu0 %1148
        %1150 = vadd.xlane.f32.xlu0 %v1136
        %v1151 = vpop.xlane.xlu0 %1150
        %1152 = vadd.xlane.f32.xlu0 %v1137
        %v1153 = vpop.xlane.xlu0 %1152
        %1170 = vrot.lane.b32.xlu0 %v893, 112
        %v1171 = vpop.permute.xlu0 %1170
        %1172 = vrot.lane.b32.xlu0 %v894, 112
        %v1173 = vpop.permute.xlu0 %1172
        %1174 = vrot.lane.b32.xlu0 %v895, 112
        %v1175 = vpop.permute.xlu0 %1174
        %1176 = vrot.lane.b32.xlu0 %v896, 112
        %v1177 = vpop.permute.xlu0 %1176
        %1178 = vrot.lane.b32.xlu0 %v897, 112
        %v1179 = vpop.permute.xlu0 %1178
        %1180 = vrot.lane.b32.xlu0 %v898, 112
        %v1181 = vpop.permute.xlu0 %1180
        %1182 = vrot.lane.b32.xlu0 %v899, 112
        %v1183 = vpop.permute.xlu0 %1182
        %1184 = vrot.lane.b32.xlu0 %v900, 112
        %v1185 = vpop.permute.xlu0 %1184
        %1186 = vrot.lane.b32.xlu0 %v901, 112
        %v1187 = vpop.permute.xlu0 %1186
        %1188 = vrot.lane.b32.xlu0 %v902, 112
        %v1189 = vpop.permute.xlu0 %1188
        %1190 = vrot.lane.b32.xlu0 %v903, 112
        %v1191 = vpop.permute.xlu0 %1190
        %1192 = vrot.lane.b32.xlu0 %v904, 112
        %v1193 = vpop.permute.xlu0 %1192
        %1194 = vrot.lane.b32.xlu0 %v905, 112
        %v1195 = vpop.permute.xlu0 %1194
        %1196 = vrot.lane.b32.xlu0 %v906, 112
        %v1197 = vpop.permute.xlu0 %1196
        %1198 = vrot.lane.b32.xlu0 %v907, 112
        %v1199 = vpop.permute.xlu0 %1198
        %1200 = vrot.lane.b32.xlu0 %v908, 112
        %v1201 = vpop.permute.xlu0 %1200
        %1218 = vmatprep.subr.mxu0 0.0
        %1219 = vmatpush1.msra.mxu0 %v1171
        %1220 = vmatprep.subr.mxu0 0.0
        %1221 = vmatpush1.msra.mxu0 %v1173
        %1222 = vmatprep.subr.mxu0 0.0
        %1223 = vmatpush1.msra.mxu0 %v1175
        %1224 = vmatprep.subr.mxu0 0.0
        %1225 = vmatpush1.msra.mxu0 %v1177
        %1226 = vmatprep.subr.mxu0 0.0
        %1227 = vmatpush1.msra.mxu0 %v1179
        %1228 = vmatprep.subr.mxu0 0.0
        %1229 = vmatpush1.msra.mxu0 %v1181
        %1230 = vmatprep.subr.mxu0 0.0
        %1231 = vmatpush1.msra.mxu0 %v1183
        %1232 = vmatprep.subr.mxu0 0.0
        %1233 = vmatpush1.msra.mxu0 %v1185
        %1234 = vmatprep.subr.mxu0 0.0
        %1235 = vmatpush1.msra.mxu0 %v1187
        %1236 = vmatprep.subr.mxu0 0.0
        %1237 = vmatpush1.msra.mxu0 %v1189
        %1238 = vmatprep.subr.mxu0 0.0
        %1239 = vmatpush1.msra.mxu0 %v1191
        %1240 = vmatprep.subr.mxu0 0.0
        %1241 = vmatpush1.msra.mxu0 %v1193
        %1242 = vmatprep.subr.mxu0 0.0
        %1243 = vmatpush1.msra.mxu0 %v1195
        %1244 = vmatprep.subr.mxu0 0.0
        %1245 = vmatpush1.msra.mxu0 %v1197
        %1246 = vmatprep.subr.mxu0 0.0
        %1247 = vmatpush1.msra.mxu0 %v1199
        %1248 = vmatprep.subr.mxu0 0.0
        %1249 = vmatpush1.msra.mxu0 %v1201
        %1250 = vmatprep.subr.mxu0 0.0
        %1251 = vmatpush1.msra.mxu0 0.0
        %1252 = vmatprep.subr.mxu0 0.0
        %1253 = vmatpush1.msra.mxu0 0.0
        %1254 = vmatprep.subr.mxu0 0.0
        %1255 = vmatpush1.msra.mxu0 0.0
        %1256 = vmatprep.subr.mxu0 0.0
        %1257 = vmatpush1.msra.mxu0 0.0
        %1258 = vmatprep.subr.mxu0 0.0
        %1259 = vmatpush1.msra.mxu0 0.0
        %1260 = vmatprep.subr.mxu0 0.0
        %1261 = vmatpush1.msra.mxu0 0.0
        %1262 = vmatprep.subr.mxu0 0.0
        %1263 = vmatpush1.msra.mxu0 0.0
        %1264 = vmatprep.subr.mxu0 0.0
        %1265 = vmatpush1.msra.mxu0 0.0
        %1266 = vmatprep.subr.mxu0 0.0
        %1267 = vmatpush1.msra.mxu0 0.0
        %1268 = vmatprep.subr.mxu0 0.0
        %1269 = vmatpush1.msra.mxu0 0.0
        %1270 = vmatprep.subr.mxu0 0.0
        %1271 = vmatpush1.msra.mxu0 0.0
        %1272 = vmatprep.subr.mxu0 0.0
        %1273 = vmatpush1.msra.mxu0 0.0
        %1274 = vmatprep.subr.mxu0 0.0
        %1275 = vmatpush1.msra.mxu0 0.0
        %1276 = vmatprep.subr.mxu0 0.0
        %1277 = vmatpush1.msra.mxu0 0.0
        %1278 = vmatprep.subr.mxu0 0.0
        %1279 = vmatpush1.msra.mxu0 0.0
        %1280 = vmatprep.subr.mxu0 0.0
        %1281 = vmatpush1.msra.mxu0 0.0
        %1282 = vmatprep.mubr.f32.mxu0 0.0
        %1283 = vmatmul.mubr.f32.gmra.mrb[0].mxu0 %v1130
        %v1284 = vpop.f32.mrb[0].mxu0
        %v1285 = vadd.f32 0.0, %v1284
        %v1286 = vpop.f32.mrb[0].mxu0
        %1287 = vmatprep.mubr.f32.mxu0 0.0
        %1288 = vmatmul.mubr.f32.gmra.mrb[0].mxu0 %v1131
        %v1289 = vpop.f32.mrb[0].mxu0
        %v1290 = vadd.f32 0.0, %v1289
        %v1291 = vpop.f32.mrb[0].mxu0
        %1292 = vmatprep.mubr.f32.mxu0 0.0
        %1293 = vmatmul.mubr.f32.gmra.mrb[0].mxu0 %v1132
        %v1294 = vpop.f32.mrb[0].mxu0
        %v1295 = vadd.f32 0.0, %v1294
        %v1296 = vpop.f32.mrb[0].mxu0
        %1297 = vmatprep.mubr.f32.mxu0 0.0
        %1298 = vmatmul.mubr.f32.gmra.mrb[0].mxu0 %v1133
        %v1299 = vpop.f32.mrb[0].mxu0
        %v1300 = vadd.f32 0.0, %v1299
        %v1301 = vpop.f32.mrb[0].mxu0
        %1302 = vmatprep.mubr.f32.mxu0 0.0
        %1303 = vmatmul.mubr.f32.gmra.mrb[0].mxu0 %v1134
        %v1304 = vpop.f32.mrb[0].mxu0
        %v1305 = vadd.f32 0.0, %v1304
        %v1306 = vpop.f32.mrb[0].mxu0
        %1307 = vmatprep.mubr.f32.mxu0 0.0
        %1308 = vmatmul.mubr.f32.gmra.mrb[0].mxu0 %v1135
        %v1309 = vpop.f32.mrb[0].mxu0
        %v1310 = vadd.f32 0.0, %v1309
        %v1311 = vpop.f32.mrb[0].mxu0
        %1312 = vmatprep.mubr.f32.mxu0 0.0
        %1313 = vmatmul.mubr.f32.gmra.mrb[0].mxu0 %v1136
        %v1314 = vpop.f32.mrb[0].mxu0
        %v1315 = vadd.f32 0.0, %v1314
        %v1316 = vpop.f32.mrb[0].mxu0
        %1317 = vmatprep.mubr.f32.mxu0 0.0
        %1318 = vmatmul.mubr.f32.gmra.mrb[0].mxu0 %v1137
        %v1319 = vpop.f32.mrb[0].mxu0
        %v1320 = vadd.f32 0.0, %v1319
        %v1321 = vpop.f32.mrb[0].mxu0
        %1322 = vdwg.mxu0
        %v1323 = vrcp.pop %v1139
        %v1324 = vrcp.pop %v1141
        %v1325 = vrcp.pop %v1143
        %v1326 = vrcp.pop %v1145
        %v1327 = vrcp.pop %v1147
        %v1328 = vrcp.pop %v1149
        %v1329 = vrcp.pop %v1151
        %v1330 = vrcp.pop %v1153
        %v1331 = vmul.f32 %v1285, %v1323
        %v1332 = vmul.f32 %v1290, %v1324
        %v1333 = vmul.f32 %v1295, %v1325
        %v1334 = vmul.f32 %v1300, %v1326
        %v1335 = vmul.f32 %v1305, %v1327
        %v1336 = vmul.f32 %v1310, %v1328
        %v1337 = vmul.f32 %v1315, %v1329
        %v1338 = vmul.f32 %v1320, %v1330
        %1339 = vset.pattern.permute.xlu0 2
        %1340 = vperm.xlu0 %1339, %v752
        %v1341 = vpop.permute.xlu0 %1340
        %1343 = vset.pattern.permute.xlu0 2
        %1344 = vperm.xlu0 %1343, %v753
        %v1345 = vpop.permute.xlu0 %1344
        %1347 = vset.pattern.permute.xlu0 2
        %1348 = vperm.xlu0 %1347, %v754
        %v1349 = vpop.permute.xlu0 %1348
        %1351 = vset.pattern.permute.xlu0 2
        %1352 = vperm.xlu0 %1351, %v755
        %v1353 = vpop.permute.xlu0 %1352
        %1355 = vset.pattern.permute.xlu0 2
        %1356 = vperm.xlu0 %1355, %v756
        %v1357 = vpop.permute.xlu0 %1356
        %1359 = vset.pattern.permute.xlu0 2
        %1360 = vperm.xlu0 %1359, %v757
        %v1361 = vpop.permute.xlu0 %1360
        %1363 = vset.pattern.permute.xlu0 2
        %1364 = vperm.xlu0 %1363, %v758
        %v1365 = vpop.permute.xlu0 %1364
        %1367 = vset.pattern.permute.xlu0 2
        %1368 = vperm.xlu0 %1367, %v759
        %v1369 = vpop.permute.xlu0 %1368
        %v1371 = vlaneseq
        %v1372 = vshrl.u32 %v1371, 7
        %v1373 = vsub.s32 2, %v1372
        %v1374 = vrot.slane %v760, %v1373
        %v1375 = vadd.f32 %v1341, %v1374
        %v1376 = vadd.f32 %v1345, %v1374
        %v1377 = vadd.f32 %v1349, %v1374
        %v1378 = vadd.f32 %v1353, %v1374
        %v1379 = vadd.f32 %v1357, %v1374
        %v1380 = vadd.f32 %v1361, %v1374
        %v1381 = vadd.f32 %v1365, %v1374
        %v1382 = vadd.f32 %v1369, %v1374
        %v1383 = vmul.f32 %v1375, 0.01
        %v1384 = vmul.f32 %v1376, 0.01
        %v1385 = vmul.f32 %v1377, 0.01
        %v1386 = vmul.f32 %v1378, 0.01
        %v1387 = vmul.f32 %v1379, 0.01
        %v1388 = vmul.f32 %v1380, 0.01
        %v1389 = vmul.f32 %v1381, 0.01
        %v1390 = vmul.f32 %v1382, 0.01
        %v1391 = vmax.f32 %v1375, %v1383
        %v1392 = vmax.f32 %v1376, %v1384
        %v1393 = vmax.f32 %v1377, %v1385
        %v1394 = vmax.f32 %v1378, %v1386
        %v1395 = vmax.f32 %v1379, %v1387
        %v1396 = vmax.f32 %v1380, %v1388
        %v1397 = vmax.f32 %v1381, %v1389
        %v1398 = vmax.f32 %v1382, %v1390
        %1399 = vmax.xlane.f32.xlu0 %v1391
        %v1400 = vpop.xlane.xlu0 %1399
        %1401 = vmax.xlane.f32.xlu0 %v1392
        %v1402 = vpop.xlane.xlu0 %1401
        %1403 = vmax.xlane.f32.xlu0 %v1393
        %v1404 = vpop.xlane.xlu0 %1403
        %1405 = vmax.xlane.f32.xlu0 %v1394
        %v1406 = vpop.xlane.xlu0 %1405
        %1407 = vmax.xlane.f32.xlu0 %v1395
        %v1408 = vpop.xlane.xlu0 %1407
        %1409 = vmax.xlane.f32.xlu0 %v1396
        %v1410 = vpop.xlane.xlu0 %1409
        %1411 = vmax.xlane.f32.xlu0 %v1397
        %v1412 = vpop.xlane.xlu0 %1411
        %1413 = vmax.xlane.f32.xlu0 %v1398
        %v1414 = vpop.xlane.xlu0 %1413
        %v1415 = vsub.f32 %v1391, %v1400
        %v1416 = vsub.f32 %v1392, %v1402
        %v1417 = vsub.f32 %v1393, %v1404
        %v1418 = vsub.f32 %v1394, %v1406
        %v1419 = vsub.f32 %v1395, %v1408
        %v1420 = vsub.f32 %v1396, %v1410
        %v1421 = vsub.f32 %v1397, %v1412
        %v1422 = vsub.f32 %v1398, %v1414
        %v1423 = vmul.f32 %v1415, 1.442695
        %v1424 = vpow.pop %v1423
        %v1425 = vmul.f32 %v1416, 1.442695
        %v1426 = vpow.pop %v1425
        %v1427 = vmul.f32 %v1417, 1.442695
        %v1428 = vpow.pop %v1427
        %v1429 = vmul.f32 %v1418, 1.442695
        %v1430 = vpow.pop %v1429
        %v1431 = vmul.f32 %v1419, 1.442695
        %v1432 = vpow.pop %v1431
        %v1433 = vmul.f32 %v1420, 1.442695
        %v1434 = vpow.pop %v1433
        %v1435 = vmul.f32 %v1421, 1.442695
        %v1436 = vpow.pop %v1435
        %v1437 = vmul.f32 %v1422, 1.442695
        %v1438 = vpow.pop %v1437
        %v1439 = vmul.f32 %v1424, %v742
        %v1440 = vmul.f32 %v1426, %v743
        %v1441 = vmul.f32 %v1428, %v744
        %v1442 = vmul.f32 %v1430, %v745
        %v1443 = vmul.f32 %v1432, %v746
        %v1444 = vmul.f32 %v1434, %v747
        %v1445 = vmul.f32 %v1436, %v748
        %v1446 = vmul.f32 %v1438, %v749
        %1447 = vadd.xlane.f32.xlu0 %v1439
        %v1448 = vpop.xlane.xlu0 %1447
        %1449 = vadd.xlane.f32.xlu0 %v1440
        %v1450 = vpop.xlane.xlu0 %1449
        %1451 = vadd.xlane.f32.xlu0 %v1441
        %v1452 = vpop.xlane.xlu0 %1451
        %1453 = vadd.xlane.f32.xlu0 %v1442
        %v1454 = vpop.xlane.xlu0 %1453
        %1455 = vadd.xlane.f32.xlu0 %v1443
        %v1456 = vpop.xlane.xlu0 %1455
        %1457 = vadd.xlane.f32.xlu0 %v1444
        %v1458 = vpop.xlane.xlu0 %1457
        %1459 = vadd.xlane.f32.xlu0 %v1445
        %v1460 = vpop.xlane.xlu0 %1459
        %1461 = vadd.xlane.f32.xlu0 %v1446
        %v1462 = vpop.xlane.xlu0 %1461
        %1463 = vrot.lane.b32.xlu0 %v893, 96
        %v1464 = vpop.permute.xlu0 %1463
        %1465 = vrot.lane.b32.xlu0 %v894, 96
        %v1466 = vpop.permute.xlu0 %1465
        %1467 = vrot.lane.b32.xlu0 %v895, 96
        %v1468 = vpop.permute.xlu0 %1467
        %1469 = vrot.lane.b32.xlu0 %v896, 96
        %v1470 = vpop.permute.xlu0 %1469
        %1471 = vrot.lane.b32.xlu0 %v897, 96
        %v1472 = vpop.permute.xlu0 %1471
        %1473 = vrot.lane.b32.xlu0 %v898, 96
        %v1474 = vpop.permute.xlu0 %1473
        %1475 = vrot.lane.b32.xlu0 %v899, 96
        %v1476 = vpop.permute.xlu0 %1475
        %1477 = vrot.lane.b32.xlu0 %v900, 96
        %v1478 = vpop.permute.xlu0 %1477
        %1479 = vrot.lane.b32.xlu0 %v901, 96
        %v1480 = vpop.permute.xlu0 %1479
        %1481 = vrot.lane.b32.xlu0 %v902, 96
        %v1482 = vpop.permute.xlu0 %1481
        %1483 = vrot.lane.b32.xlu0 %v903, 96
        %v1484 = vpop.permute.xlu0 %1483
        %1485 = vrot.lane.b32.xlu0 %v904, 96
        %v1486 = vpop.permute.xlu0 %1485
        %1487 = vrot.lane.b32.xlu0 %v905, 96
        %v1488 = vpop.permute.xlu0 %1487
        %1489 = vrot.lane.b32.xlu0 %v906, 96
        %v1490 = vpop.permute.xlu0 %1489
        %1491 = vrot.lane.b32.xlu0 %v907, 96
        %v1492 = vpop.permute.xlu0 %1491
        %1493 = vrot.lane.b32.xlu0 %v908, 96
        %v1494 = vpop.permute.xlu0 %1493
        %1511 = vmatprep.subr.mxu0 0.0
        %1512 = vmatpush1.msra.mxu0 %v1464
        %1513 = vmatprep.subr.mxu0 0.0
        %1514 = vmatpush1.msra.mxu0 %v1466
        %1515 = vmatprep.subr.mxu0 0.0
        %1516 = vmatpush1.msra.mxu0 %v1468
        %1517 = vmatprep.subr.mxu0 0.0
        %1518 = vmatpush1.msra.mxu0 %v1470
        %1519 = vmatprep.subr.mxu0 0.0
        %1520 = vmatpush1.msra.mxu0 %v1472
        %1521 = vmatprep.subr.mxu0 0.0
        %1522 = vmatpush1.msra.mxu0 %v1474
        %1523 = vmatprep.subr.mxu0 0.0
        %1524 = vmatpush1.msra.mxu0 %v1476
        %1525 = vmatprep.subr.mxu0 0.0
        %1526 = vmatpush1.msra.mxu0 %v1478
        %1527 = vmatprep.subr.mxu0 0.0
        %1528 = vmatpush1.msra.mxu0 %v1480
        %1529 = vmatprep.subr.mxu0 0.0
        %1530 = vmatpush1.msra.mxu0 %v1482
        %1531 = vmatprep.subr.mxu0 0.0
        %1532 = vmatpush1.msra.mxu0 %v1484
        %1533 = vmatprep.subr.mxu0 0.0
        %1534 = vmatpush1.msra.mxu0 %v1486
        %1535 = vmatprep.subr.mxu0 0.0
        %1536 = vmatpush1.msra.mxu0 %v1488
        %1537 = vmatprep.subr.mxu0 0.0
        %1538 = vmatpush1.msra.mxu0 %v1490
        %1539 = vmatprep.subr.mxu0 0.0
        %1540 = vmatpush1.msra.mxu0 %v1492
        %1541 = vmatprep.subr.mxu0 0.0
        %1542 = vmatpush1.msra.mxu0 %v1494
        %1543 = vmatprep.subr.mxu0 0.0
        %1544 = vmatpush1.msra.mxu0 0.0
        %1545 = vmatprep.subr.mxu0 0.0
        %1546 = vmatpush1.msra.mxu0 0.0
        %1547 = vmatprep.subr.mxu0 0.0
        %1548 = vmatpush1.msra.mxu0 0.0
        %1549 = vmatprep.subr.mxu0 0.0
        %1550 = vmatpush1.msra.mxu0 0.0
        %1551 = vmatprep.subr.mxu0 0.0
        %1552 = vmatpush1.msra.mxu0 0.0
        %1553 = vmatprep.subr.mxu0 0.0
        %1554 = vmatpush1.msra.mxu0 0.0
        %1555 = vmatprep.subr.mxu0 0.0
        %1556 = vmatpush1.msra.mxu0 0.0
        %1557 = vmatprep.subr.mxu0 0.0
        %1558 = vmatpush1.msra.mxu0 0.0
        %1559 = vmatprep.subr.mxu0 0.0
        %1560 = vmatpush1.msra.mxu0 0.0
        %1561 = vmatprep.subr.mxu0 0.0
        %1562 = vmatpush1.msra.mxu0 0.0
        %1563 = vmatprep.subr.mxu0 0.0
        %1564 = vmatpush1.msra.mxu0 0.0
        %1565 = vmatprep.subr.mxu0 0.0
        %1566 = vmatpush1.msra.mxu0 0.0
        %1567 = vmatprep.subr.mxu0 0.0
        %1568 = vmatpush1.msra.mxu0 0.0
        %1569 = vmatprep.subr.mxu0 0.0
        %1570 = vmatpush1.msra.mxu0 0.0
        %1571 = vmatprep.subr.mxu0 0.0
        %1572 = vmatpush1.msra.mxu0 0.0
        %1573 = vmatprep.subr.mxu0 0.0
        %1574 = vmatpush1.msra.mxu0 0.0
        %1575 = vmatprep.mubr.f32.mxu0 0.0
        %1576 = vmatmul.mubr.f32.gmra.mrb[0].mxu0 %v1439
        %v1577 = vpop.f32.mrb[0].mxu0
        %v1578 = vadd.f32 0.0, %v1577
        %v1579 = vpop.f32.mrb[0].mxu0
        %1580 = vmatprep.mubr.f32.mxu0 0.0
        %1581 = vmatmul.mubr.f32.gmra.mrb[0].mxu0 %v1440
        %v1582 = vpop.f32.mrb[0].mxu0
        %v1583 = vadd.f32 0.0, %v1582
        %v1584 = vpop.f32.mrb[0].mxu0
        %1585 = vmatprep.mubr.f32.mxu0 0.0
        %1586 = vmatmul.mubr.f32.gmra.mrb[0].mxu0 %v1441
        %v1587 = vpop.f32.mrb[0].mxu0
        %v1588 = vadd.f32 0.0, %v1587
        %v1589 = vpop.f32.mrb[0].mxu0
        %1590 = vmatprep.mubr.f32.mxu0 0.0
        %1591 = vmatmul.mubr.f32.gmra.mrb[0].mxu0 %v1442
        %v1592 = vpop.f32.mrb[0].mxu0
        %v1593 = vadd.f32 0.0, %v1592
        %v1594 = vpop.f32.mrb[0].mxu0
        %1595 = vmatprep.mubr.f32.mxu0 0.0
        %1596 = vmatmul.mubr.f32.gmra.mrb[0].mxu0 %v1443
        %v1597 = vpop.f32.mrb[0].mxu0
        %v1598 = vadd.f32 0.0, %v1597
        %v1599 = vpop.f32.mrb[0].mxu0
        %1600 = vmatprep.mubr.f32.mxu0 0.0
        %1601 = vmatmul.mubr.f32.gmra.mrb[0].mxu0 %v1444
        %v1602 = vpop.f32.mrb[0].mxu0
        %v1603 = vadd.f32 0.0, %v1602
        %v1604 = vpop.f32.mrb[0].mxu0
        %1605 = vmatprep.mubr.f32.mxu0 0.0
        %1606 = vmatmul.mubr.f32.gmra.mrb[0].mxu0 %v1445
        %v1607 = vpop.f32.mrb[0].mxu0
        %v1608 = vadd.f32 0.0, %v1607
        %v1609 = vpop.f32.mrb[0].mxu0
        %1610 = vmatprep.mubr.f32.mxu0 0.0
        %1611 = vmatmul.mubr.f32.gmra.mrb[0].mxu0 %v1446
        %v1612 = vpop.f32.mrb[0].mxu0
        %v1613 = vadd.f32 0.0, %v1612
        %v1614 = vpop.f32.mrb[0].mxu0
        %1615 = vdwg.mxu0
        %v1616 = vrcp.pop %v1448
        %v1617 = vrcp.pop %v1450
        %v1618 = vrcp.pop %v1452
        %v1619 = vrcp.pop %v1454
        %v1620 = vrcp.pop %v1456
        %v1621 = vrcp.pop %v1458
        %v1622 = vrcp.pop %v1460
        %v1623 = vrcp.pop %v1462
        %v1624 = vmul.f32 %v1578, %v1616
        %v1625 = vmul.f32 %v1583, %v1617
        %v1626 = vmul.f32 %v1588, %v1618
        %v1627 = vmul.f32 %v1593, %v1619
        %v1628 = vmul.f32 %v1598, %v1620
        %v1629 = vmul.f32 %v1603, %v1621
        %v1630 = vmul.f32 %v1608, %v1622
        %v1631 = vmul.f32 %v1613, %v1623
        %1632 = vset.pattern.permute.xlu0 3
        %1633 = vperm.xlu0 %1632, %v752
        %v1634 = vpop.permute.xlu0 %1633
        %1636 = vset.pattern.permute.xlu0 3
        %1637 = vperm.xlu0 %1636, %v753
        %v1638 = vpop.permute.xlu0 %1637
        %1640 = vset.pattern.permute.xlu0 3
        %1641 = vperm.xlu0 %1640, %v754
        %v1642 = vpop.permute.xlu0 %1641
        %1644 = vset.pattern.permute.xlu0 3
        %1645 = vperm.xlu0 %1644, %v755
        %v1646 = vpop.permute.xlu0 %1645
        %1648 = vset.pattern.permute.xlu0 3
        %1649 = vperm.xlu0 %1648, %v756
        %v1650 = vpop.permute.xlu0 %1649
        %1652 = vset.pattern.permute.xlu0 3
        %1653 = vperm.xlu0 %1652, %v757
        %v1654 = vpop.permute.xlu0 %1653
        %1656 = vset.pattern.permute.xlu0 3
        %1657 = vperm.xlu0 %1656, %v758
        %v1658 = vpop.permute.xlu0 %1657
        %1660 = vset.pattern.permute.xlu0 3
        %1661 = vperm.xlu0 %1660, %v759
        %v1662 = vpop.permute.xlu0 %1661
        %v1664 = vlaneseq
        %v1665 = vshrl.u32 %v1664, 7
        %v1666 = vsub.s32 3, %v1665
        %v1667 = vrot.slane %v760, %v1666
        %v1668 = vadd.f32 %v1634, %v1667
        %v1669 = vadd.f32 %v1638, %v1667
        %v1670 = vadd.f32 %v1642, %v1667
        %v1671 = vadd.f32 %v1646, %v1667
        %v1672 = vadd.f32 %v1650, %v1667
        %v1673 = vadd.f32 %v1654, %v1667
        %v1674 = vadd.f32 %v1658, %v1667
        %v1675 = vadd.f32 %v1662, %v1667
        %v1676 = vmul.f32 %v1668, 0.01
        %v1677 = vmul.f32 %v1669, 0.01
        %v1678 = vmul.f32 %v1670, 0.01
        %v1679 = vmul.f32 %v1671, 0.01
        %v1680 = vmul.f32 %v1672, 0.01
        %v1681 = vmul.f32 %v1673, 0.01
        %v1682 = vmul.f32 %v1674, 0.01
        %v1683 = vmul.f32 %v1675, 0.01
        %v1684 = vmax.f32 %v1668, %v1676
        %v1685 = vmax.f32 %v1669, %v1677
        %v1686 = vmax.f32 %v1670, %v1678
        %v1687 = vmax.f32 %v1671, %v1679
        %v1688 = vmax.f32 %v1672, %v1680
        %v1689 = vmax.f32 %v1673, %v1681
        %v1690 = vmax.f32 %v1674, %v1682
        %v1691 = vmax.f32 %v1675, %v1683
        %1692 = vmax.xlane.f32.xlu0 %v1684
        %v1693 = vpop.xlane.xlu0 %1692
        %1694 = vmax.xlane.f32.xlu0 %v1685
        %v1695 = vpop.xlane.xlu0 %1694
        %1696 = vmax.xlane.f32.xlu0 %v1686
        %v1697 = vpop.xlane.xlu0 %1696
        %1698 = vmax.xlane.f32.xlu0 %v1687
        %v1699 = vpop.xlane.xlu0 %1698
        %1700 = vmax.xlane.f32.xlu0 %v1688
        %v1701 = vpop.xlane.xlu0 %1700
        %1702 = vmax.xlane.f32.xlu0 %v1689
        %v1703 = vpop.xlane.xlu0 %1702
        %1704 = vmax.xlane.f32.xlu0 %v1690
        %v1705 = vpop.xlane.xlu0 %1704
        %1706 = vmax.xlane.f32.xlu0 %v1691
        %v1707 = vpop.xlane.xlu0 %1706
        %v1708 = vsub.f32 %v1684, %v1693
        %v1709 = vsub.f32 %v1685, %v1695
        %v1710 = vsub.f32 %v1686, %v1697
        %v1711 = vsub.f32 %v1687, %v1699
        %v1712 = vsub.f32 %v1688, %v1701
        %v1713 = vsub.f32 %v1689, %v1703
        %v1714 = vsub.f32 %v1690, %v1705
        %v1715 = vsub.f32 %v1691, %v1707
        %v1716 = vmul.f32 %v1708, 1.442695
        %v1717 = vpow.pop %v1716
        %v1718 = vmul.f32 %v1709, 1.442695
        %v1719 = vpow.pop %v1718
        %v1720 = vmul.f32 %v1710, 1.442695
        %v1721 = vpow.pop %v1720
        %v1722 = vmul.f32 %v1711, 1.442695
        %v1723 = vpow.pop %v1722
        %v1724 = vmul.f32 %v1712, 1.442695
        %v1725 = vpow.pop %v1724
        %v1726 = vmul.f32 %v1713, 1.442695
        %v1727 = vpow.pop %v1726
        %v1728 = vmul.f32 %v1714, 1.442695
        %v1729 = vpow.pop %v1728
        %v1730 = vmul.f32 %v1715, 1.442695
        %v1731 = vpow.pop %v1730
        %v1732 = vmul.f32 %v1717, %v742
        %v1733 = vmul.f32 %v1719, %v743
        %v1734 = vmul.f32 %v1721, %v744
        %v1735 = vmul.f32 %v1723, %v745
        %v1736 = vmul.f32 %v1725, %v746
        %v1737 = vmul.f32 %v1727, %v747
        %v1738 = vmul.f32 %v1729, %v748
        %v1739 = vmul.f32 %v1731, %v749
        %1740 = vadd.xlane.f32.xlu0 %v1732
        %v1741 = vpop.xlane.xlu0 %1740
        %1742 = vadd.xlane.f32.xlu0 %v1733
        %v1743 = vpop.xlane.xlu0 %1742
        %1744 = vadd.xlane.f32.xlu0 %v1734
        %v1745 = vpop.xlane.xlu0 %1744
        %1746 = vadd.xlane.f32.xlu0 %v1735
        %v1747 = vpop.xlane.xlu0 %1746
        %1748 = vadd.xlane.f32.xlu0 %v1736
        %v1749 = vpop.xlane.xlu0 %1748
        %1750 = vadd.xlane.f32.xlu0 %v1737
        %v1751 = vpop.xlane.xlu0 %1750
        %1752 = vadd.xlane.f32.xlu0 %v1738
        %v1753 = vpop.xlane.xlu0 %1752
        %1754 = vadd.xlane.f32.xlu0 %v1739
        %v1755 = vpop.xlane.xlu0 %1754
        %1756 = vrot.lane.b32.xlu0 %v893, 80
        %v1757 = vpop.permute.xlu0 %1756
        %1758 = vrot.lane.b32.xlu0 %v894, 80
        %v1759 = vpop.permute.xlu0 %1758
        %1760 = vrot.lane.b32.xlu0 %v895, 80
        %v1761 = vpop.permute.xlu0 %1760
        %1762 = vrot.lane.b32.xlu0 %v896, 80
        %v1763 = vpop.permute.xlu0 %1762
        %1764 = vrot.lane.b32.xlu0 %v897, 80
        %v1765 = vpop.permute.xlu0 %1764
        %1766 = vrot.lane.b32.xlu0 %v898, 80
        %v1767 = vpop.permute.xlu0 %1766
        %1768 = vrot.lane.b32.xlu0 %v899, 80
        %v1769 = vpop.permute.xlu0 %1768
        %1770 = vrot.lane.b32.xlu0 %v900, 80
        %v1771 = vpop.permute.xlu0 %1770
        %1772 = vrot.lane.b32.xlu0 %v901, 80
        %v1773 = vpop.permute.xlu0 %1772
        %1774 = vrot.lane.b32.xlu0 %v902, 80
        %v1775 = vpop.permute.xlu0 %1774
        %1776 = vrot.lane.b32.xlu0 %v903, 80
        %v1777 = vpop.permute.xlu0 %1776
        %1778 = vrot.lane.b32.xlu0 %v904, 80
        %v1779 = vpop.permute.xlu0 %1778
        %1780 = vrot.lane.b32.xlu0 %v905, 80
        %v1781 = vpop.permute.xlu0 %1780
        %1782 = vrot.lane.b32.xlu0 %v906, 80
        %v1783 = vpop.permute.xlu0 %1782
        %1784 = vrot.lane.b32.xlu0 %v907, 80
        %v1785 = vpop.permute.xlu0 %1784
        %1786 = vrot.lane.b32.xlu0 %v908, 80
        %v1787 = vpop.permute.xlu0 %1786
        %1804 = vmatprep.subr.mxu0 0.0
        %1805 = vmatpush1.msra.mxu0 %v1757
        %1806 = vmatprep.subr.mxu0 0.0
        %1807 = vmatpush1.msra.mxu0 %v1759
        %1808 = vmatprep.subr.mxu0 0.0
        %1809 = vmatpush1.msra.mxu0 %v1761
        %1810 = vmatprep.subr.mxu0 0.0
        %1811 = vmatpush1.msra.mxu0 %v1763
        %1812 = vmatprep.subr.mxu0 0.0
        %1813 = vmatpush1.msra.mxu0 %v1765
        %1814 = vmatprep.subr.mxu0 0.0
        %1815 = vmatpush1.msra.mxu0 %v1767
        %1816 = vmatprep.subr.mxu0 0.0
        %1817 = vmatpush1.msra.mxu0 %v1769
        %1818 = vmatprep.subr.mxu0 0.0
        %1819 = vmatpush1.msra.mxu0 %v1771
        %1820 = vmatprep.subr.mxu0 0.0
        %1821 = vmatpush1.msra.mxu0 %v1773
        %1822 = vmatprep.subr.mxu0 0.0
        %1823 = vmatpush1.msra.mxu0 %v1775
        %1824 = vmatprep.subr.mxu0 0.0
        %1825 = vmatpush1.msra.mxu0 %v1777
        %1826 = vmatprep.subr.mxu0 0.0
        %1827 = vmatpush1.msra.mxu0 %v1779
        %1828 = vmatprep.subr.mxu0 0.0
        %1829 = vmatpush1.msra.mxu0 %v1781
        %1830 = vmatprep.subr.mxu0 0.0
        %1831 = vmatpush1.msra.mxu0 %v1783
        %1832 = vmatprep.subr.mxu0 0.0
        %1833 = vmatpush1.msra.mxu0 %v1785
        %1834 = vmatprep.subr.mxu0 0.0
        %1835 = vmatpush1.msra.mxu0 %v1787
        %1836 = vmatprep.subr.mxu0 0.0
        %1837 = vmatpush1.msra.mxu0 0.0
        %1838 = vmatprep.subr.mxu0 0.0
        %1839 = vmatpush1.msra.mxu0 0.0
        %1840 = vmatprep.subr.mxu0 0.0
        %1841 = vmatpush1.msra.mxu0 0.0
        %1842 = vmatprep.subr.mxu0 0.0
        %1843 = vmatpush1.msra.mxu0 0.0
        %1844 = vmatprep.subr.mxu0 0.0
        %1845 = vmatpush1.msra.mxu0 0.0
        %1846 = vmatprep.subr.mxu0 0.0
        %1847 = vmatpush1.msra.mxu0 0.0
        %1848 = vmatprep.subr.mxu0 0.0
        %1849 = vmatpush1.msra.mxu0 0.0
        %1850 = vmatprep.subr.mxu0 0.0
        %1851 = vmatpush1.msra.mxu0 0.0
        %1852 = vmatprep.subr.mxu0 0.0
        %1853 = vmatpush1.msra.mxu0 0.0
        %1854 = vmatprep.subr.mxu0 0.0
        %1855 = vmatpush1.msra.mxu0 0.0
        %1856 = vmatprep.subr.mxu0 0.0
        %1857 = vmatpush1.msra.mxu0 0.0
        %1858 = vmatprep.subr.mxu0 0.0
        %1859 = vmatpush1.msra.mxu0 0.0
        %1860 = vmatprep.subr.mxu0 0.0
        %1861 = vmatpush1.msra.mxu0 0.0
        %1862 = vmatprep.subr.mxu0 0.0
        %1863 = vmatpush1.msra.mxu0 0.0
        %1864 = vmatprep.subr.mxu0 0.0
        %1865 = vmatpush1.msra.mxu0 0.0
        %1866 = vmatprep.subr.mxu0 0.0
        %1867 = vmatpush1.msra.mxu0 0.0
        %1868 = vmatprep.mubr.f32.mxu0 0.0
        %1869 = vmatmul.mubr.f32.gmra.mrb[0].mxu0 %v1732
        %v1870 = vpop.f32.mrb[0].mxu0
        %v1871 = vadd.f32 0.0, %v1870
        %v1872 = vpop.f32.mrb[0].mxu0
        %1873 = vmatprep.mubr.f32.mxu0 0.0
        %1874 = vmatmul.mubr.f32.gmra.mrb[0].mxu0 %v1733
        %v1875 = vpop.f32.mrb[0].mxu0
        %v1876 = vadd.f32 0.0, %v1875
        %v1877 = vpop.f32.mrb[0].mxu0
        %1878 = vmatprep.mubr.f32.mxu0 0.0
        %1879 = vmatmul.mubr.f32.gmra.mrb[0].mxu0 %v1734
        %v1880 = vpop.f32.mrb[0].mxu0
        %v1881 = vadd.f32 0.0, %v1880
        %v1882 = vpop.f32.mrb[0].mxu0
        %1883 = vmatprep.mubr.f32.mxu0 0.0
        %1884 = vmatmul.mubr.f32.gmra.mrb[0].mxu0 %v1735
        %v1885 = vpop.f32.mrb[0].mxu0
        %v1886 = vadd.f32 0.0, %v1885
        %v1887 = vpop.f32.mrb[0].mxu0
        %1888 = vmatprep.mubr.f32.mxu0 0.0
        %1889 = vmatmul.mubr.f32.gmra.mrb[0].mxu0 %v1736
        %v1890 = vpop.f32.mrb[0].mxu0
        %v1891 = vadd.f32 0.0, %v1890
        %v1892 = vpop.f32.mrb[0].mxu0
        %1893 = vmatprep.mubr.f32.mxu0 0.0
        %1894 = vmatmul.mubr.f32.gmra.mrb[0].mxu0 %v1737
        %v1895 = vpop.f32.mrb[0].mxu0
        %v1896 = vadd.f32 0.0, %v1895
        %v1897 = vpop.f32.mrb[0].mxu0
        %1898 = vmatprep.mubr.f32.mxu0 0.0
        %1899 = vmatmul.mubr.f32.gmra.mrb[0].mxu0 %v1738
        %v1900 = vpop.f32.mrb[0].mxu0
        %v1901 = vadd.f32 0.0, %v1900
        %v1902 = vpop.f32.mrb[0].mxu0
        %1903 = vmatprep.mubr.f32.mxu0 0.0
        %1904 = vmatmul.mubr.f32.gmra.mrb[0].mxu0 %v1739
        %v1905 = vpop.f32.mrb[0].mxu0
        %v1906 = vadd.f32 0.0, %v1905
        %v1907 = vpop.f32.mrb[0].mxu0
        %1908 = vdwg.mxu0
        %v1909 = vrcp.pop %v1741
        %v1910 = vrcp.pop %v1743
        %v1911 = vrcp.pop %v1745
        %v1912 = vrcp.pop %v1747
        %v1913 = vrcp.pop %v1749
        %v1914 = vrcp.pop %v1751
        %v1915 = vrcp.pop %v1753
        %v1916 = vrcp.pop %v1755
        %v1917 = vmul.f32 %v1871, %v1909
        %v1918 = vmul.f32 %v1876, %v1910
        %v1919 = vmul.f32 %v1881, %v1911
        %v1920 = vmul.f32 %v1886, %v1912
        %v1921 = vmul.f32 %v1891, %v1913
        %v1922 = vmul.f32 %v1896, %v1914
        %v1923 = vmul.f32 %v1901, %v1915
        %v1924 = vmul.f32 %v1906, %v1916
        %1925 = vset.pattern.permute.xlu0 4
        %1926 = vperm.xlu0 %1925, %v752
        %v1927 = vpop.permute.xlu0 %1926
        %1929 = vset.pattern.permute.xlu0 4
        %1930 = vperm.xlu0 %1929, %v753
        %v1931 = vpop.permute.xlu0 %1930
        %1933 = vset.pattern.permute.xlu0 4
        %1934 = vperm.xlu0 %1933, %v754
        %v1935 = vpop.permute.xlu0 %1934
        %1937 = vset.pattern.permute.xlu0 4
        %1938 = vperm.xlu0 %1937, %v755
        %v1939 = vpop.permute.xlu0 %1938
        %1941 = vset.pattern.permute.xlu0 4
        %1942 = vperm.xlu0 %1941, %v756
        %v1943 = vpop.permute.xlu0 %1942
        %1945 = vset.pattern.permute.xlu0 4
        %1946 = vperm.xlu0 %1945, %v757
        %v1947 = vpop.permute.xlu0 %1946
        %1949 = vset.pattern.permute.xlu0 4
        %1950 = vperm.xlu0 %1949, %v758
        %v1951 = vpop.permute.xlu0 %1950
        %1953 = vset.pattern.permute.xlu0 4
        %1954 = vperm.xlu0 %1953, %v759
        %v1955 = vpop.permute.xlu0 %1954
        %v1957 = vlaneseq
        %v1958 = vshrl.u32 %v1957, 7
        %v1959 = vsub.s32 4, %v1958
        %v1960 = vrot.slane %v760, %v1959
        %v1961 = vadd.f32 %v1927, %v1960
        %v1962 = vadd.f32 %v1931, %v1960
        %v1963 = vadd.f32 %v1935, %v1960
        %v1964 = vadd.f32 %v1939, %v1960
        %v1965 = vadd.f32 %v1943, %v1960
        %v1966 = vadd.f32 %v1947, %v1960
        %v1967 = vadd.f32 %v1951, %v1960
        %v1968 = vadd.f32 %v1955, %v1960
        %v1969 = vmul.f32 %v1961, 0.01
        %v1970 = vmul.f32 %v1962, 0.01
        %v1971 = vmul.f32 %v1963, 0.01
        %v1972 = vmul.f32 %v1964, 0.01
        %v1973 = vmul.f32 %v1965, 0.01
        %v1974 = vmul.f32 %v1966, 0.01
        %v1975 = vmul.f32 %v1967, 0.01
        %v1976 = vmul.f32 %v1968, 0.01
        %v1977 = vmax.f32 %v1961, %v1969
        %v1978 = vmax.f32 %v1962, %v1970
        %v1979 = vmax.f32 %v1963, %v1971
        %v1980 = vmax.f32 %v1964, %v1972
        %v1981 = vmax.f32 %v1965, %v1973
        %v1982 = vmax.f32 %v1966, %v1974
        %v1983 = vmax.f32 %v1967, %v1975
        %v1984 = vmax.f32 %v1968, %v1976
        %1985 = vmax.xlane.f32.xlu0 %v1977
        %v1986 = vpop.xlane.xlu0 %1985
        %1987 = vmax.xlane.f32.xlu0 %v1978
        %v1988 = vpop.xlane.xlu0 %1987
        %1989 = vmax.xlane.f32.xlu0 %v1979
        %v1990 = vpop.xlane.xlu0 %1989
        %1991 = vmax.xlane.f32.xlu0 %v1980
        %v1992 = vpop.xlane.xlu0 %1991
        %1993 = vmax.xlane.f32.xlu0 %v1981
        %v1994 = vpop.xlane.xlu0 %1993
        %1995 = vmax.xlane.f32.xlu0 %v1982
        %v1996 = vpop.xlane.xlu0 %1995
        %1997 = vmax.xlane.f32.xlu0 %v1983
        %v1998 = vpop.xlane.xlu0 %1997
        %1999 = vmax.xlane.f32.xlu0 %v1984
        %v2000 = vpop.xlane.xlu0 %1999
        %v2001 = vsub.f32 %v1977, %v1986
        %v2002 = vsub.f32 %v1978, %v1988
        %v2003 = vsub.f32 %v1979, %v1990
        %v2004 = vsub.f32 %v1980, %v1992
        %v2005 = vsub.f32 %v1981, %v1994
        %v2006 = vsub.f32 %v1982, %v1996
        %v2007 = vsub.f32 %v1983, %v1998
        %v2008 = vsub.f32 %v1984, %v2000
        %v2009 = vmul.f32 %v2001, 1.442695
        %v2010 = vpow.pop %v2009
        %v2011 = vmul.f32 %v2002, 1.442695
        %v2012 = vpow.pop %v2011
        %v2013 = vmul.f32 %v2003, 1.442695
        %v2014 = vpow.pop %v2013
        %v2015 = vmul.f32 %v2004, 1.442695
        %v2016 = vpow.pop %v2015
        %v2017 = vmul.f32 %v2005, 1.442695
        %v2018 = vpow.pop %v2017
        %v2019 = vmul.f32 %v2006, 1.442695
        %v2020 = vpow.pop %v2019
        %v2021 = vmul.f32 %v2007, 1.442695
        %v2022 = vpow.pop %v2021
        %v2023 = vmul.f32 %v2008, 1.442695
        %v2024 = vpow.pop %v2023
        %v2025 = vmul.f32 %v2010, %v742
        %v2026 = vmul.f32 %v2012, %v743
        %v2027 = vmul.f32 %v2014, %v744
        %v2028 = vmul.f32 %v2016, %v745
        %v2029 = vmul.f32 %v2018, %v746
        %v2030 = vmul.f32 %v2020, %v747
        %v2031 = vmul.f32 %v2022, %v748
        %v2032 = vmul.f32 %v2024, %v749
        %2033 = vadd.xlane.f32.xlu0 %v2025
        %v2034 = vpop.xlane.xlu0 %2033
        %2035 = vadd.xlane.f32.xlu0 %v2026
        %v2036 = vpop.xlane.xlu0 %2035
        %2037 = vadd.xlane.f32.xlu0 %v2027
        %v2038 = vpop.xlane.xlu0 %2037
        %2039 = vadd.xlane.f32.xlu0 %v2028
        %v2040 = vpop.xlane.xlu0 %2039
        %2041 = vadd.xlane.f32.xlu0 %v2029
        %v2042 = vpop.xlane.xlu0 %2041
        %2043 = vadd.xlane.f32.xlu0 %v2030
        %v2044 = vpop.xlane.xlu0 %2043
        %2045 = vadd.xlane.f32.xlu0 %v2031
        %v2046 = vpop.xlane.xlu0 %2045
        %2047 = vadd.xlane.f32.xlu0 %v2032
        %v2048 = vpop.xlane.xlu0 %2047
        %2049 = vrot.lane.b32.xlu0 %v893, 64
        %v2050 = vpop.permute.xlu0 %2049
        %2051 = vrot.lane.b32.xlu0 %v894, 64
        %v2052 = vpop.permute.xlu0 %2051
        %2053 = vrot.lane.b32.xlu0 %v895, 64
        %v2054 = vpop.permute.xlu0 %2053
        %2055 = vrot.lane.b32.xlu0 %v896, 64
        %v2056 = vpop.permute.xlu0 %2055
        %2057 = vrot.lane.b32.xlu0 %v897, 64
        %v2058 = vpop.permute.xlu0 %2057
        %2059 = vrot.lane.b32.xlu0 %v898, 64
        %v2060 = vpop.permute.xlu0 %2059
        %2061 = vrot.lane.b32.xlu0 %v899, 64
        %v2062 = vpop.permute.xlu0 %2061
        %2063 = vrot.lane.b32.xlu0 %v900, 64
        %v2064 = vpop.permute.xlu0 %2063
        %2065 = vrot.lane.b32.xlu0 %v901, 64
        %v2066 = vpop.permute.xlu0 %2065
        %2067 = vrot.lane.b32.xlu0 %v902, 64
        %v2068 = vpop.permute.xlu0 %2067
        %2069 = vrot.lane.b32.xlu0 %v903, 64
        %v2070 = vpop.permute.xlu0 %2069
        %2071 = vrot.lane.b32.xlu0 %v904, 64
        %v2072 = vpop.permute.xlu0 %2071
        %2073 = vrot.lane.b32.xlu0 %v905, 64
        %v2074 = vpop.permute.xlu0 %2073
        %2075 = vrot.lane.b32.xlu0 %v906, 64
        %v2076 = vpop.permute.xlu0 %2075
        %2077 = vrot.lane.b32.xlu0 %v907, 64
        %v2078 = vpop.permute.xlu0 %2077
        %2079 = vrot.lane.b32.xlu0 %v908, 64
        %v2080 = vpop.permute.xlu0 %2079
        %2097 = vmatprep.subr.mxu0 0.0
        %2098 = vmatpush1.msra.mxu0 %v2050
        %2099 = vmatprep.subr.mxu0 0.0
        %2100 = vmatpush1.msra.mxu0 %v2052
        %2101 = vmatprep.subr.mxu0 0.0
        %2102 = vmatpush1.msra.mxu0 %v2054
        %2103 = vmatprep.subr.mxu0 0.0
        %2104 = vmatpush1.msra.mxu0 %v2056
        %2105 = vmatprep.subr.mxu0 0.0
        %2106 = vmatpush1.msra.mxu0 %v2058
        %2107 = vmatprep.subr.mxu0 0.0
        %2108 = vmatpush1.msra.mxu0 %v2060
        %2109 = vmatprep.subr.mxu0 0.0
        %2110 = vmatpush1.msra.mxu0 %v2062
        %2111 = vmatprep.subr.mxu0 0.0
        %2112 = vmatpush1.msra.mxu0 %v2064
        %2113 = vmatprep.subr.mxu0 0.0
        %2114 = vmatpush1.msra.mxu0 %v2066
        %2115 = vmatprep.subr.mxu0 0.0
        %2116 = vmatpush1.msra.mxu0 %v2068
        %2117 = vmatprep.subr.mxu0 0.0
        %2118 = vmatpush1.msra.mxu0 %v2070
        %2119 = vmatprep.subr.mxu0 0.0
        %2120 = vmatpush1.msra.mxu0 %v2072
        %2121 = vmatprep.subr.mxu0 0.0
        %2122 = vmatpush1.msra.mxu0 %v2074
        %2123 = vmatprep.subr.mxu0 0.0
        %2124 = vmatpush1.msra.mxu0 %v2076
        %2125 = vmatprep.subr.mxu0 0.0
        %2126 = vmatpush1.msra.mxu0 %v2078
        %2127 = vmatprep.subr.mxu0 0.0
        %2128 = vmatpush1.msra.mxu0 %v2080
        %2129 = vmatprep.subr.mxu0 0.0
        %2130 = vmatpush1.msra.mxu0 0.0
        %2131 = vmatprep.subr.mxu0 0.0
        %2132 = vmatpush1.msra.mxu0 0.0
        %2133 = vmatprep.subr.mxu0 0.0
        %2134 = vmatpush1.msra.mxu0 0.0
        %2135 = vmatprep.subr.mxu0 0.0
        %2136 = vmatpush1.msra.mxu0 0.0
        %2137 = vmatprep.subr.mxu0 0.0
        %2138 = vmatpush1.msra.mxu0 0.0
        %2139 = vmatprep.subr.mxu0 0.0
        %2140 = vmatpush1.msra.mxu0 0.0
        %2141 = vmatprep.subr.mxu0 0.0
        %2142 = vmatpush1.msra.mxu0 0.0
        %2143 = vmatprep.subr.mxu0 0.0
        %2144 = vmatpush1.msra.mxu0 0.0
        %2145 = vmatprep.subr.mxu0 0.0
        %2146 = vmatpush1.msra.mxu0 0.0
        %2147 = vmatprep.subr.mxu0 0.0
        %2148 = vmatpush1.msra.mxu0 0.0
        %2149 = vmatprep.subr.mxu0 0.0
        %2150 = vmatpush1.msra.mxu0 0.0
        %2151 = vmatprep.subr.mxu0 0.0
        %2152 = vmatpush1.msra.mxu0 0.0
        %2153 = vmatprep.subr.mxu0 0.0
        %2154 = vmatpush1.msra.mxu0 0.0
        %2155 = vmatprep.subr.mxu0 0.0
        %2156 = vmatpush1.msra.mxu0 0.0
        %2157 = vmatprep.subr.mxu0 0.0
        %2158 = vmatpush1.msra.mxu0 0.0
        %2159 = vmatprep.subr.mxu0 0.0
        %2160 = vmatpush1.msra.mxu0 0.0
        %2161 = vmatprep.mubr.f32.mxu0 0.0
        %2162 = vmatmul.mubr.f32.gmra.mrb[0].mxu0 %v2025
        %v2163 = vpop.f32.mrb[0].mxu0
        %v2164 = vadd.f32 0.0, %v2163
        %v2165 = vpop.f32.mrb[0].mxu0
        %2166 = vmatprep.mubr.f32.mxu0 0.0
        %2167 = vmatmul.mubr.f32.gmra.mrb[0].mxu0 %v2026
        %v2168 = vpop.f32.mrb[0].mxu0
        %v2169 = vadd.f32 0.0, %v2168
        %v2170 = vpop.f32.mrb[0].mxu0
        %2171 = vmatprep.mubr.f32.mxu0 0.0
        %2172 = vmatmul.mubr.f32.gmra.mrb[0].mxu0 %v2027
        %v2173 = vpop.f32.mrb[0].mxu0
        %v2174 = vadd.f32 0.0, %v2173
        %v2175 = vpop.f32.mrb[0].mxu0
        %2176 = vmatprep.mubr.f32.mxu0 0.0
        %2177 = vmatmul.mubr.f32.gmra.mrb[0].mxu0 %v2028
        %v2178 = vpop.f32.mrb[0].mxu0
        %v2179 = vadd.f32 0.0, %v2178
        %v2180 = vpop.f32.mrb[0].mxu0
        %2181 = vmatprep.mubr.f32.mxu0 0.0
        %2182 = vmatmul.mubr.f32.gmra.mrb[0].mxu0 %v2029
        %v2183 = vpop.f32.mrb[0].mxu0
        %v2184 = vadd.f32 0.0, %v2183
        %v2185 = vpop.f32.mrb[0].mxu0
        %2186 = vmatprep.mubr.f32.mxu0 0.0
        %2187 = vmatmul.mubr.f32.gmra.mrb[0].mxu0 %v2030
        %v2188 = vpop.f32.mrb[0].mxu0
        %v2189 = vadd.f32 0.0, %v2188
        %v2190 = vpop.f32.mrb[0].mxu0
        %2191 = vmatprep.mubr.f32.mxu0 0.0
        %2192 = vmatmul.mubr.f32.gmra.mrb[0].mxu0 %v2031
        %v2193 = vpop.f32.mrb[0].mxu0
        %v2194 = vadd.f32 0.0, %v2193
        %v2195 = vpop.f32.mrb[0].mxu0
        %2196 = vmatprep.mubr.f32.mxu0 0.0
        %2197 = vmatmul.mubr.f32.gmra.mrb[0].mxu0 %v2032
        %v2198 = vpop.f32.mrb[0].mxu0
        %v2199 = vadd.f32 0.0, %v2198
        %v2200 = vpop.f32.mrb[0].mxu0
        %2201 = vdwg.mxu0
        %v2202 = vrcp.pop %v2034
        %v2203 = vrcp.pop %v2036
        %v2204 = vrcp.pop %v2038
        %v2205 = vrcp.pop %v2040
        %v2206 = vrcp.pop %v2042
        %v2207 = vrcp.pop %v2044
        %v2208 = vrcp.pop %v2046
        %v2209 = vrcp.pop %v2048
        %v2210 = vmul.f32 %v2164, %v2202
        %v2211 = vmul.f32 %v2169, %v2203
        %v2212 = vmul.f32 %v2174, %v2204
        %v2213 = vmul.f32 %v2179, %v2205
        %v2214 = vmul.f32 %v2184, %v2206
        %v2215 = vmul.f32 %v2189, %v2207
        %v2216 = vmul.f32 %v2194, %v2208
        %v2217 = vmul.f32 %v2199, %v2209
        %2218 = vset.pattern.permute.xlu0 5
        %2219 = vperm.xlu0 %2218, %v752
        %v2220 = vpop.permute.xlu0 %2219
        %2222 = vset.pattern.permute.xlu0 5
        %2223 = vperm.xlu0 %2222, %v753
        %v2224 = vpop.permute.xlu0 %2223
        %2226 = vset.pattern.permute.xlu0 5
        %2227 = vperm.xlu0 %2226, %v754
        %v2228 = vpop.permute.xlu0 %2227
        %2230 = vset.pattern.permute.xlu0 5
        %2231 = vperm.xlu0 %2230, %v755
        %v2232 = vpop.permute.xlu0 %2231
        %2234 = vset.pattern.permute.xlu0 5
        %2235 = vperm.xlu0 %2234, %v756
        %v2236 = vpop.permute.xlu0 %2235
        %2238 = vset.pattern.permute.xlu0 5
        %2239 = vperm.xlu0 %2238, %v757
        %v2240 = vpop.permute.xlu0 %2239
        %2242 = vset.pattern.permute.xlu0 5
        %2243 = vperm.xlu0 %2242, %v758
        %v2244 = vpop.permute.xlu0 %2243
        %2246 = vset.pattern.permute.xlu0 5
        %2247 = vperm.xlu0 %2246, %v759
        %v2248 = vpop.permute.xlu0 %2247
        %v2250 = vlaneseq
        %v2251 = vshrl.u32 %v2250, 7
        %v2252 = vsub.s32 5, %v2251
        %v2253 = vrot.slane %v760, %v2252
        %v2254 = vadd.f32 %v2220, %v2253
        %v2255 = vadd.f32 %v2224, %v2253
        %v2256 = vadd.f32 %v2228, %v2253
        %v2257 = vadd.f32 %v2232, %v2253
        %v2258 = vadd.f32 %v2236, %v2253
        %v2259 = vadd.f32 %v2240, %v2253
        %v2260 = vadd.f32 %v2244, %v2253
        %v2261 = vadd.f32 %v2248, %v2253
        %v2262 = vmul.f32 %v2254, 0.01
        %v2263 = vmul.f32 %v2255, 0.01
        %v2264 = vmul.f32 %v2256, 0.01
        %v2265 = vmul.f32 %v2257, 0.01
        %v2266 = vmul.f32 %v2258, 0.01
        %v2267 = vmul.f32 %v2259, 0.01
        %v2268 = vmul.f32 %v2260, 0.01
        %v2269 = vmul.f32 %v2261, 0.01
        %v2270 = vmax.f32 %v2254, %v2262
        %v2271 = vmax.f32 %v2255, %v2263
        %v2272 = vmax.f32 %v2256, %v2264
        %v2273 = vmax.f32 %v2257, %v2265
        %v2274 = vmax.f32 %v2258, %v2266
        %v2275 = vmax.f32 %v2259, %v2267
        %v2276 = vmax.f32 %v2260, %v2268
        %v2277 = vmax.f32 %v2261, %v2269
        %2278 = vmax.xlane.f32.xlu0 %v2270
        %v2279 = vpop.xlane.xlu0 %2278
        %2280 = vmax.xlane.f32.xlu0 %v2271
        %v2281 = vpop.xlane.xlu0 %2280
        %2282 = vmax.xlane.f32.xlu0 %v2272
        %v2283 = vpop.xlane.xlu0 %2282
        %2284 = vmax.xlane.f32.xlu0 %v2273
        %v2285 = vpop.xlane.xlu0 %2284
        %2286 = vmax.xlane.f32.xlu0 %v2274
        %v2287 = vpop.xlane.xlu0 %2286
        %2288 = vmax.xlane.f32.xlu0 %v2275
        %v2289 = vpop.xlane.xlu0 %2288
        %2290 = vmax.xlane.f32.xlu0 %v2276
        %v2291 = vpop.xlane.xlu0 %2290
        %2292 = vmax.xlane.f32.xlu0 %v2277
        %v2293 = vpop.xlane.xlu0 %2292
        %v2294 = vsub.f32 %v2270, %v2279
        %v2295 = vsub.f32 %v2271, %v2281
        %v2296 = vsub.f32 %v2272, %v2283
        %v2297 = vsub.f32 %v2273, %v2285
        %v2298 = vsub.f32 %v2274, %v2287
        %v2299 = vsub.f32 %v2275, %v2289
        %v2300 = vsub.f32 %v2276, %v2291
        %v2301 = vsub.f32 %v2277, %v2293
        %v2302 = vmul.f32 %v2294, 1.442695
        %v2303 = vpow.pop %v2302
        %v2304 = vmul.f32 %v2295, 1.442695
        %v2305 = vpow.pop %v2304
        %v2306 = vmul.f32 %v2296, 1.442695
        %v2307 = vpow.pop %v2306
        %v2308 = vmul.f32 %v2297, 1.442695
        %v2309 = vpow.pop %v2308
        %v2310 = vmul.f32 %v2298, 1.442695
        %v2311 = vpow.pop %v2310
        %v2312 = vmul.f32 %v2299, 1.442695
        %v2313 = vpow.pop %v2312
        %v2314 = vmul.f32 %v2300, 1.442695
        %v2315 = vpow.pop %v2314
        %v2316 = vmul.f32 %v2301, 1.442695
        %v2317 = vpow.pop %v2316
        %v2318 = vmul.f32 %v2303, %v742
        %v2319 = vmul.f32 %v2305, %v743
        %v2320 = vmul.f32 %v2307, %v744
        %v2321 = vmul.f32 %v2309, %v745
        %v2322 = vmul.f32 %v2311, %v746
        %v2323 = vmul.f32 %v2313, %v747
        %v2324 = vmul.f32 %v2315, %v748
        %v2325 = vmul.f32 %v2317, %v749
        %2326 = vadd.xlane.f32.xlu0 %v2318
        %v2327 = vpop.xlane.xlu0 %2326
        %2328 = vadd.xlane.f32.xlu0 %v2319
        %v2329 = vpop.xlane.xlu0 %2328
        %2330 = vadd.xlane.f32.xlu0 %v2320
        %v2331 = vpop.xlane.xlu0 %2330
        %2332 = vadd.xlane.f32.xlu0 %v2321
        %v2333 = vpop.xlane.xlu0 %2332
        %2334 = vadd.xlane.f32.xlu0 %v2322
        %v2335 = vpop.xlane.xlu0 %2334
        %2336 = vadd.xlane.f32.xlu0 %v2323
        %v2337 = vpop.xlane.xlu0 %2336
        %2338 = vadd.xlane.f32.xlu0 %v2324
        %v2339 = vpop.xlane.xlu0 %2338
        %2340 = vadd.xlane.f32.xlu0 %v2325
        %v2341 = vpop.xlane.xlu0 %2340
        %2342 = vrot.lane.b32.xlu0 %v893, 48
        %v2343 = vpop.permute.xlu0 %2342
        %2344 = vrot.lane.b32.xlu0 %v894, 48
        %v2345 = vpop.permute.xlu0 %2344
        %2346 = vrot.lane.b32.xlu0 %v895, 48
        %v2347 = vpop.permute.xlu0 %2346
        %2348 = vrot.lane.b32.xlu0 %v896, 48
        %v2349 = vpop.permute.xlu0 %2348
        %2350 = vrot.lane.b32.xlu0 %v897, 48
        %v2351 = vpop.permute.xlu0 %2350
        %2352 = vrot.lane.b32.xlu0 %v898, 48
        %v2353 = vpop.permute.xlu0 %2352
        %2354 = vrot.lane.b32.xlu0 %v899, 48
        %v2355 = vpop.permute.xlu0 %2354
        %2356 = vrot.lane.b32.xlu0 %v900, 48
        %v2357 = vpop.permute.xlu0 %2356
        %2358 = vrot.lane.b32.xlu0 %v901, 48
        %v2359 = vpop.permute.xlu0 %2358
        %2360 = vrot.lane.b32.xlu0 %v902, 48
        %v2361 = vpop.permute.xlu0 %2360
        %2362 = vrot.lane.b32.xlu0 %v903, 48
        %v2363 = vpop.permute.xlu0 %2362
        %2364 = vrot.lane.b32.xlu0 %v904, 48
        %v2365 = vpop.permute.xlu0 %2364
        %2366 = vrot.lane.b32.xlu0 %v905, 48
        %v2367 = vpop.permute.xlu0 %2366
        %2368 = vrot.lane.b32.xlu0 %v906, 48
        %v2369 = vpop.permute.xlu0 %2368
        %2370 = vrot.lane.b32.xlu0 %v907, 48
        %v2371 = vpop.permute.xlu0 %2370
        %2372 = vrot.lane.b32.xlu0 %v908, 48
        %v2373 = vpop.permute.xlu0 %2372
        %2390 = vmatprep.subr.mxu0 0.0
        %2391 = vmatpush1.msra.mxu0 %v2343
        %2392 = vmatprep.subr.mxu0 0.0
        %2393 = vmatpush1.msra.mxu0 %v2345
        %2394 = vmatprep.subr.mxu0 0.0
        %2395 = vmatpush1.msra.mxu0 %v2347
        %2396 = vmatprep.subr.mxu0 0.0
        %2397 = vmatpush1.msra.mxu0 %v2349
        %2398 = vmatprep.subr.mxu0 0.0
        %2399 = vmatpush1.msra.mxu0 %v2351
        %2400 = vmatprep.subr.mxu0 0.0
        %2401 = vmatpush1.msra.mxu0 %v2353
        %2402 = vmatprep.subr.mxu0 0.0
        %2403 = vmatpush1.msra.mxu0 %v2355
        %2404 = vmatprep.subr.mxu0 0.0
        %2405 = vmatpush1.msra.mxu0 %v2357
        %2406 = vmatprep.subr.mxu0 0.0
        %2407 = vmatpush1.msra.mxu0 %v2359
        %2408 = vmatprep.subr.mxu0 0.0
        %2409 = vmatpush1.msra.mxu0 %v2361
        %2410 = vmatprep.subr.mxu0 0.0
        %2411 = vmatpush1.msra.mxu0 %v2363
        %2412 = vmatprep.subr.mxu0 0.0
        %2413 = vmatpush1.msra.mxu0 %v2365
        %2414 = vmatprep.subr.mxu0 0.0
        %2415 = vmatpush1.msra.mxu0 %v2367
        %2416 = vmatprep.subr.mxu0 0.0
        %2417 = vmatpush1.msra.mxu0 %v2369
        %2418 = vmatprep.subr.mxu0 0.0
        %2419 = vmatpush1.msra.mxu0 %v2371
        %2420 = vmatprep.subr.mxu0 0.0
        %2421 = vmatpush1.msra.mxu0 %v2373
        %2422 = vmatprep.subr.mxu0 0.0
        %2423 = vmatpush1.msra.mxu0 0.0
        %2424 = vmatprep.subr.mxu0 0.0
        %2425 = vmatpush1.msra.mxu0 0.0
        %2426 = vmatprep.subr.mxu0 0.0
        %2427 = vmatpush1.msra.mxu0 0.0
        %2428 = vmatprep.subr.mxu0 0.0
        %2429 = vmatpush1.msra.mxu0 0.0
        %2430 = vmatprep.subr.mxu0 0.0
        %2431 = vmatpush1.msra.mxu0 0.0
        %2432 = vmatprep.subr.mxu0 0.0
        %2433 = vmatpush1.msra.mxu0 0.0
        %2434 = vmatprep.subr.mxu0 0.0
        %2435 = vmatpush1.msra.mxu0 0.0
        %2436 = vmatprep.subr.mxu0 0.0
        %2437 = vmatpush1.msra.mxu0 0.0
        %2438 = vmatprep.subr.mxu0 0.0
        %2439 = vmatpush1.msra.mxu0 0.0
        %2440 = vmatprep.subr.mxu0 0.0
        %2441 = vmatpush1.msra.mxu0 0.0
        %2442 = vmatprep.subr.mxu0 0.0
        %2443 = vmatpush1.msra.mxu0 0.0
        %2444 = vmatprep.subr.mxu0 0.0
        %2445 = vmatpush1.msra.mxu0 0.0
        %2446 = vmatprep.subr.mxu0 0.0
        %2447 = vmatpush1.msra.mxu0 0.0
        %2448 = vmatprep.subr.mxu0 0.0
        %2449 = vmatpush1.msra.mxu0 0.0
        %2450 = vmatprep.subr.mxu0 0.0
        %2451 = vmatpush1.msra.mxu0 0.0
        %2452 = vmatprep.subr.mxu0 0.0
        %2453 = vmatpush1.msra.mxu0 0.0
        %2454 = vmatprep.mubr.f32.mxu0 0.0
        %2455 = vmatmul.mubr.f32.gmra.mrb[0].mxu0 %v2318
        %v2456 = vpop.f32.mrb[0].mxu0
        %v2457 = vadd.f32 0.0, %v2456
        %v2458 = vpop.f32.mrb[0].mxu0
        %2459 = vmatprep.mubr.f32.mxu0 0.0
        %2460 = vmatmul.mubr.f32.gmra.mrb[0].mxu0 %v2319
        %v2461 = vpop.f32.mrb[0].mxu0
        %v2462 = vadd.f32 0.0, %v2461
        %v2463 = vpop.f32.mrb[0].mxu0
        %2464 = vmatprep.mubr.f32.mxu0 0.0
        %2465 = vmatmul.mubr.f32.gmra.mrb[0].mxu0 %v2320
        %v2466 = vpop.f32.mrb[0].mxu0
        %v2467 = vadd.f32 0.0, %v2466
        %v2468 = vpop.f32.mrb[0].mxu0
        %2469 = vmatprep.mubr.f32.mxu0 0.0
        %2470 = vmatmul.mubr.f32.gmra.mrb[0].mxu0 %v2321
        %v2471 = vpop.f32.mrb[0].mxu0
        %v2472 = vadd.f32 0.0, %v2471
        %v2473 = vpop.f32.mrb[0].mxu0
        %2474 = vmatprep.mubr.f32.mxu0 0.0
        %2475 = vmatmul.mubr.f32.gmra.mrb[0].mxu0 %v2322
        %v2476 = vpop.f32.mrb[0].mxu0
        %v2477 = vadd.f32 0.0, %v2476
        %v2478 = vpop.f32.mrb[0].mxu0
        %2479 = vmatprep.mubr.f32.mxu0 0.0
        %2480 = vmatmul.mubr.f32.gmra.mrb[0].mxu0 %v2323
        %v2481 = vpop.f32.mrb[0].mxu0
        %v2482 = vadd.f32 0.0, %v2481
        %v2483 = vpop.f32.mrb[0].mxu0
        %2484 = vmatprep.mubr.f32.mxu0 0.0
        %2485 = vmatmul.mubr.f32.gmra.mrb[0].mxu0 %v2324
        %v2486 = vpop.f32.mrb[0].mxu0
        %v2487 = vadd.f32 0.0, %v2486
        %v2488 = vpop.f32.mrb[0].mxu0
        %2489 = vmatprep.mubr.f32.mxu0 0.0
        %2490 = vmatmul.mubr.f32.gmra.mrb[0].mxu0 %v2325
        %v2491 = vpop.f32.mrb[0].mxu0
        %v2492 = vadd.f32 0.0, %v2491
        %v2493 = vpop.f32.mrb[0].mxu0
        %2494 = vdwg.mxu0
        %v2495 = vrcp.pop %v2327
        %v2496 = vrcp.pop %v2329
        %v2497 = vrcp.pop %v2331
        %v2498 = vrcp.pop %v2333
        %v2499 = vrcp.pop %v2335
        %v2500 = vrcp.pop %v2337
        %v2501 = vrcp.pop %v2339
        %v2502 = vrcp.pop %v2341
        %v2503 = vmul.f32 %v2457, %v2495
        %v2504 = vmul.f32 %v2462, %v2496
        %v2505 = vmul.f32 %v2467, %v2497
        %v2506 = vmul.f32 %v2472, %v2498
        %v2507 = vmul.f32 %v2477, %v2499
        %v2508 = vmul.f32 %v2482, %v2500
        %v2509 = vmul.f32 %v2487, %v2501
        %v2510 = vmul.f32 %v2492, %v2502
        %2511 = vset.pattern.permute.xlu0 6
        %2512 = vperm.xlu0 %2511, %v752
        %v2513 = vpop.permute.xlu0 %2512
        %2515 = vset.pattern.permute.xlu0 6
        %2516 = vperm.xlu0 %2515, %v753
        %v2517 = vpop.permute.xlu0 %2516
        %2519 = vset.pattern.permute.xlu0 6
        %2520 = vperm.xlu0 %2519, %v754
        %v2521 = vpop.permute.xlu0 %2520
        %2523 = vset.pattern.permute.xlu0 6
        %2524 = vperm.xlu0 %2523, %v755
        %v2525 = vpop.permute.xlu0 %2524
        %2527 = vset.pattern.permute.xlu0 6
        %2528 = vperm.xlu0 %2527, %v756
        %v2529 = vpop.permute.xlu0 %2528
        %2531 = vset.pattern.permute.xlu0 6
        %2532 = vperm.xlu0 %2531, %v757
        %v2533 = vpop.permute.xlu0 %2532
        %2535 = vset.pattern.permute.xlu0 6
        %2536 = vperm.xlu0 %2535, %v758
        %v2537 = vpop.permute.xlu0 %2536
        %2539 = vset.pattern.permute.xlu0 6
        %2540 = vperm.xlu0 %2539, %v759
        %v2541 = vpop.permute.xlu0 %2540
        %v2543 = vlaneseq
        %v2544 = vshrl.u32 %v2543, 7
        %v2545 = vsub.s32 6, %v2544
        %v2546 = vrot.slane %v760, %v2545
        %v2547 = vadd.f32 %v2513, %v2546
        %v2548 = vadd.f32 %v2517, %v2546
        %v2549 = vadd.f32 %v2521, %v2546
        %v2550 = vadd.f32 %v2525, %v2546
        %v2551 = vadd.f32 %v2529, %v2546
        %v2552 = vadd.f32 %v2533, %v2546
        %v2553 = vadd.f32 %v2537, %v2546
        %v2554 = vadd.f32 %v2541, %v2546
        %v2555 = vmul.f32 %v2547, 0.01
        %v2556 = vmul.f32 %v2548, 0.01
        %v2557 = vmul.f32 %v2549, 0.01
        %v2558 = vmul.f32 %v2550, 0.01
        %v2559 = vmul.f32 %v2551, 0.01
        %v2560 = vmul.f32 %v2552, 0.01
        %v2561 = vmul.f32 %v2553, 0.01
        %v2562 = vmul.f32 %v2554, 0.01
        %v2563 = vmax.f32 %v2547, %v2555
        %v2564 = vmax.f32 %v2548, %v2556
        %v2565 = vmax.f32 %v2549, %v2557
        %v2566 = vmax.f32 %v2550, %v2558
        %v2567 = vmax.f32 %v2551, %v2559
        %v2568 = vmax.f32 %v2552, %v2560
        %v2569 = vmax.f32 %v2553, %v2561
        %v2570 = vmax.f32 %v2554, %v2562
        %2571 = vmax.xlane.f32.xlu0 %v2563
        %v2572 = vpop.xlane.xlu0 %2571
        %2573 = vmax.xlane.f32.xlu0 %v2564
        %v2574 = vpop.xlane.xlu0 %2573
        %2575 = vmax.xlane.f32.xlu0 %v2565
        %v2576 = vpop.xlane.xlu0 %2575
        %2577 = vmax.xlane.f32.xlu0 %v2566
        %v2578 = vpop.xlane.xlu0 %2577
        %2579 = vmax.xlane.f32.xlu0 %v2567
        %v2580 = vpop.xlane.xlu0 %2579
        %2581 = vmax.xlane.f32.xlu0 %v2568
        %v2582 = vpop.xlane.xlu0 %2581
        %2583 = vmax.xlane.f32.xlu0 %v2569
        %v2584 = vpop.xlane.xlu0 %2583
        %2585 = vmax.xlane.f32.xlu0 %v2570
        %v2586 = vpop.xlane.xlu0 %2585
        %v2587 = vsub.f32 %v2563, %v2572
        %v2588 = vsub.f32 %v2564, %v2574
        %v2589 = vsub.f32 %v2565, %v2576
        %v2590 = vsub.f32 %v2566, %v2578
        %v2591 = vsub.f32 %v2567, %v2580
        %v2592 = vsub.f32 %v2568, %v2582
        %v2593 = vsub.f32 %v2569, %v2584
        %v2594 = vsub.f32 %v2570, %v2586
        %v2595 = vmul.f32 %v2587, 1.442695
        %v2596 = vpow.pop %v2595
        %v2597 = vmul.f32 %v2588, 1.442695
        %v2598 = vpow.pop %v2597
        %v2599 = vmul.f32 %v2589, 1.442695
        %v2600 = vpow.pop %v2599
        %v2601 = vmul.f32 %v2590, 1.442695
        %v2602 = vpow.pop %v2601
        %v2603 = vmul.f32 %v2591, 1.442695
        %v2604 = vpow.pop %v2603
        %v2605 = vmul.f32 %v2592, 1.442695
        %v2606 = vpow.pop %v2605
        %v2607 = vmul.f32 %v2593, 1.442695
        %v2608 = vpow.pop %v2607
        %v2609 = vmul.f32 %v2594, 1.442695
        %v2610 = vpow.pop %v2609
        %v2611 = vmul.f32 %v2596, %v742
        %v2612 = vmul.f32 %v2598, %v743
        %v2613 = vmul.f32 %v2600, %v744
        %v2614 = vmul.f32 %v2602, %v745
        %v2615 = vmul.f32 %v2604, %v746
        %v2616 = vmul.f32 %v2606, %v747
        %v2617 = vmul.f32 %v2608, %v748
        %v2618 = vmul.f32 %v2610, %v749
        %2619 = vadd.xlane.f32.xlu0 %v2611
        %v2620 = vpop.xlane.xlu0 %2619
        %2621 = vadd.xlane.f32.xlu0 %v2612
        %v2622 = vpop.xlane.xlu0 %2621
        %2623 = vadd.xlane.f32.xlu0 %v2613
        %v2624 = vpop.xlane.xlu0 %2623
        %2625 = vadd.xlane.f32.xlu0 %v2614
        %v2626 = vpop.xlane.xlu0 %2625
        %2627 = vadd.xlane.f32.xlu0 %v2615
        %v2628 = vpop.xlane.xlu0 %2627
        %2629 = vadd.xlane.f32.xlu0 %v2616
        %v2630 = vpop.xlane.xlu0 %2629
        %2631 = vadd.xlane.f32.xlu0 %v2617
        %v2632 = vpop.xlane.xlu0 %2631
        %2633 = vadd.xlane.f32.xlu0 %v2618
        %v2634 = vpop.xlane.xlu0 %2633
        %2635 = vrot.lane.b32.xlu0 %v893, 32
        %v2636 = vpop.permute.xlu0 %2635
        %2637 = vrot.lane.b32.xlu0 %v894, 32
        %v2638 = vpop.permute.xlu0 %2637
        %2639 = vrot.lane.b32.xlu0 %v895, 32
        %v2640 = vpop.permute.xlu0 %2639
        %2641 = vrot.lane.b32.xlu0 %v896, 32
        %v2642 = vpop.permute.xlu0 %2641
        %2643 = vrot.lane.b32.xlu0 %v897, 32
        %v2644 = vpop.permute.xlu0 %2643
        %2645 = vrot.lane.b32.xlu0 %v898, 32
        %v2646 = vpop.permute.xlu0 %2645
        %2647 = vrot.lane.b32.xlu0 %v899, 32
        %v2648 = vpop.permute.xlu0 %2647
        %2649 = vrot.lane.b32.xlu0 %v900, 32
        %v2650 = vpop.permute.xlu0 %2649
        %2651 = vrot.lane.b32.xlu0 %v901, 32
        %v2652 = vpop.permute.xlu0 %2651
        %2653 = vrot.lane.b32.xlu0 %v902, 32
        %v2654 = vpop.permute.xlu0 %2653
        %2655 = vrot.lane.b32.xlu0 %v903, 32
        %v2656 = vpop.permute.xlu0 %2655
        %2657 = vrot.lane.b32.xlu0 %v904, 32
        %v2658 = vpop.permute.xlu0 %2657
        %2659 = vrot.lane.b32.xlu0 %v905, 32
        %v2660 = vpop.permute.xlu0 %2659
        %2661 = vrot.lane.b32.xlu0 %v906, 32
        %v2662 = vpop.permute.xlu0 %2661
        %2663 = vrot.lane.b32.xlu0 %v907, 32
        %v2664 = vpop.permute.xlu0 %2663
        %2665 = vrot.lane.b32.xlu0 %v908, 32
        %v2666 = vpop.permute.xlu0 %2665
        %2683 = vmatprep.subr.mxu0 0.0
        %2684 = vmatpush1.msra.mxu0 %v2636
        %2685 = vmatprep.subr.mxu0 0.0
        %2686 = vmatpush1.msra.mxu0 %v2638
        %2687 = vmatprep.subr.mxu0 0.0
        %2688 = vmatpush1.msra.mxu0 %v2640
        %2689 = vmatprep.subr.mxu0 0.0
        %2690 = vmatpush1.msra.mxu0 %v2642
        %2691 = vmatprep.subr.mxu0 0.0
        %2692 = vmatpush1.msra.mxu0 %v2644
        %2693 = vmatprep.subr.mxu0 0.0
        %2694 = vmatpush1.msra.mxu0 %v2646
        %2695 = vmatprep.subr.mxu0 0.0
        %2696 = vmatpush1.msra.mxu0 %v2648
        %2697 = vmatprep.subr.mxu0 0.0
        %2698 = vmatpush1.msra.mxu0 %v2650
        %2699 = vmatprep.subr.mxu0 0.0
        %2700 = vmatpush1.msra.mxu0 %v2652
        %2701 = vmatprep.subr.mxu0 0.0
        %2702 = vmatpush1.msra.mxu0 %v2654
        %2703 = vmatprep.subr.mxu0 0.0
        %2704 = vmatpush1.msra.mxu0 %v2656
        %2705 = vmatprep.subr.mxu0 0.0
        %2706 = vmatpush1.msra.mxu0 %v2658
        %2707 = vmatprep.subr.mxu0 0.0
        %2708 = vmatpush1.msra.mxu0 %v2660
        %2709 = vmatprep.subr.mxu0 0.0
        %2710 = vmatpush1.msra.mxu0 %v2662
        %2711 = vmatprep.subr.mxu0 0.0
        %2712 = vmatpush1.msra.mxu0 %v2664
        %2713 = vmatprep.subr.mxu0 0.0
        %2714 = vmatpush1.msra.mxu0 %v2666
        %2715 = vmatprep.subr.mxu0 0.0
        %2716 = vmatpush1.msra.mxu0 0.0
        %2717 = vmatprep.subr.mxu0 0.0
        %2718 = vmatpush1.msra.mxu0 0.0
        %2719 = vmatprep.subr.mxu0 0.0
        %2720 = vmatpush1.msra.mxu0 0.0
        %2721 = vmatprep.subr.mxu0 0.0
        %2722 = vmatpush1.msra.mxu0 0.0
        %2723 = vmatprep.subr.mxu0 0.0
        %2724 = vmatpush1.msra.mxu0 0.0
        %2725 = vmatprep.subr.mxu0 0.0
        %2726 = vmatpush1.msra.mxu0 0.0
        %2727 = vmatprep.subr.mxu0 0.0
        %2728 = vmatpush1.msra.mxu0 0.0
        %2729 = vmatprep.subr.mxu0 0.0
        %2730 = vmatpush1.msra.mxu0 0.0
        %2731 = vmatprep.subr.mxu0 0.0
        %2732 = vmatpush1.msra.mxu0 0.0
        %2733 = vmatprep.subr.mxu0 0.0
        %2734 = vmatpush1.msra.mxu0 0.0
        %2735 = vmatprep.subr.mxu0 0.0
        %2736 = vmatpush1.msra.mxu0 0.0
        %2737 = vmatprep.subr.mxu0 0.0
        %2738 = vmatpush1.msra.mxu0 0.0
        %2739 = vmatprep.subr.mxu0 0.0
        %2740 = vmatpush1.msra.mxu0 0.0
        %2741 = vmatprep.subr.mxu0 0.0
        %2742 = vmatpush1.msra.mxu0 0.0
        %2743 = vmatprep.subr.mxu0 0.0
        %2744 = vmatpush1.msra.mxu0 0.0
        %2745 = vmatprep.subr.mxu0 0.0
        %2746 = vmatpush1.msra.mxu0 0.0
        %2747 = vmatprep.mubr.f32.mxu0 0.0
        %2748 = vmatmul.mubr.f32.gmra.mrb[0].mxu0 %v2611
        %v2749 = vpop.f32.mrb[0].mxu0
        %v2750 = vadd.f32 0.0, %v2749
        %v2751 = vpop.f32.mrb[0].mxu0
        %2752 = vmatprep.mubr.f32.mxu0 0.0
        %2753 = vmatmul.mubr.f32.gmra.mrb[0].mxu0 %v2612
        %v2754 = vpop.f32.mrb[0].mxu0
        %v2755 = vadd.f32 0.0, %v2754
        %v2756 = vpop.f32.mrb[0].mxu0
        %2757 = vmatprep.mubr.f32.mxu0 0.0
        %2758 = vmatmul.mubr.f32.gmra.mrb[0].mxu0 %v2613
        %v2759 = vpop.f32.mrb[0].mxu0
        %v2760 = vadd.f32 0.0, %v2759
        %v2761 = vpop.f32.mrb[0].mxu0
        %2762 = vmatprep.mubr.f32.mxu0 0.0
        %2763 = vmatmul.mubr.f32.gmra.mrb[0].mxu0 %v2614
        %v2764 = vpop.f32.mrb[0].mxu0
        %v2765 = vadd.f32 0.0, %v2764
        %v2766 = vpop.f32.mrb[0].mxu0
        %2767 = vmatprep.mubr.f32.mxu0 0.0
        %2768 = vmatmul.mubr.f32.gmra.mrb[0].mxu0 %v2615
        %v2769 = vpop.f32.mrb[0].mxu0
        %v2770 = vadd.f32 0.0, %v2769
        %v2771 = vpop.f32.mrb[0].mxu0
        %2772 = vmatprep.mubr.f32.mxu0 0.0
        %2773 = vmatmul.mubr.f32.gmra.mrb[0].mxu0 %v2616
        %v2774 = vpop.f32.mrb[0].mxu0
        %v2775 = vadd.f32 0.0, %v2774
        %v2776 = vpop.f32.mrb[0].mxu0
        %2777 = vmatprep.mubr.f32.mxu0 0.0
        %2778 = vmatmul.mubr.f32.gmra.mrb[0].mxu0 %v2617
        %v2779 = vpop.f32.mrb[0].mxu0
        %v2780 = vadd.f32 0.0, %v2779
        %v2781 = vpop.f32.mrb[0].mxu0
        %2782 = vmatprep.mubr.f32.mxu0 0.0
        %2783 = vmatmul.mubr.f32.gmra.mrb[0].mxu0 %v2618
        %v2784 = vpop.f32.mrb[0].mxu0
        %v2785 = vadd.f32 0.0, %v2784
        %v2786 = vpop.f32.mrb[0].mxu0
        %2787 = vdwg.mxu0
        %v2788 = vrcp.pop %v2620
        %v2789 = vrcp.pop %v2622
        %v2790 = vrcp.pop %v2624
        %v2791 = vrcp.pop %v2626
        %v2792 = vrcp.pop %v2628
        %v2793 = vrcp.pop %v2630
        %v2794 = vrcp.pop %v2632
        %v2795 = vrcp.pop %v2634
        %v2796 = vmul.f32 %v2750, %v2788
        %v2797 = vmul.f32 %v2755, %v2789
        %v2798 = vmul.f32 %v2760, %v2790
        %v2799 = vmul.f32 %v2765, %v2791
        %v2800 = vmul.f32 %v2770, %v2792
        %v2801 = vmul.f32 %v2775, %v2793
        %v2802 = vmul.f32 %v2780, %v2794
        %v2803 = vmul.f32 %v2785, %v2795
        %2804 = vset.pattern.permute.xlu0 7
        %2805 = vperm.xlu0 %2804, %v752
        %v2806 = vpop.permute.xlu0 %2805
        %2808 = vset.pattern.permute.xlu0 7
        %2809 = vperm.xlu0 %2808, %v753
        %v2810 = vpop.permute.xlu0 %2809
        %2812 = vset.pattern.permute.xlu0 7
        %2813 = vperm.xlu0 %2812, %v754
        %v2814 = vpop.permute.xlu0 %2813
        %2816 = vset.pattern.permute.xlu0 7
        %2817 = vperm.xlu0 %2816, %v755
        %v2818 = vpop.permute.xlu0 %2817
        %2820 = vset.pattern.permute.xlu0 7
        %2821 = vperm.xlu0 %2820, %v756
        %v2822 = vpop.permute.xlu0 %2821
        %2824 = vset.pattern.permute.xlu0 7
        %2825 = vperm.xlu0 %2824, %v757
        %v2826 = vpop.permute.xlu0 %2825
        %2828 = vset.pattern.permute.xlu0 7
        %2829 = vperm.xlu0 %2828, %v758
        %v2830 = vpop.permute.xlu0 %2829
        %2832 = vset.pattern.permute.xlu0 7
        %2833 = vperm.xlu0 %2832, %v759
        %v2834 = vpop.permute.xlu0 %2833
        %v2836 = vlaneseq
        %v2837 = vshrl.u32 %v2836, 7
        %v2838 = vsub.s32 7, %v2837
        %v2839 = vrot.slane %v760, %v2838
        %v2840 = vadd.f32 %v2806, %v2839
        %v2841 = vadd.f32 %v2810, %v2839
        %v2842 = vadd.f32 %v2814, %v2839
        %v2843 = vadd.f32 %v2818, %v2839
        %v2844 = vadd.f32 %v2822, %v2839
        %v2845 = vadd.f32 %v2826, %v2839
        %v2846 = vadd.f32 %v2830, %v2839
        %v2847 = vadd.f32 %v2834, %v2839
        %v2848 = vmul.f32 %v2840, 0.01
        %v2849 = vmul.f32 %v2841, 0.01
        %v2850 = vmul.f32 %v2842, 0.01
        %v2851 = vmul.f32 %v2843, 0.01
        %v2852 = vmul.f32 %v2844, 0.01
        %v2853 = vmul.f32 %v2845, 0.01
        %v2854 = vmul.f32 %v2846, 0.01
        %v2855 = vmul.f32 %v2847, 0.01
        %v2856 = vmax.f32 %v2840, %v2848
        %v2857 = vmax.f32 %v2841, %v2849
        %v2858 = vmax.f32 %v2842, %v2850
        %v2859 = vmax.f32 %v2843, %v2851
        %v2860 = vmax.f32 %v2844, %v2852
        %v2861 = vmax.f32 %v2845, %v2853
        %v2862 = vmax.f32 %v2846, %v2854
        %v2863 = vmax.f32 %v2847, %v2855
        %2864 = vmax.xlane.f32.xlu0 %v2856
        %v2865 = vpop.xlane.xlu0 %2864
        %2866 = vmax.xlane.f32.xlu0 %v2857
        %v2867 = vpop.xlane.xlu0 %2866
        %2868 = vmax.xlane.f32.xlu0 %v2858
        %v2869 = vpop.xlane.xlu0 %2868
        %2870 = vmax.xlane.f32.xlu0 %v2859
        %v2871 = vpop.xlane.xlu0 %2870
        %2872 = vmax.xlane.f32.xlu0 %v2860
        %v2873 = vpop.xlane.xlu0 %2872
        %2874 = vmax.xlane.f32.xlu0 %v2861
        %v2875 = vpop.xlane.xlu0 %2874
        %2876 = vmax.xlane.f32.xlu0 %v2862
        %v2877 = vpop.xlane.xlu0 %2876
        %2878 = vmax.xlane.f32.xlu0 %v2863
        %v2879 = vpop.xlane.xlu0 %2878
        %v2880 = vsub.f32 %v2856, %v2865
        %v2881 = vsub.f32 %v2857, %v2867
        %v2882 = vsub.f32 %v2858, %v2869
        %v2883 = vsub.f32 %v2859, %v2871
        %v2884 = vsub.f32 %v2860, %v2873
        %v2885 = vsub.f32 %v2861, %v2875
        %v2886 = vsub.f32 %v2862, %v2877
        %v2887 = vsub.f32 %v2863, %v2879
        %v2888 = vmul.f32 %v2880, 1.442695
        %v2889 = vpow.pop %v2888
        %v2890 = vmul.f32 %v2881, 1.442695
        %v2891 = vpow.pop %v2890
        %v2892 = vmul.f32 %v2882, 1.442695
        %v2893 = vpow.pop %v2892
        %v2894 = vmul.f32 %v2883, 1.442695
        %v2895 = vpow.pop %v2894
        %v2896 = vmul.f32 %v2884, 1.442695
        %v2897 = vpow.pop %v2896
        %v2898 = vmul.f32 %v2885, 1.442695
        %v2899 = vpow.pop %v2898
        %v2900 = vmul.f32 %v2886, 1.442695
        %v2901 = vpow.pop %v2900
        %v2902 = vmul.f32 %v2887, 1.442695
        %v2903 = vpow.pop %v2902
        %v2904 = vmul.f32 %v2889, %v742
        %v2905 = vmul.f32 %v2891, %v743
        %v2906 = vmul.f32 %v2893, %v744
        %v2907 = vmul.f32 %v2895, %v745
        %v2908 = vmul.f32 %v2897, %v746
        %v2909 = vmul.f32 %v2899, %v747
        %v2910 = vmul.f32 %v2901, %v748
        %v2911 = vmul.f32 %v2903, %v749
        %2912 = vadd.xlane.f32.xlu0 %v2904
        %v2913 = vpop.xlane.xlu0 %2912
        %2914 = vadd.xlane.f32.xlu0 %v2905
        %v2915 = vpop.xlane.xlu0 %2914
        %2916 = vadd.xlane.f32.xlu0 %v2906
        %v2917 = vpop.xlane.xlu0 %2916
        %2918 = vadd.xlane.f32.xlu0 %v2907
        %v2919 = vpop.xlane.xlu0 %2918
        %2920 = vadd.xlane.f32.xlu0 %v2908
        %v2921 = vpop.xlane.xlu0 %2920
        %2922 = vadd.xlane.f32.xlu0 %v2909
        %v2923 = vpop.xlane.xlu0 %2922
        %2924 = vadd.xlane.f32.xlu0 %v2910
        %v2925 = vpop.xlane.xlu0 %2924
        %2926 = vadd.xlane.f32.xlu0 %v2911
        %v2927 = vpop.xlane.xlu0 %2926
        %2928 = vrot.lane.b32.xlu0 %v893, 16
        %v2929 = vpop.permute.xlu0 %2928
        %2930 = vrot.lane.b32.xlu0 %v894, 16
        %v2931 = vpop.permute.xlu0 %2930
        %2932 = vrot.lane.b32.xlu0 %v895, 16
        %v2933 = vpop.permute.xlu0 %2932
        %2934 = vrot.lane.b32.xlu0 %v896, 16
        %v2935 = vpop.permute.xlu0 %2934
        %2936 = vrot.lane.b32.xlu0 %v897, 16
        %v2937 = vpop.permute.xlu0 %2936
        %2938 = vrot.lane.b32.xlu0 %v898, 16
        %v2939 = vpop.permute.xlu0 %2938
        %2940 = vrot.lane.b32.xlu0 %v899, 16
        %v2941 = vpop.permute.xlu0 %2940
        %2942 = vrot.lane.b32.xlu0 %v900, 16
        %v2943 = vpop.permute.xlu0 %2942
        %2944 = vrot.lane.b32.xlu0 %v901, 16
        %v2945 = vpop.permute.xlu0 %2944
        %2946 = vrot.lane.b32.xlu0 %v902, 16
        %v2947 = vpop.permute.xlu0 %2946
        %2948 = vrot.lane.b32.xlu0 %v903, 16
        %v2949 = vpop.permute.xlu0 %2948
        %2950 = vrot.lane.b32.xlu0 %v904, 16
        %v2951 = vpop.permute.xlu0 %2950
        %2952 = vrot.lane.b32.xlu0 %v905, 16
        %v2953 = vpop.permute.xlu0 %2952
        %2954 = vrot.lane.b32.xlu0 %v906, 16
        %v2955 = vpop.permute.xlu0 %2954
        %2956 = vrot.lane.b32.xlu0 %v907, 16
        %v2957 = vpop.permute.xlu0 %2956
        %2958 = vrot.lane.b32.xlu0 %v908, 16
        %v2959 = vpop.permute.xlu0 %2958
        %2976 = vmatprep.subr.mxu0 0.0
        %2977 = vmatpush1.msra.mxu0 %v2929
        %2978 = vmatprep.subr.mxu0 0.0
        %2979 = vmatpush1.msra.mxu0 %v2931
        %2980 = vmatprep.subr.mxu0 0.0
        %2981 = vmatpush1.msra.mxu0 %v2933
        %2982 = vmatprep.subr.mxu0 0.0
        %2983 = vmatpush1.msra.mxu0 %v2935
        %2984 = vmatprep.subr.mxu0 0.0
        %2985 = vmatpush1.msra.mxu0 %v2937
        %2986 = vmatprep.subr.mxu0 0.0
        %2987 = vmatpush1.msra.mxu0 %v2939
        %2988 = vmatprep.subr.mxu0 0.0
        %2989 = vmatpush1.msra.mxu0 %v2941
        %2990 = vmatprep.subr.mxu0 0.0
        %2991 = vmatpush1.msra.mxu0 %v2943
        %2992 = vmatprep.subr.mxu0 0.0
        %2993 = vmatpush1.msra.mxu0 %v2945
        %2994 = vmatprep.subr.mxu0 0.0
        %2995 = vmatpush1.msra.mxu0 %v2947
        %2996 = vmatprep.subr.mxu0 0.0
        %2997 = vmatpush1.msra.mxu0 %v2949
        %2998 = vmatprep.subr.mxu0 0.0
        %2999 = vmatpush1.msra.mxu0 %v2951
        %3000 = vmatprep.subr.mxu0 0.0
        %3001 = vmatpush1.msra.mxu0 %v2953
        %3002 = vmatprep.subr.mxu0 0.0
        %3003 = vmatpush1.msra.mxu0 %v2955
        %3004 = vmatprep.subr.mxu0 0.0
        %3005 = vmatpush1.msra.mxu0 %v2957
        %3006 = vmatprep.subr.mxu0 0.0
        %3007 = vmatpush1.msra.mxu0 %v2959
        %3008 = vmatprep.subr.mxu0 0.0
        %3009 = vmatpush1.msra.mxu0 0.0
        %3010 = vmatprep.subr.mxu0 0.0
        %3011 = vmatpush1.msra.mxu0 0.0
        %3012 = vmatprep.subr.mxu0 0.0
        %3013 = vmatpush1.msra.mxu0 0.0
        %3014 = vmatprep.subr.mxu0 0.0
        %3015 = vmatpush1.msra.mxu0 0.0
        %3016 = vmatprep.subr.mxu0 0.0
        %3017 = vmatpush1.msra.mxu0 0.0
        %3018 = vmatprep.subr.mxu0 0.0
        %3019 = vmatpush1.msra.mxu0 0.0
        %3020 = vmatprep.subr.mxu0 0.0
        %3021 = vmatpush1.msra.mxu0 0.0
        %3022 = vmatprep.subr.mxu0 0.0
        %3023 = vmatpush1.msra.mxu0 0.0
        %3024 = vmatprep.subr.mxu0 0.0
        %3025 = vmatpush1.msra.mxu0 0.0
        %3026 = vmatprep.subr.mxu0 0.0
        %3027 = vmatpush1.msra.mxu0 0.0
        %3028 = vmatprep.subr.mxu0 0.0
        %3029 = vmatpush1.msra.mxu0 0.0
        %3030 = vmatprep.subr.mxu0 0.0
        %3031 = vmatpush1.msra.mxu0 0.0
        %3032 = vmatprep.subr.mxu0 0.0
        %3033 = vmatpush1.msra.mxu0 0.0
        %3034 = vmatprep.subr.mxu0 0.0
        %3035 = vmatpush1.msra.mxu0 0.0
        %3036 = vmatprep.subr.mxu0 0.0
        %3037 = vmatpush1.msra.mxu0 0.0
        %3038 = vmatprep.subr.mxu0 0.0
        %3039 = vmatpush1.msra.mxu0 0.0
        %3040 = vmatprep.mubr.f32.mxu0 0.0
        %3041 = vmatmul.mubr.f32.gmra.mrb[0].mxu0 %v2904
        %v3042 = vpop.f32.mrb[0].mxu0
        %v3043 = vadd.f32 0.0, %v3042
        %v3044 = vpop.f32.mrb[0].mxu0
        %3045 = vmatprep.mubr.f32.mxu0 0.0
        %3046 = vmatmul.mubr.f32.gmra.mrb[0].mxu0 %v2905
        %v3047 = vpop.f32.mrb[0].mxu0
        %v3048 = vadd.f32 0.0, %v3047
        %v3049 = vpop.f32.mrb[0].mxu0
        %3050 = vmatprep.mubr.f32.mxu0 0.0
        %3051 = vmatmul.mubr.f32.gmra.mrb[0].mxu0 %v2906
        %v3052 = vpop.f32.mrb[0].mxu0
        %v3053 = vadd.f32 0.0, %v3052
        %v3054 = vpop.f32.mrb[0].mxu0
        %3055 = vmatprep.mubr.f32.mxu0 0.0
        %3056 = vmatmul.mubr.f32.gmra.mrb[0].mxu0 %v2907
        %v3057 = vpop.f32.mrb[0].mxu0
        %v3058 = vadd.f32 0.0, %v3057
        %v3059 = vpop.f32.mrb[0].mxu0
        %3060 = vmatprep.mubr.f32.mxu0 0.0
        %3061 = vmatmul.mubr.f32.gmra.mrb[0].mxu0 %v2908
        %v3062 = vpop.f32.mrb[0].mxu0
        %v3063 = vadd.f32 0.0, %v3062
        %v3064 = vpop.f32.mrb[0].mxu0
        %3065 = vmatprep.mubr.f32.mxu0 0.0
        %3066 = vmatmul.mubr.f32.gmra.mrb[0].mxu0 %v2909
        %v3067 = vpop.f32.mrb[0].mxu0
        %v3068 = vadd.f32 0.0, %v3067
        %v3069 = vpop.f32.mrb[0].mxu0
        %3070 = vmatprep.mubr.f32.mxu0 0.0
        %3071 = vmatmul.mubr.f32.gmra.mrb[0].mxu0 %v2910
        %v3072 = vpop.f32.mrb[0].mxu0
        %v3073 = vadd.f32 0.0, %v3072
        %v3074 = vpop.f32.mrb[0].mxu0
        %3075 = vmatprep.mubr.f32.mxu0 0.0
        %3076 = vmatmul.mubr.f32.gmra.mrb[0].mxu0 %v2911
        %v3077 = vpop.f32.mrb[0].mxu0
        %v3078 = vadd.f32 0.0, %v3077
        %v3079 = vpop.f32.mrb[0].mxu0
        %3080 = vdwg.mxu0
        %v3081 = vrcp.pop %v2913
        %v3082 = vrcp.pop %v2915
        %v3083 = vrcp.pop %v2917
        %v3084 = vrcp.pop %v2919
        %v3085 = vrcp.pop %v2921
        %v3086 = vrcp.pop %v2923
        %v3087 = vrcp.pop %v2925
        %v3088 = vrcp.pop %v2927
        %v3089 = vmul.f32 %v3043, %v3081
        %v3090 = vmul.f32 %v3048, %v3082
        %v3091 = vmul.f32 %v3053, %v3083
        %v3092 = vmul.f32 %v3058, %v3084
        %v3093 = vmul.f32 %v3063, %v3085
        %v3094 = vmul.f32 %v3068, %v3086
        %v3095 = vmul.f32 %v3073, %v3087
        %v3096 = vmul.f32 %v3078, %v3088
        %3105 = vrot.lane.b32.xlu0 %v1331, 16
        %v3106 = vpop.permute.xlu0 %3105
        %3107 = vrot.lane.b32.xlu0 %v1332, 16
        %v3108 = vpop.permute.xlu0 %3107
        %3109 = vrot.lane.b32.xlu0 %v1333, 16
        %v3110 = vpop.permute.xlu0 %3109
        %3111 = vrot.lane.b32.xlu0 %v1334, 16
        %v3112 = vpop.permute.xlu0 %3111
        %3113 = vrot.lane.b32.xlu0 %v1335, 16
        %v3114 = vpop.permute.xlu0 %3113
        %3115 = vrot.lane.b32.xlu0 %v1336, 16
        %v3116 = vpop.permute.xlu0 %3115
        %3117 = vrot.lane.b32.xlu0 %v1337, 16
        %v3118 = vpop.permute.xlu0 %3117
        %3119 = vrot.lane.b32.xlu0 %v1338, 16
        %v3120 = vpop.permute.xlu0 %3119
        %3137 = vrot.lane.b32.xlu0 %v1624, 32
        %v3138 = vpop.permute.xlu0 %3137
        %3139 = vrot.lane.b32.xlu0 %v1625, 32
        %v3140 = vpop.permute.xlu0 %3139
        %3141 = vrot.lane.b32.xlu0 %v1626, 32
        %v3142 = vpop.permute.xlu0 %3141
        %3143 = vrot.lane.b32.xlu0 %v1627, 32
        %v3144 = vpop.permute.xlu0 %3143
        %3145 = vrot.lane.b32.xlu0 %v1628, 32
        %v3146 = vpop.permute.xlu0 %3145
        %3147 = vrot.lane.b32.xlu0 %v1629, 32
        %v3148 = vpop.permute.xlu0 %3147
        %3149 = vrot.lane.b32.xlu0 %v1630, 32
        %v3150 = vpop.permute.xlu0 %3149
        %3151 = vrot.lane.b32.xlu0 %v1631, 32
        %v3152 = vpop.permute.xlu0 %3151
        %3169 = vrot.lane.b32.xlu0 %v1917, 48
        %v3170 = vpop.permute.xlu0 %3169
        %3171 = vrot.lane.b32.xlu0 %v1918, 48
        %v3172 = vpop.permute.xlu0 %3171
        %3173 = vrot.lane.b32.xlu0 %v1919, 48
        %v3174 = vpop.permute.xlu0 %3173
        %3175 = vrot.lane.b32.xlu0 %v1920, 48
        %v3176 = vpop.permute.xlu0 %3175
        %3177 = vrot.lane.b32.xlu0 %v1921, 48
        %v3178 = vpop.permute.xlu0 %3177
        %3179 = vrot.lane.b32.xlu0 %v1922, 48
        %v3180 = vpop.permute.xlu0 %3179
        %3181 = vrot.lane.b32.xlu0 %v1923, 48
        %v3182 = vpop.permute.xlu0 %3181
        %3183 = vrot.lane.b32.xlu0 %v1924, 48
        %v3184 = vpop.permute.xlu0 %3183
        %3201 = vrot.lane.b32.xlu0 %v2210, 64
        %v3202 = vpop.permute.xlu0 %3201
        %3203 = vrot.lane.b32.xlu0 %v2211, 64
        %v3204 = vpop.permute.xlu0 %3203
        %3205 = vrot.lane.b32.xlu0 %v2212, 64
        %v3206 = vpop.permute.xlu0 %3205
        %3207 = vrot.lane.b32.xlu0 %v2213, 64
        %v3208 = vpop.permute.xlu0 %3207
        %3209 = vrot.lane.b32.xlu0 %v2214, 64
        %v3210 = vpop.permute.xlu0 %3209
        %3211 = vrot.lane.b32.xlu0 %v2215, 64
        %v3212 = vpop.permute.xlu0 %3211
        %3213 = vrot.lane.b32.xlu0 %v2216, 64
        %v3214 = vpop.permute.xlu0 %3213
        %3215 = vrot.lane.b32.xlu0 %v2217, 64
        %v3216 = vpop.permute.xlu0 %3215
        %3233 = vrot.lane.b32.xlu0 %v2503, 80
        %v3234 = vpop.permute.xlu0 %3233
        %3235 = vrot.lane.b32.xlu0 %v2504, 80
        %v3236 = vpop.permute.xlu0 %3235
        %3237 = vrot.lane.b32.xlu0 %v2505, 80
        %v3238 = vpop.permute.xlu0 %3237
        %3239 = vrot.lane.b32.xlu0 %v2506, 80
        %v3240 = vpop.permute.xlu0 %3239
        %3241 = vrot.lane.b32.xlu0 %v2507, 80
        %v3242 = vpop.permute.xlu0 %3241
        %3243 = vrot.lane.b32.xlu0 %v2508, 80
        %v3244 = vpop.permute.xlu0 %3243
        %3245 = vrot.lane.b32.xlu0 %v2509, 80
        %v3246 = vpop.permute.xlu0 %3245
        %3247 = vrot.lane.b32.xlu0 %v2510, 80
        %v3248 = vpop.permute.xlu0 %3247
        %3265 = vrot.lane.b32.xlu0 %v2796, 96
        %v3266 = vpop.permute.xlu0 %3265
        %3267 = vrot.lane.b32.xlu0 %v2797, 96
        %v3268 = vpop.permute.xlu0 %3267
        %3269 = vrot.lane.b32.xlu0 %v2798, 96
        %v3270 = vpop.permute.xlu0 %3269
        %3271 = vrot.lane.b32.xlu0 %v2799, 96
        %v3272 = vpop.permute.xlu0 %3271
        %3273 = vrot.lane.b32.xlu0 %v2800, 96
        %v3274 = vpop.permute.xlu0 %3273
        %3275 = vrot.lane.b32.xlu0 %v2801, 96
        %v3276 = vpop.permute.xlu0 %3275
        %3277 = vrot.lane.b32.xlu0 %v2802, 96
        %v3278 = vpop.permute.xlu0 %3277
        %3279 = vrot.lane.b32.xlu0 %v2803, 96
        %v3280 = vpop.permute.xlu0 %3279
        %3297 = vrot.lane.b32.xlu0 %v3089, 112
        %v3298 = vpop.permute.xlu0 %3297
        %3299 = vrot.lane.b32.xlu0 %v3090, 112
        %v3300 = vpop.permute.xlu0 %3299
        %3301 = vrot.lane.b32.xlu0 %v3091, 112
        %v3302 = vpop.permute.xlu0 %3301
        %3303 = vrot.lane.b32.xlu0 %v3092, 112
        %v3304 = vpop.permute.xlu0 %3303
        %3305 = vrot.lane.b32.xlu0 %v3093, 112
        %v3306 = vpop.permute.xlu0 %3305
        %3307 = vrot.lane.b32.xlu0 %v3094, 112
        %v3308 = vpop.permute.xlu0 %3307
        %3309 = vrot.lane.b32.xlu0 %v3095, 112
        %v3310 = vpop.permute.xlu0 %3309
        %3311 = vrot.lane.b32.xlu0 %v3096, 112
        %v3312 = vpop.permute.xlu0 %3311
        %vm3321 = vcmask 130048
        %v3322 = vsel %vm3321, %v1022, %v3106
        %v3323 = vsel %vm3321, %v1023, %v3108
        %v3324 = vsel %vm3321, %v1024, %v3110
        %v3325 = vsel %vm3321, %v1025, %v3112
        %v3326 = vsel %vm3321, %v1026, %v3114
        %v3327 = vsel %vm3321, %v1027, %v3116
        %v3328 = vsel %vm3321, %v1028, %v3118
        %v3329 = vsel %vm3321, %v1029, %v3120
        %vm3330 = vcmask 261120
        %v3331 = vsel %vm3330, %v3322, %v3138
        %v3332 = vsel %vm3330, %v3323, %v3140
        %v3333 = vsel %vm3330, %v3324, %v3142
        %v3334 = vsel %vm3330, %v3325, %v3144
        %v3335 = vsel %vm3330, %v3326, %v3146
        %v3336 = vsel %vm3330, %v3327, %v3148
        %v3337 = vsel %vm3330, %v3328, %v3150
        %v3338 = vsel %vm3330, %v3329, %v3152
        %vm3339 = vcmask 392192
        %v3340 = vsel %vm3339, %v3331, %v3170
        %v3341 = vsel %vm3339, %v3332, %v3172
        %v3342 = vsel %vm3339, %v3333, %v3174
        %v3343 = vsel %vm3339, %v3334, %v3176
        %v3344 = vsel %vm3339, %v3335, %v3178
        %v3345 = vsel %vm3339, %v3336, %v3180
        %v3346 = vsel %vm3339, %v3337, %v3182
        %v3347 = vsel %vm3339, %v3338, %v3184
        %vm3348 = vcmask 523264
        %v3349 = vsel %vm3348, %v3340, %v3202
        %v3350 = vsel %vm3348, %v3341, %v3204
        %v3351 = vsel %vm3348, %v3342, %v3206
        %v3352 = vsel %vm3348, %v3343, %v3208
        %v3353 = vsel %vm3348, %v3344, %v3210
        %v3354 = vsel %vm3348, %v3345, %v3212
        %v3355 = vsel %vm3348, %v3346, %v3214
        %v3356 = vsel %vm3348, %v3347, %v3216
        %vm3357 = vcmask 654336
        %v3358 = vsel %vm3357, %v3349, %v3234
        %v3359 = vsel %vm3357, %v3350, %v3236
        %v3360 = vsel %vm3357, %v3351, %v3238
        %v3361 = vsel %vm3357, %v3352, %v3240
        %v3362 = vsel %vm3357, %v3353, %v3242
        %v3363 = vsel %vm3357, %v3354, %v3244
        %v3364 = vsel %vm3357, %v3355, %v3246
        %v3365 = vsel %vm3357, %v3356, %v3248
        %vm3366 = vcmask 785408
        %v3367 = vsel %vm3366, %v3358, %v3266
        %v3368 = vsel %vm3366, %v3359, %v3268
        %v3369 = vsel %vm3366, %v3360, %v3270
        %v3370 = vsel %vm3366, %v3361, %v3272
        %v3371 = vsel %vm3366, %v3362, %v3274
        %v3372 = vsel %vm3366, %v3363, %v3276
        %v3373 = vsel %vm3366, %v3364, %v3278
        %v3374 = vsel %vm3366, %v3365, %v3280
        %vm3375 = vcmask 916480
        %v3376 = vsel %vm3375, %v3367, %v3298
        %v3377 = vsel %vm3375, %v3368, %v3300
        %v3378 = vsel %vm3375, %v3369, %v3302
        %v3379 = vsel %vm3375, %v3370, %v3304
        %v3380 = vsel %vm3375, %v3371, %v3306
        %v3381 = vsel %vm3375, %v3372, %v3308
        %v3382 = vsel %vm3375, %v3373, %v3310
        %v3383 = vsel %vm3375, %v3374, %v3312
        %vm3384 = vcmp.gt.f32.partialorder %v3376, 0.0
        %vm3385 = vcmp.gt.f32.partialorder %v3377, 0.0
        %vm3386 = vcmp.gt.f32.partialorder %v3378, 0.0
        %vm3387 = vcmp.gt.f32.partialorder %v3379, 0.0
        %vm3388 = vcmp.gt.f32.partialorder %v3380, 0.0
        %vm3389 = vcmp.gt.f32.partialorder %v3381, 0.0
        %vm3390 = vcmp.gt.f32.partialorder %v3382, 0.0
        %vm3391 = vcmp.gt.f32.partialorder %v3383, 0.0
        %v3392 = vmin.f32 %v3376, 0.0
        %v3393 = vmin.f32 %v3377, 0.0
        %v3394 = vmin.f32 %v3378, 0.0
        %v3395 = vmin.f32 %v3379, 0.0
        %v3396 = vmin.f32 %v3380, 0.0
        %v3397 = vmin.f32 %v3381, 0.0
        %v3398 = vmin.f32 %v3382, 0.0
        %v3399 = vmin.f32 %v3383, 0.0
        %v3400 = vmul.f32 %v3392, 1.442695
        %v3401 = vpow.pop %v3400
        %v3402 = vmul.f32 %v3393, 1.442695
        %v3403 = vpow.pop %v3402
        %v3404 = vmul.f32 %v3394, 1.442695
        %v3405 = vpow.pop %v3404
        %v3406 = vmul.f32 %v3395, 1.442695
        %v3407 = vpow.pop %v3406
        %v3408 = vmul.f32 %v3396, 1.442695
        %v3409 = vpow.pop %v3408
        %v3410 = vmul.f32 %v3397, 1.442695
        %v3411 = vpow.pop %v3410
        %v3412 = vmul.f32 %v3398, 1.442695
        %v3413 = vpow.pop %v3412
        %v3414 = vmul.f32 %v3399, 1.442695
        %v3415 = vpow.pop %v3414
        %v3416 = vsub.f32 %v3401, 1.0
        %v3417 = vsub.f32 %v3403, 1.0
        %v3418 = vsub.f32 %v3405, 1.0
        %v3419 = vsub.f32 %v3407, 1.0
        %v3420 = vsub.f32 %v3409, 1.0
        %v3421 = vsub.f32 %v3411, 1.0
        %v3422 = vsub.f32 %v3413, 1.0
        %v3423 = vsub.f32 %v3415, 1.0
        %v3424 = vsel %vm3384, %v3376, %v3416
        %v3425 = vsel %vm3385, %v3377, %v3417
        %v3426 = vsel %vm3386, %v3378, %v3418
        %v3427 = vsel %vm3387, %v3379, %v3419
        %v3428 = vsel %vm3388, %v3380, %v3420
        %v3429 = vsel %vm3389, %v3381, %v3421
        %v3430 = vsel %vm3390, %v3382, %v3422
        %v3431 = vsel %vm3391, %v3383, %v3423
        %3432 = vst [vmem:[%s245] sm:$0xff] %v3424
        %3433 = vst [vmem:[%s245 + $0x8] sm:$0xff] %v3425
        %3434 = vst [vmem:[%s245 + $0x10] sm:$0xff] %v3426
        %3435 = vst [vmem:[%s245 + $0x18] sm:$0xff] %v3427
        %3436 = vst [vmem:[%s245 + $0x20] sm:$0xff] %v3428
        %3437 = vst [vmem:[%s245 + $0x28] sm:$0xff] %v3429
        %3438 = vst [vmem:[%s245 + $0x30] sm:$0xff] %v3430
        %3439 = vst [vmem:[%s245 + $0x38] sm:$0xff] %v3431
        %s3440 = sand.u32 %s159, 1
        %s3441 = scalar_lea.sflag [#allocation6], %s3440
        %s3442 = sand.u32 %s159, 1
        %s3443 = smul.addr %s3442, 64
        %s3444 = scalar_lea.vmem [#allocation5], %s3443
        // Predicated region
        $region49: #{tpu_custom_call.1} parent=43 // pred_check
          %p3445 = pneg %p169
        $region50: #{tpu_custom_call.1} parent=43 // pred_check_branch
          %3447 = sbr.rel (%p3445) target = $region52
        $region51: #{tpu_custom_call.1} parent=43 // pred_region
          %s3448 = smul.u32 8, %s20
          %s3450 = ssub.s32 1024, 1024
          %3451 = vsyncadd %s3441, %s3450
          %s3452 = smul.addr %s3448, 128
          %s3453 = scalar_lea.hbm %s6, %s3452
          %s3454 = sshll.u32 %s3444, 4
          %s3455 = int_to_ptr.vmem [resolvable:$true] %s3454
          %3460 = dma.vmem_to_hbm [thread:$0]  %s3455, 1024, %s3453, %s3441, 128, 128, 8
        $region52: #{tpu_custom_call.1} parent=43 // pred_fallthru
          _
      $region44: #{tpu_custom_call.1} parent=5 // pred_fallthru
        _
      %p3461 = scmp.le.s32.totalorder 2, %s15
      // Predicated region
      $region53: #{tpu_custom_call.1} parent=5 // pred_check
        %p3462 = pneg %p3461
      $region54: #{tpu_custom_call.1} parent=5 // pred_check_branch
        %3464 = sbr.rel (%p3462) target = $region56
      $region55: #{tpu_custom_call.1} parent=5 // pred_region
        %s3465 = ssub.s32 %s15, 2
        // Predicated region
        $region57: #{tpu_custom_call.1} parent=55 // pred_check
          %p3466 = pneg %p175
        $region58: #{tpu_custom_call.1} parent=55 // pred_check_branch
          %3468 = sbr.rel (%p3466) target = $region60
        $region59: #{tpu_custom_call.1} parent=55 // pred_region
          %s3469 = sand.u32 %s160, 1
          %s3470 = scalar_lea.sflag [#allocation6], %s3469
          %s3471 = sand.u32 %s160, 1
          %s3472 = smul.addr %s3471, 64
          %s3473 = scalar_lea.vmem [#allocation5], %s3472
          %3474 = dma.done %s3470, 1024
        $region60: #{tpu_custom_call.1} parent=55 // pred_fallthru
          _
      $region56: #{tpu_custom_call.1} parent=5 // pred_fallthru
        _
    $region6: #{tpu_custom_call.1} parent=1 // loop_footer
      %s19 = sadd.s32 1, %s15
    $region7: #{tpu_custom_call.1} parent=1 // loop_footer_branch
      %14 = sbr.rel target = $region3
    $region8: #{tpu_custom_call.1} parent=1 // loop_exit
      _
    %3475 = vsyncpa [#allocation6], 1
    %s3476 = scalar_lea.sflag [#allocation6], 1
    %3477 = vsyncpa %s3476, 1

</llo_original>
